<compile_context>
chip_gen: v7x
topology: tpu7x:2x2x1
jax: 0.10.0
libtpu: 0.0.40
codegen_flags: <defaults>
</compile_context>

<pallas_src>
import jax
import jax.numpy as jnp
from jax import lax
from jax.experimental import pallas as pl
from jax.experimental.pallas import tpu as pltpu

_EPS = 1e-5
_LANES = 128


def _round_up(x, m):
    return ((x + m - 1) // m) * m


def _pick_row_block(hp, max_rows=32):
    """Largest row-block size <= max_rows that divides the pooled height."""
    t = min(hp, max_rows)
    while hp % t:
        t -= 1
    return t


def _vmem_bytes_estimate(th, wp, cin, cp):
    bf2, f4 = 2, 4
    xin = (th + 4) * 2 * wp * 2 * cin * bf2          # raw pool-window rows
    xp1 = (th + 4) * (wp + 2) * cin * bf2            # pooled + conv1 halo
    xp2 = (th + 2) * (wp + 2) * cp * bf2             # conv1 out + conv2 halo
    wts = (9 * cin * cp + 9 * cp * cp) * bf2 * 2     # weights (dbl-buffered)
    bias = 2 * 2 * cp * f4
    oblk = 2 * th * wp * cp * bf2                    # output block (dbl-buffered)
    patch = max((th + 2) * wp * 3 * cin, th * wp * 3 * cp) * bf2
    acc = 2 * (th + 2) * wp * cp * f4                # f32 accumulators
    return xin + xp1 + xp2 + wts + bias + oblk + patch + acc


# --------------------------------------------------------------------------
# Fused Pallas kernel: maxpool2 -> conv3x3+bias+relu -> conv3x3+bias+relu
# --------------------------------------------------------------------------
def _down_fused_kernel(x_hbm, w1_ref, b1_ref, w2_ref, b2_ref, o_ref,
                       xin_sc, xp1_sc, xp2_sc):
    """One (batch, row-block) tile per grid step; intermediates stay in VMEM.

    x_hbm  : (N, Hp+4, 2, Wp, 2*Cin_pad) bf16 HBM ref (pool-window-major,
             2 zero pool-rows of H halo on each side), memory_space=pl.ANY
    w1_ref : (9*Cin_pad, Cp) bf16  BN-folded conv1 weights, im2col layout
    b1_ref : (1, Cp) f32
    w2_ref : (9*Cp, Cp) bf16       BN-folded conv2 weights, im2col layout
    b2_ref : (1, Cp) f32
    o_ref  : (1, TH, Wp, Cp) bf16  lane-dense output block
    xin_sc : (TH+4, 2, Wp, 2*Cin_pad) bf16  DMA landing buffer
    xp1_sc : (TH+4, Wp+2, Cin_pad) bf16     pooled rows + conv1 zero halo
    xp2_sc : (TH+2, Wp+2, Cp) bf16          conv1 rows + conv2 zero halo
    """
    n = pl.program_id(0)
    r = pl.program_id(1)
    num_r = pl.num_programs(1)

    th = o_ref.shape[1]
    wp = o_ref.shape[2]
    cp = o_ref.shape[3]
    cin = xp1_sc.shape[-1]

    # ---- Fetch exactly the TH+4 pool-window rows this block needs (2-row
    #      halo each side; top/bottom halos come from the wrapper's zero pad).
    # TODO(synk): double-buffer this DMA across row blocks to hide its latency.
    row0 = pl.multiple_of(r * th, th)
    pltpu.sync_copy(x_hbm.at[n, pl.ds(row0, th + 4)], xin_sc)

    # ---- MaxPool2d(2) in bf16 (max is order-preserving).
    x = xin_sc[...]                                        # (th+4, 2, wp, 2*cin)
    rmax = jnp.maximum(x[:, 0, :, :], x[:, 1, :, :])       # (th+4, wp, 2*cin)
    pooled = jnp.maximum(rmax[..., :cin], rmax[..., cin:])  # (th+4, wp, cin)

    # ---- conv1 input: write interior; refresh only the 1-wide W-halo columns
    #      (never memset the whole buffer).
    xp1_sc[:, 1:wp + 1, :] = pooled
    xp1_sc[:, 0:1, :] = jnp.zeros((th + 4, 1, cin), xp1_sc.dtype)
    xp1_sc[:, wp + 1:wp + 2, :] = jnp.zeros((th + 4, 1, cin), xp1_sc.dtype)

    def conv3x3_bias_relu(src_ref, rows_out, c_in, w_ref, b_ref):
        # Per-ky accumulation: 3 matmuls with K = 3*c_in into one f32 acc.
        acc = None
        for ky in range(3):
            taps = [src_ref[ky:ky + rows_out, kx:kx + wp, :] for kx in range(3)]
            patch = jnp.concatenate(taps, axis=-1).reshape(rows_out * wp, 3 * c_in)
            part = jnp.dot(patch, w_ref[ky * 3 * c_in:(ky + 1) * 3 * c_in, :],
                           preferred_element_type=jnp.float32)
            acc = part if acc is None else acc + part
        return jnp.maximum(acc + b_ref[...], 0.0)          # (rows_out*wp, cp)

    # ---- conv1 over th+2 extended rows (1-row recompute overlap so conv2's
    #      halo rows are available in VMEM without touching neighbor blocks).
    y1 = conv3x3_bias_relu(xp1_sc, th + 2, cin, w1_ref, b1_ref)

    xp2_sc[:, 1:wp + 1, :] = y1.reshape(th + 2, wp, cp).astype(xp2_sc.dtype)
    xp2_sc[:, 0:1, :] = jnp.zeros((th + 2, 1, cp), xp2_sc.dtype)
    xp2_sc[:, wp + 1:wp + 2, :] = jnp.zeros((th + 2, 1, cp), xp2_sc.dtype)

    # conv2 uses zero padding in H: blank the extended rows that fall outside
    # the image (only at the first / last row block).
    @pl.when(r == 0)
    def _():
        xp2_sc[0:1, 1:wp + 1, :] = jnp.zeros((1, wp, cp), xp2_sc.dtype)

    @pl.when(r == num_r - 1)
    def _():
        xp2_sc[th + 1:th + 2, 1:wp + 1, :] = jnp.zeros((1, wp, cp), xp2_sc.dtype)

    # ---- conv2 -> output block.
    y2 = conv3x3_bias_relu(xp2_sc, th, cp, w2_ref, b2_ref)
    o_ref[...] = y2.reshape(1, th, wp, cp).astype(o_ref.dtype)


# --------------------------------------------------------------------------
# Parameter setup + BN folding / channel padding (glue, plain JAX)
# --------------------------------------------------------------------------
def init_down_params(key, in_channels, out_channels):
    ks = jax.random.split(key, 12)

    def conv_w(k, cin, cout):
        # PyTorch layout is (Cout, Cin, 3, 3); stored here as HWIO (3, 3, Cin, Cout).
        return 0.1 * jax.random.normal(k, (3, 3, cin, cout), jnp.float32)

    p = {}
    for idx, cin in ((1, in_channels), (2, out_channels)):
        k = ks[(idx - 1) * 6:idx * 6]
        p[f"w{idx}"] = conv_w(k[0], cin, out_channels)
        p[f"b{idx}"] = 0.1 * jax.random.normal(k[1], (out_channels,), jnp.float32)
        p[f"gamma{idx}"] = jax.random.uniform(k[2], (out_channels,), jnp.float32, 0.5, 1.5)
        p[f"beta{idx}"] = 0.1 * jax.random.normal(k[3], (out_channels,), jnp.float32)
        p[f"mean{idx}"] = 0.1 * jax.random.normal(k[4], (out_channels,), jnp.float32)
        p[f"var{idx}"] = jax.random.uniform(k[5], (out_channels,), jnp.float32, 0.5, 1.5)
    return p


def _fold_bn_pad(w, b, gamma, beta, mean, var, cin_pad, cout_pad):
    """Fold inference-mode BN into the conv, zero-pad channels, flatten to im2col."""
    kh, kw, cin, cout = w.shape
    scale = gamma / jnp.sqrt(var + _EPS)                   # (Cout,)
    w_eff = w * scale[None, None, None, :]                 # (3,3,Cin,Cout)
    b_eff = (b - mean) * scale + beta                      # (Cout,)
    w_pad = jnp.zeros((kh, kw, cin_pad, cout_pad), jnp.float32)
    w_pad = w_pad.at[:, :, :cin, :cout].set(w_eff)
    b_pad = jnp.zeros((1, cout_pad), jnp.float32).at[0, :cout].set(b_eff)
    w_flat = w_pad.reshape(kh * kw * cin_pad, cout_pad).astype(jnp.bfloat16)
    return w_flat, b_pad


def down_forward(x_nchw, params):
    """Down.forward: NCHW f32 in, NCHW f32 out (matches PyTorch semantics)."""
    N, Cin, H, W = x_nchw.shape
    Cout = params["w1"].shape[-1]
    Hp, Wp = H // 2, W // 2
    Cp = _round_up(Cout, _LANES)             # lane-dense output channels
    Cin_pad = _round_up(Cin, 64)             # lane-friendly conv1 input channels
    TH = _pick_row_block(Hp, max_rows=32)    # pooled rows per grid step
    R = Hp // TH

    # NCHW -> NHWC (bf16), floor-crop odd spatial dims (MaxPool2d(2) floor),
    # pad channels, expose 2x2 pool windows with a free row-major reshape,
    # then pre-pad 2 zero pool-rows of H halo on each side.
    # TODO(synk): keep activations NHWC/bf16 across the whole UNet to drop
    # these wrapper transpose/cast passes entirely.
    x = jnp.transpose(x_nchw, (0, 2, 3, 1))[:, :2 * Hp, :2 * Wp, :].astype(jnp.bfloat16)
    if Cin_pad != Cin:
        x = jnp.pad(x, ((0, 0), (0, 0), (0, 0), (0, Cin_pad - Cin)))
    x = x.reshape(N, Hp, 2, Wp, 2 * Cin_pad)
    x = jnp.pad(x, ((0, 0), (2, 2), (0, 0), (0, 0), (0, 0)))   # (N, Hp+4, 2, Wp, 2*Cin_pad)

    w1f, b1f = _fold_bn_pad(params["w1"], params["b1"], params["gamma1"],
                            params["beta1"], params["mean1"], params["var1"],
                            Cin_pad, Cp)
    w2f, b2f = _fold_bn_pad(params["w2"], params["b2"], params["gamma2"],
                            params["beta2"], params["mean2"], params["var2"],
                            Cp, Cp)

    vmem_limit = int(min(64 * 2**20,
                         max(32 * 2**20, 4 * _vmem_bytes_estimate(TH, Wp, Cin_pad, Cp))))

    grid_spec = pltpu.PrefetchScalarGridSpec(
        num_scalar_prefetch=0,
        grid=(N, R),
        in_specs=[
            pl.BlockSpec(memory_space=pl.ANY),                      # x (manual DMA)
            pl.BlockSpec((9 * Cin_pad, Cp), lambda n, r: (0, 0)),   # w1
            pl.BlockSpec((1, Cp), lambda n, r: (0, 0)),             # b1
            pl.BlockSpec((9 * Cp, Cp), lambda n, r: (0, 0)),        # w2
            pl.BlockSpec((1, Cp), lambda n, r: (0, 0)),             # b2
        ],
        out_specs=pl.BlockSpec((1, TH, Wp, Cp), lambda n, r: (n, r, 0, 0)),
        scratch_shapes=[
            pltpu.VMEM((TH + 4, 2, Wp, 2 * Cin_pad), jnp.bfloat16),  # xin_sc
            pltpu.VMEM((TH + 4, Wp + 2, Cin_pad), jnp.bfloat16),     # xp1_sc
            pltpu.VMEM((TH + 2, Wp + 2, Cp), jnp.bfloat16),          # xp2_sc
        ],
    )

    y = pl.pallas_call(
        _down_fused_kernel,
        grid_spec=grid_spec,
        out_shape=jax.ShapeDtypeStruct((N, Hp, Wp, Cp), jnp.bfloat16),
        compiler_params=pltpu.CompilerParams(
            dimension_semantics=("parallel", "parallel"),
            vmem_limit_bytes=vmem_limit),
    )(x, w1f, b1f, w2f, b2f)

    # NHWC bf16 -> NCHW f32 to match the PyTorch module's interface.
    return jnp.transpose(y[..., :Cout].astype(jnp.float32), (0, 3, 1, 2))


# --------------------------------------------------------------------------
# Pure-JAX reference (for verification only)
# --------------------------------------------------------------------------
def down_reference(x_nchw, params):
    x = jnp.transpose(x_nchw, (0, 2, 3, 1))
    N, H, W, C = x.shape
    pooled = jnp.max(x[:, :(H // 2) * 2, :(W // 2) * 2, :]
                     .reshape(N, H // 2, 2, W // 2, 2, C), axis=(2, 4))

    def conv(x_nhwc, w, b, g, beta, mean, var):
        y = lax.conv_general_dilated(
            x_nhwc, w, window_strides=(1, 1), padding="SAME",
            dimension_numbers=("NHWC", "HWIO", "NHWC"))
        y = y + b[None, None, None, :]
        y = (y - mean) / jnp.sqrt(var + _EPS) * g + beta
        return jnp.maximum(y, 0.0)

    y = conv(pooled, params["w1"], params["b1"], params["gamma1"],
             params["beta1"], params["mean1"], params["var1"])
    y = conv(y, params["w2"], params["b2"], params["gamma2"],
             params["beta2"], params["mean2"], params["var2"])
    return jnp.transpose(y, (0, 3, 1, 2))


# --------------------------------------------------------------------------
if __name__ == "__main__":
    key = jax.random.PRNGKey(0)
    k_x, k_p = jax.random.split(key)

    N, Cin, Cout, H, W = 2, 4, 8, 16, 16
    x = jax.random.normal(k_x, (N, Cin, H, W), jnp.float32)
    params = init_down_params(k_p, Cin, Cout)

    out = jax.block_until_ready(jax.jit(down_forward)(x, params))
    ref = jax.block_until_ready(down_reference(x, params))

    assert out.shape == (N, Cout, H // 2, W // 2), out.shape
    # bf16 activations/weights on the MXU with f32 accumulation + bf16 output
    # -> tolerance looser than pure f32.
    assert jnp.allclose(out, ref, atol=5e-2, rtol=5e-2), \
        float(jnp.max(jnp.abs(out - ref)))

    print("KERNEL_OK")
</pallas_src>

<mosaic_0001>
module attributes {stable_mosaic.version = 11 : i64} {
  func.func @_down_fused_kernel(%arg0: i32, %arg1: i32, %arg2: memref<2x12x2x8x128xbf16, #tpu.memory_space<any>>, %arg3: memref<576x128xbf16, #tpu.memory_space<vmem>>, %arg4: memref<1x128xf32, #tpu.memory_space<vmem>>, %arg5: memref<1152x128xbf16, #tpu.memory_space<vmem>>, %arg6: memref<1x128xf32, #tpu.memory_space<vmem>>, %arg7: memref<1x8x8x128xbf16, #tpu.memory_space<vmem>>, %arg8: memref<12x2x8x128xbf16, #tpu.memory_space<vmem>>, %arg9: memref<12x10x64xbf16, #tpu.memory_space<vmem>>, %arg10: memref<10x10x128xbf16, #tpu.memory_space<vmem>>) attributes {dimension_semantics = [#tpu.dimension_semantics<parallel>, #tpu.dimension_semantics<parallel>], iteration_bounds = array<i64: 2, 1>, scalar_prefetch = 0 : i64, scratch_operands = 3 : i64, tpu.core_type = #tpu.core_type<tc>, window_params = [{}, {pipeline_mode = #tpu.pipeline_mode<synchronous>, transform_indices = @transform_1, window_bounds = array<i64: 576, 128>}, {pipeline_mode = #tpu.pipeline_mode<synchronous>, transform_indices = @transform_2, window_bounds = array<i64: 1, 128>}, {pipeline_mode = #tpu.pipeline_mode<synchronous>, transform_indices = @transform_3, window_bounds = array<i64: 1152, 128>}, {pipeline_mode = #tpu.pipeline_mode<synchronous>, transform_indices = @transform_4, window_bounds = array<i64: 1, 128>}, {transform_indices = @transform_5, window_bounds = array<i64: 1, 8, 8, 128>}]} {
    %c8_i32 = arith.constant 8 : i32
    %0 = arith.muli %arg1, %c8_i32 : i32
    %1 = tpu.assume_multiple %0, 8 : i32
    "tpu.region"() ({
      %88 = tpu.sem_alloc : memref<!tpu.dma_semaphore, #tpu.memory_space<semaphore_mem>>
      %c0_i32_103 = arith.constant 0 : i32
      %c0_i32_104 = arith.constant 0 : i32
      %c0_i32_105 = arith.constant 0 : i32
      %89 = tpu.memref_slice %arg2[%arg0, %1, %c0_i32_103, %c0_i32_104, %c0_i32_105] : memref<2x12x2x8x128xbf16, #tpu.memory_space<any>> -> memref<1x12x2x8x128xbf16, #tpu.memory_space<any>>
      %90 = tpu.memref_squeeze %89 : memref<1x12x2x8x128xbf16, #tpu.memory_space<any>> -> memref<12x2x8x128xbf16, #tpu.memory_space<any>>
      tpu.enqueue_dma source(%90 : memref<12x2x8x128xbf16, #tpu.memory_space<any>>) target(%arg8 : memref<12x2x8x128xbf16, #tpu.memory_space<vmem>>) target_semaphore(%88 : memref<!tpu.dma_semaphore, #tpu.memory_space<semaphore_mem>>)
      %c0_i32_106 = arith.constant 0 : i32
      %c0_i32_107 = arith.constant 0 : i32
      %c0_i32_108 = arith.constant 0 : i32
      %91 = tpu.memref_slice %arg2[%arg0, %1, %c0_i32_106, %c0_i32_107, %c0_i32_108] : memref<2x12x2x8x128xbf16, #tpu.memory_space<any>> -> memref<1x12x2x8x128xbf16, #tpu.memory_space<any>>
      %92 = tpu.memref_squeeze %91 : memref<1x12x2x8x128xbf16, #tpu.memory_space<any>> -> memref<12x2x8x128xbf16, #tpu.memory_space<any>>
      tpu.wait_dma2 semaphore(%88 : memref<!tpu.dma_semaphore, #tpu.memory_space<semaphore_mem>>) src(%92 : memref<12x2x8x128xbf16, #tpu.memory_space<any>>) dst(%arg8 : memref<12x2x8x128xbf16, #tpu.memory_space<vmem>>)
      tpu.yield
    }) : () -> ()
    %c0 = arith.constant 0 : index
    %c0_0 = arith.constant 0 : index
    %c0_1 = arith.constant 0 : index
    %c0_2 = arith.constant 0 : index
    %2 = vector.load %arg8[%c0, %c0_0, %c0_1, %c0_2] : memref<12x2x8x128xbf16, #tpu.memory_space<vmem>>, vector<12x2x8x128xbf16>
    %3 = vector.extract_strided_slice %2 {offsets = [0, 0, 0, 0], sizes = [12, 1, 8, 128], strides = [1, 1, 1, 1]} : vector<12x2x8x128xbf16> to vector<12x1x8x128xbf16>
    %4 = vector.shape_cast %3 : vector<12x1x8x128xbf16> to vector<12x8x128xbf16>
    %5 = vector.extract_strided_slice %2 {offsets = [0, 1, 0, 0], sizes = [12, 1, 8, 128], strides = [1, 1, 1, 1]} : vector<12x2x8x128xbf16> to vector<12x1x8x128xbf16>
    %6 = vector.shape_cast %5 : vector<12x1x8x128xbf16> to vector<12x8x128xbf16>
    %7 = arith.maximumf %4, %6 : vector<12x8x128xbf16>
    %8 = vector.extract_strided_slice %7 {offsets = [0, 0, 0], sizes = [12, 8, 64], strides = [1, 1, 1]} : vector<12x8x128xbf16> to vector<12x8x64xbf16>
    %9 = vector.extract_strided_slice %7 {offsets = [0, 0, 64], sizes = [12, 8, 64], strides = [1, 1, 1]} : vector<12x8x128xbf16> to vector<12x8x64xbf16>
    %10 = arith.maximumf %8, %9 : vector<12x8x64xbf16>
    %c0_3 = arith.constant 0 : index
    %c1 = arith.constant 1 : index
    %c0_4 = arith.constant 0 : index
    %11 = vector.load %arg9[%c0_3, %c1, %c0_4] : memref<12x10x64xbf16, #tpu.memory_space<vmem>>, vector<12x8x64xbf16>
    tpu.vector_store %arg9[%c0_3, %c1, %c0_4], %10 {strides = array<i32>} : memref<12x10x64xbf16, #tpu.memory_space<vmem>>, vector<12x8x64xbf16>,
    %cst = arith.constant 0.000000e+00 : bf16
    %12 = vector.broadcast %cst : bf16 to vector<12x1x64xbf16>
    %c0_5 = arith.constant 0 : index
    %c0_6 = arith.constant 0 : index
    %c0_7 = arith.constant 0 : index
    %13 = vector.load %arg9[%c0_5, %c0_6, %c0_7] : memref<12x10x64xbf16, #tpu.memory_space<vmem>>, vector<12x1x64xbf16>
    tpu.vector_store %arg9[%c0_5, %c0_6, %c0_7], %12 {strides = array<i32>} : memref<12x10x64xbf16, #tpu.memory_space<vmem>>, vector<12x1x64xbf16>,
    %cst_8 = arith.constant 0.000000e+00 : bf16
    %14 = vector.broadcast %cst_8 : bf16 to vector<12x1x64xbf16>
    %c0_9 = arith.constant 0 : index
    %c9 = arith.constant 9 : index
    %c0_10 = arith.constant 0 : index
    %15 = vector.load %arg9[%c0_9, %c9, %c0_10] : memref<12x10x64xbf16, #tpu.memory_space<vmem>>, vector<12x1x64xbf16>
    tpu.vector_store %arg9[%c0_9, %c9, %c0_10], %14 {strides = array<i32>} : memref<12x10x64xbf16, #tpu.memory_space<vmem>>, vector<12x1x64xbf16>,
    %c0_11 = arith.constant 0 : index
    %c0_12 = arith.constant 0 : index
    %c0_13 = arith.constant 0 : index
    %16 = vector.load %arg9[%c0_11, %c0_12, %c0_13] : memref<12x10x64xbf16, #tpu.memory_space<vmem>>, vector<10x8x64xbf16>
    %c0_14 = arith.constant 0 : index
    %c1_15 = arith.constant 1 : index
    %c0_16 = arith.constant 0 : index
    %17 = vector.load %arg9[%c0_14, %c1_15, %c0_16] : memref<12x10x64xbf16, #tpu.memory_space<vmem>>, vector<10x8x64xbf16>
    %c0_17 = arith.constant 0 : index
    %c2 = arith.constant 2 : index
    %c0_18 = arith.constant 0 : index
    %18 = vector.load %arg9[%c0_17, %c2, %c0_18] : memref<12x10x64xbf16, #tpu.memory_space<vmem>>, vector<10x8x64xbf16>
    %19 = tpu.concatenate %16, %17, %18 in 2 : vector<10x8x64xbf16>, vector<10x8x64xbf16>, vector<10x8x64xbf16> -> vector<10x8x192xbf16>
    %20 = vector.shape_cast %19 : vector<10x8x192xbf16> to vector<80x192xbf16>
    %c0_19 = arith.constant 0 : index
    %c0_20 = arith.constant 0 : index
    %21 = vector.load %arg3[%c0_19, %c0_20] : memref<576x128xbf16, #tpu.memory_space<vmem>>, vector<192x128xbf16>
    %cst_21 = arith.constant dense<0.000000e+00> : vector<80x128xf32>
    %22 = tpu.matmul %20, %21, %cst_21 {dimension_numbers = #tpu.dot_dimension_numbers<[1], [0], [0], [1], [0, 0, 1, 1], [], []>} : vector<80x192xbf16>, vector<192x128xbf16>, vector<80x128xf32> -> vector<80x128xf32>
    %c1_22 = arith.constant 1 : index
    %c0_23 = arith.constant 0 : index
    %c0_24 = arith.constant 0 : index
    %23 = vector.load %arg9[%c1_22, %c0_23, %c0_24] : memref<12x10x64xbf16, #tpu.memory_space<vmem>>, vector<10x8x64xbf16>
    %c1_25 = arith.constant 1 : index
    %c1_26 = arith.constant 1 : index
    %c0_27 = arith.constant 0 : index
    %24 = vector.load %arg9[%c1_25, %c1_26, %c0_27] : memref<12x10x64xbf16, #tpu.memory_space<vmem>>, vector<10x8x64xbf16>
    %c1_28 = arith.constant 1 : index
    %c2_29 = arith.constant 2 : index
    %c0_30 = arith.constant 0 : index
    %25 = vector.load %arg9[%c1_28, %c2_29, %c0_30] : memref<12x10x64xbf16, #tpu.memory_space<vmem>>, vector<10x8x64xbf16>
    %26 = tpu.concatenate %23, %24, %25 in 2 : vector<10x8x64xbf16>, vector<10x8x64xbf16>, vector<10x8x64xbf16> -> vector<10x8x192xbf16>
    %27 = vector.shape_cast %26 : vector<10x8x192xbf16> to vector<80x192xbf16>
    %c192 = arith.constant 192 : index
    %c0_31 = arith.constant 0 : index
    %28 = vector.load %arg3[%c192, %c0_31] : memref<576x128xbf16, #tpu.memory_space<vmem>>, vector<192x128xbf16>
    %cst_32 = arith.constant dense<0.000000e+00> : vector<80x128xf32>
    %29 = tpu.matmul %27, %28, %cst_32 {dimension_numbers = #tpu.dot_dimension_numbers<[1], [0], [0], [1], [0, 0, 1, 1], [], []>} : vector<80x192xbf16>, vector<192x128xbf16>, vector<80x128xf32> -> vector<80x128xf32>
    %30 = arith.addf %22, %29 : vector<80x128xf32>
    %c2_33 = arith.constant 2 : index
    %c0_34 = arith.constant 0 : index
    %c0_35 = arith.constant 0 : index
    %31 = vector.load %arg9[%c2_33, %c0_34, %c0_35] : memref<12x10x64xbf16, #tpu.memory_space<vmem>>, vector<10x8x64xbf16>
    %c2_36 = arith.constant 2 : index
    %c1_37 = arith.constant 1 : index
    %c0_38 = arith.constant 0 : index
    %32 = vector.load %arg9[%c2_36, %c1_37, %c0_38] : memref<12x10x64xbf16, #tpu.memory_space<vmem>>, vector<10x8x64xbf16>
    %c2_39 = arith.constant 2 : index
    %c2_40 = arith.constant 2 : index
    %c0_41 = arith.constant 0 : index
    %33 = vector.load %arg9[%c2_39, %c2_40, %c0_41] : memref<12x10x64xbf16, #tpu.memory_space<vmem>>, vector<10x8x64xbf16>
    %34 = tpu.concatenate %31, %32, %33 in 2 : vector<10x8x64xbf16>, vector<10x8x64xbf16>, vector<10x8x64xbf16> -> vector<10x8x192xbf16>
    %35 = vector.shape_cast %34 : vector<10x8x192xbf16> to vector<80x192xbf16>
    %c384 = arith.constant 384 : index
    %c0_42 = arith.constant 0 : index
    %36 = vector.load %arg3[%c384, %c0_42] : memref<576x128xbf16, #tpu.memory_space<vmem>>, vector<192x128xbf16>
    %cst_43 = arith.constant dense<0.000000e+00> : vector<80x128xf32>
    %37 = tpu.matmul %35, %36, %cst_43 {dimension_numbers = #tpu.dot_dimension_numbers<[1], [0], [0], [1], [0, 0, 1, 1], [], []>} : vector<80x192xbf16>, vector<192x128xbf16>, vector<80x128xf32> -> vector<80x128xf32>
    %38 = arith.addf %30, %37 : vector<80x128xf32>
    %c0_44 = arith.constant 0 : index
    %c0_45 = arith.constant 0 : index
    %39 = vector.load %arg4[%c0_44, %c0_45] : memref<1x128xf32, #tpu.memory_space<vmem>>, vector<1x128xf32>
    %40 = vector.broadcast %39 : vector<1x128xf32> to vector<80x128xf32>
    %41 = arith.addf %38, %40 : vector<80x128xf32>
    %cst_46 = arith.constant 0.000000e+00 : f32
    %42 = vector.broadcast %cst_46 : f32 to vector<80x128xf32>
    %43 = arith.maximumf %41, %42 : vector<80x128xf32>
    %44 = vector.shape_cast %43 : vector<80x128xf32> to vector<10x8x128xf32>
    %45 = arith.truncf %44 : vector<10x8x128xf32> to vector<10x8x128xbf16>
    %c0_47 = arith.constant 0 : index
    %c1_48 = arith.constant 1 : index
    %c0_49 = arith.constant 0 : index
    %46 = vector.load %arg10[%c0_47, %c1_48, %c0_49] : memref<10x10x128xbf16, #tpu.memory_space<vmem>>, vector<10x8x128xbf16>
    tpu.vector_store %arg10[%c0_47, %c1_48, %c0_49], %45 {strides = array<i32>} : memref<10x10x128xbf16, #tpu.memory_space<vmem>>, vector<10x8x128xbf16>,
    %cst_50 = arith.constant 0.000000e+00 : bf16
    %47 = vector.broadcast %cst_50 : bf16 to vector<10x1x128xbf16>
    %c0_51 = arith.constant 0 : index
    %c0_52 = arith.constant 0 : index
    %c0_53 = arith.constant 0 : index
    %48 = vector.load %arg10[%c0_51, %c0_52, %c0_53] : memref<10x10x128xbf16, #tpu.memory_space<vmem>>, vector<10x1x128xbf16>
    tpu.vector_store %arg10[%c0_51, %c0_52, %c0_53], %47 {strides = array<i32>} : memref<10x10x128xbf16, #tpu.memory_space<vmem>>, vector<10x1x128xbf16>,
    %cst_54 = arith.constant 0.000000e+00 : bf16
    %49 = vector.broadcast %cst_54 : bf16 to vector<10x1x128xbf16>
    %c0_55 = arith.constant 0 : index
    %c9_56 = arith.constant 9 : index
    %c0_57 = arith.constant 0 : index
    %50 = vector.load %arg10[%c0_55, %c9_56, %c0_57] : memref<10x10x128xbf16, #tpu.memory_space<vmem>>, vector<10x1x128xbf16>
    tpu.vector_store %arg10[%c0_55, %c9_56, %c0_57], %49 {strides = array<i32>} : memref<10x10x128xbf16, #tpu.memory_space<vmem>>, vector<10x1x128xbf16>,
    %c0_i32 = arith.constant 0 : i32
    %51 = arith.cmpi eq, %arg1, %c0_i32 : i32
    %52 = arith.extui %51 : i1 to i32
    %c0_i32_58 = arith.constant 0 : i32
    %53 = arith.cmpi ne, %52, %c0_i32_58 : i32
    scf.if %53 {
      %cst_103 = arith.constant 0.000000e+00 : bf16
      %88 = vector.broadcast %cst_103 : bf16 to vector<1x8x128xbf16>
      %c0_104 = arith.constant 0 : index
      %c1_105 = arith.constant 1 : index
      %c0_106 = arith.constant 0 : index
      %89 = vector.load %arg10[%c0_104, %c1_105, %c0_106] : memref<10x10x128xbf16, #tpu.memory_space<vmem>>, vector<1x8x128xbf16>
      tpu.vector_store %arg10[%c0_104, %c1_105, %c0_106], %88 {strides = array<i32>} : memref<10x10x128xbf16, #tpu.memory_space<vmem>>, vector<1x8x128xbf16>,
    } else {
    }
    %c0_i32_59 = arith.constant 0 : i32
    %54 = arith.cmpi eq, %arg1, %c0_i32_59 : i32
    %55 = arith.extui %54 : i1 to i32
    %c0_i32_60 = arith.constant 0 : i32
    %56 = arith.cmpi ne, %55, %c0_i32_60 : i32
    scf.if %56 {
      %cst_103 = arith.constant 0.000000e+00 : bf16
      %88 = vector.broadcast %cst_103 : bf16 to vector<1x8x128xbf16>
      %c9_104 = arith.constant 9 : index
      %c1_105 = arith.constant 1 : index
      %c0_106 = arith.constant 0 : index
      %89 = vector.load %arg10[%c9_104, %c1_105, %c0_106] : memref<10x10x128xbf16, #tpu.memory_space<vmem>>, vector<1x8x128xbf16>
      tpu.vector_store %arg10[%c9_104, %c1_105, %c0_106], %88 {strides = array<i32>} : memref<10x10x128xbf16, #tpu.memory_space<vmem>>, vector<1x8x128xbf16>,
    } else {
    }
    %c0_61 = arith.constant 0 : index
    %c0_62 = arith.constant 0 : index
    %c0_63 = arith.constant 0 : index
    %57 = vector.load %arg10[%c0_61, %c0_62, %c0_63] : memref<10x10x128xbf16, #tpu.memory_space<vmem>>, vector<8x8x128xbf16>
    %c0_64 = arith.constant 0 : index
    %c1_65 = arith.constant 1 : index
    %c0_66 = arith.constant 0 : index
    %58 = vector.load %arg10[%c0_64, %c1_65, %c0_66] : memref<10x10x128xbf16, #tpu.memory_space<vmem>>, vector<8x8x128xbf16>
    %c0_67 = arith.constant 0 : index
    %c2_68 = arith.constant 2 : index
    %c0_69 = arith.constant 0 : index
    %59 = vector.load %arg10[%c0_67, %c2_68, %c0_69] : memref<10x10x128xbf16, #tpu.memory_space<vmem>>, vector<8x8x128xbf16>
    %60 = tpu.concatenate %57, %58, %59 in 2 : vector<8x8x128xbf16>, vector<8x8x128xbf16>, vector<8x8x128xbf16> -> vector<8x8x384xbf16>
    %61 = vector.shape_cast %60 : vector<8x8x384xbf16> to vector<64x384xbf16>
    %c0_70 = arith.constant 0 : index
    %c0_71 = arith.constant 0 : index
    %62 = vector.load %arg5[%c0_70, %c0_71] : memref<1152x128xbf16, #tpu.memory_space<vmem>>, vector<384x128xbf16>
    %cst_72 = arith.constant dense<0.000000e+00> : vector<64x128xf32>
    %63 = tpu.matmul %61, %62, %cst_72 {dimension_numbers = #tpu.dot_dimension_numbers<[1], [0], [0], [1], [0, 0, 1, 1], [], []>} : vector<64x384xbf16>, vector<384x128xbf16>, vector<64x128xf32> -> vector<64x128xf32>
    %c1_73 = arith.constant 1 : index
    %c0_74 = arith.constant 0 : index
    %c0_75 = arith.constant 0 : index
    %64 = vector.load %arg10[%c1_73, %c0_74, %c0_75] : memref<10x10x128xbf16, #tpu.memory_space<vmem>>, vector<8x8x128xbf16>
    %c1_76 = arith.constant 1 : index
    %c1_77 = arith.constant 1 : index
    %c0_78 = arith.constant 0 : index
    %65 = vector.load %arg10[%c1_76, %c1_77, %c0_78] : memref<10x10x128xbf16, #tpu.memory_space<vmem>>, vector<8x8x128xbf16>
    %c1_79 = arith.constant 1 : index
    %c2_80 = arith.constant 2 : index
    %c0_81 = arith.constant 0 : index
    %66 = vector.load %arg10[%c1_79, %c2_80, %c0_81] : memref<10x10x128xbf16, #tpu.memory_space<vmem>>, vector<8x8x128xbf16>
    %67 = tpu.concatenate %64, %65, %66 in 2 : vector<8x8x128xbf16>, vector<8x8x128xbf16>, vector<8x8x128xbf16> -> vector<8x8x384xbf16>
    %68 = vector.shape_cast %67 : vector<8x8x384xbf16> to vector<64x384xbf16>
    %c384_82 = arith.constant 384 : index
    %c0_83 = arith.constant 0 : index
    %69 = vector.load %arg5[%c384_82, %c0_83] : memref<1152x128xbf16, #tpu.memory_space<vmem>>, vector<384x128xbf16>
    %cst_84 = arith.constant dense<0.000000e+00> : vector<64x128xf32>
    %70 = tpu.matmul %68, %69, %cst_84 {dimension_numbers = #tpu.dot_dimension_numbers<[1], [0], [0], [1], [0, 0, 1, 1], [], []>} : vector<64x384xbf16>, vector<384x128xbf16>, vector<64x128xf32> -> vector<64x128xf32>
    %71 = arith.addf %63, %70 : vector<64x128xf32>
    %c2_85 = arith.constant 2 : index
    %c0_86 = arith.constant 0 : index
    %c0_87 = arith.constant 0 : index
    %72 = vector.load %arg10[%c2_85, %c0_86, %c0_87] : memref<10x10x128xbf16, #tpu.memory_space<vmem>>, vector<8x8x128xbf16>
    %c2_88 = arith.constant 2 : index
    %c1_89 = arith.constant 1 : index
    %c0_90 = arith.constant 0 : index
    %73 = vector.load %arg10[%c2_88, %c1_89, %c0_90] : memref<10x10x128xbf16, #tpu.memory_space<vmem>>, vector<8x8x128xbf16>
    %c2_91 = arith.constant 2 : index
    %c2_92 = arith.constant 2 : index
    %c0_93 = arith.constant 0 : index
    %74 = vector.load %arg10[%c2_91, %c2_92, %c0_93] : memref<10x10x128xbf16, #tpu.memory_space<vmem>>, vector<8x8x128xbf16>
    %75 = tpu.concatenate %72, %73, %74 in 2 : vector<8x8x128xbf16>, vector<8x8x128xbf16>, vector<8x8x128xbf16> -> vector<8x8x384xbf16>
    %76 = vector.shape_cast %75 : vector<8x8x384xbf16> to vector<64x384xbf16>
    %c768 = arith.constant 768 : index
    %c0_94 = arith.constant 0 : index
    %77 = vector.load %arg5[%c768, %c0_94] : memref<1152x128xbf16, #tpu.memory_space<vmem>>, vector<384x128xbf16>
    %cst_95 = arith.constant dense<0.000000e+00> : vector<64x128xf32>
    %78 = tpu.matmul %76, %77, %cst_95 {dimension_numbers = #tpu.dot_dimension_numbers<[1], [0], [0], [1], [0, 0, 1, 1], [], []>} : vector<64x384xbf16>, vector<384x128xbf16>, vector<64x128xf32> -> vector<64x128xf32>
    %79 = arith.addf %71, %78 : vector<64x128xf32>
    %c0_96 = arith.constant 0 : index
    %c0_97 = arith.constant 0 : index
    %80 = vector.load %arg6[%c0_96, %c0_97] : memref<1x128xf32, #tpu.memory_space<vmem>>, vector<1x128xf32>
    %81 = vector.broadcast %80 : vector<1x128xf32> to vector<64x128xf32>
    %82 = arith.addf %79, %81 : vector<64x128xf32>
    %cst_98 = arith.constant 0.000000e+00 : f32
    %83 = vector.broadcast %cst_98 : f32 to vector<64x128xf32>
    %84 = arith.maximumf %82, %83 : vector<64x128xf32>
    %85 = vector.shape_cast %84 : vector<64x128xf32> to vector<1x8x8x128xf32>
    %86 = arith.truncf %85 : vector<1x8x8x128xf32> to vector<1x8x8x128xbf16>
    %c0_99 = arith.constant 0 : index
    %c0_100 = arith.constant 0 : index
    %c0_101 = arith.constant 0 : index
    %c0_102 = arith.constant 0 : index
    %87 = vector.load %arg7[%c0_99, %c0_100, %c0_101, %c0_102] : memref<1x8x8x128xbf16, #tpu.memory_space<vmem>>, vector<1x8x8x128xbf16>
    tpu.vector_store %arg7[%c0_99, %c0_100, %c0_101, %c0_102], %86 {strides = array<i32>} : memref<1x8x8x128xbf16, #tpu.memory_space<vmem>>, vector<1x8x8x128xbf16>,
    return
  }
  func.func @transform_1(%arg0: i32, %arg1: i32) -> (i32, i32) {
    %c0_i32 = arith.constant 0 : i32
    %c0_i32_0 = arith.constant 0 : i32
    %c0_i32_1 = arith.constant 0 : i32
    return %c0_i32, %c0_i32_0 : i32, i32
  }
  func.func @transform_2(%arg0: i32, %arg1: i32) -> (i32, i32) {
    %c0_i32 = arith.constant 0 : i32
    %c0_i32_0 = arith.constant 0 : i32
    %c0_i32_1 = arith.constant 0 : i32
    return %c0_i32, %c0_i32_0 : i32, i32
  }
  func.func @transform_3(%arg0: i32, %arg1: i32) -> (i32, i32) {
    %c0_i32 = arith.constant 0 : i32
    %c0_i32_0 = arith.constant 0 : i32
    %c0_i32_1 = arith.constant 0 : i32
    return %c0_i32, %c0_i32_0 : i32, i32
  }
  func.func @transform_4(%arg0: i32, %arg1: i32) -> (i32, i32) {
    %c0_i32 = arith.constant 0 : i32
    %c0_i32_0 = arith.constant 0 : i32
    %c0_i32_1 = arith.constant 0 : i32
    return %c0_i32, %c0_i32_0 : i32, i32
  }
  func.func @transform_5(%arg0: i32, %arg1: i32) -> (i32, i32, i32, i32) {
    %c0_i32 = arith.constant 0 : i32
    %c0_i32_0 = arith.constant 0 : i32
    %c0_i32_1 = arith.constant 0 : i32
    return %arg0, %arg1, %c0_i32, %c0_i32_0 : i32, i32, i32, i32
  }
}

</mosaic_0001>

<llo_original>
// kernel: down_forward.1
$region0: #{down_forward.1}
  #allocation0 [shape = 'u32[]', space=smem, size = 0x4, offset = 0x4, fixed_abs, tag = 'smem constant byte address 0x4 - core index']
  #allocation1 [shape = 'u32[144,128]{1,0:T(1,128)}', space=vmem, size = 0x12000, scoped, tag = 'internal scratch']
  #allocation2 [shape = 'bf16[12,2,8,128]{3,2,1,0:T(8,128)(2,1)}', space=vmem, size = 0xc000, scoped, tag = 'scratch operand']
  #allocation3 [shape = 'bf16[12,10,64]{2,1,0:T(8,128)(2,1)}', space=vmem, size = 0xc000, scoped, tag = 'scratch operand']
  #allocation4 [shape = 'bf16[10,10,128]{2,1,0:T(8,128)(2,1)}', space=vmem, size = 0xa000, scoped, tag = 'scratch operand']
  #allocation6 [shape = 's32[]', space=sflag, size = 0x4, offset = 0, fixed_abs, tag = 'sflag constant byte address 0x0 - dummy sync flag']
  %s0 = inlined_call_operand.vmem [shape: bf16[2,12,2,8,128], index: 0, kind: input, shape index: {}]
  %s1 = inlined_call_operand.vmem [shape: bf16[576,128], index: 1, kind: input, shape index: {}]
  %s2 = inlined_call_operand.vmem [shape: f32[1,128], index: 2, kind: input, shape index: {}]
  %s3 = inlined_call_operand.vmem [shape: bf16[1152,128], index: 3, kind: input, shape index: {}]
  %s4 = inlined_call_operand.vmem [shape: f32[1,128], index: 4, kind: input, shape index: {}]
  %s5 = inlined_call_operand.vmem [shape: bf16[2,8,8,128], index: 5, kind: output, shape index: {}]
  %s6 = sld [smem:[#allocation0]]
  $region88: #{down_forward.1} parent=0
    _
  %s8 = ssub.s32 1, %s6
  %s9 = scalar_select 0, %s8, %s6
  loop: start=0, step=1, limit=4
  $region2: #{down_forward.1} parent=0 // loop_pre_header
    _
  $region3: #{down_forward.1} parent=0 // loop_header
    %s11 = sphi 0, %s15
    %p12 = scmp.ge.s32.totalorder %s11, 4
    %s18 = sphi 0, %s30
    %s19 = sphi 0, %s26
    %s20 = sphi 0, %s18
    %s21 = sphi 0, %s19
    %s22 = sphi 0, %s20
    %s23 = sphi 0, %s21
    %s31 = sphi 0, %s31
    %s33 = sphi 0, %s31
    %s34 = sphi 0, %s33
    %s48 = sphi 0, %s34
    %s52 = sphi 0, %s52
    %s54 = sphi 0, %s52
    %s55 = sphi 0, %s54
    %s69 = sphi 0, %s55
    %s73 = sphi 0, %s73
    %s75 = sphi 0, %s73
    %s76 = sphi 0, %s75
    %s90 = sphi 0, %s76
    %s94 = sphi 0, %s94
    %s96 = sphi 0, %s94
    %s97 = sphi 0, %s96
    %s111 = sphi 0, %s97
    %s119 = sphi 0, %s121
    %s122 = sphi 0, %s119
    %s123 = sphi 0, %s122
    %s139 = sphi 0, %s123
  $region4: #{down_forward.1} parent=0 // loop_header_branch
    %14 = sbr.rel (%p12) target = $region8
  $region5: #{down_forward.1} parent=0 // loop_body
    %s16 = ssub.s32 %s11, 1
    %s17 = ssub.s32 %s11, 2
    %s24 = sadd.s32 1, %s19
    %p25 = scmp.ge.s32.totalorder %s24, 1
    %s26 = scalar_select %p25, 0, %s24
    %s27 = sadd.s32 1, %s18
    %s28 = scalar_select %p25, %s27, %s18
    %p29 = scmp.ge.s32.totalorder %s28, 2
    %s30 = scalar_select %p29, 0, %s28
    %s32 = sadd.s32 %s31, 1
    %p35 = scmp.eq.s32.totalorder %s11, 1
    %p36 = scmp.ne.s32.totalorder %s31, %s33
    %p37 = scmp.eq.s32.totalorder %s11, 0
    %p38 = por %p36, %p37
    %p39 = scmp.ne.s32.totalorder %s31, %s33
    %p40 = scmp.eq.s32.totalorder %s16, 1
    %p41 = por %p39, %p40
    %p42 = scmp.ne.s32.totalorder %s33, %s34
    %p43 = scmp.eq.s32.totalorder %s16, 0
    %p44 = por %p42, %p43
    %p45 = scmp.ne.s32.totalorder %s33, %s34
    %p46 = scmp.eq.s32.totalorder %s17, 1
    %p47 = por %p45, %p46
    %p49 = scmp.ne.s32.totalorder %s34, %s48
    %p50 = scmp.eq.s32.totalorder %s17, 0
    %p51 = por %p49, %p50
    %s53 = sadd.s32 %s52, 1
    %p56 = scmp.eq.s32.totalorder %s11, 1
    %p57 = scmp.ne.s32.totalorder %s52, %s54
    %p58 = scmp.eq.s32.totalorder %s11, 0
    %p59 = por %p57, %p58
    %p60 = scmp.ne.s32.totalorder %s52, %s54
    %p61 = scmp.eq.s32.totalorder %s16, 1
    %p62 = por %p60, %p61
    %p63 = scmp.ne.s32.totalorder %s54, %s55
    %p64 = scmp.eq.s32.totalorder %s16, 0
    %p65 = por %p63, %p64
    %p66 = scmp.ne.s32.totalorder %s54, %s55
    %p67 = scmp.eq.s32.totalorder %s17, 1
    %p68 = por %p66, %p67
    %p70 = scmp.ne.s32.totalorder %s55, %s69
    %p71 = scmp.eq.s32.totalorder %s17, 0
    %p72 = por %p70, %p71
    %s74 = sadd.s32 %s73, 1
    %p77 = scmp.eq.s32.totalorder %s11, 1
    %p78 = scmp.ne.s32.totalorder %s73, %s75
    %p79 = scmp.eq.s32.totalorder %s11, 0
    %p80 = por %p78, %p79
    %p81 = scmp.ne.s32.totalorder %s73, %s75
    %p82 = scmp.eq.s32.totalorder %s16, 1
    %p83 = por %p81, %p82
    %p84 = scmp.ne.s32.totalorder %s75, %s76
    %p85 = scmp.eq.s32.totalorder %s16, 0
    %p86 = por %p84, %p85
    %p87 = scmp.ne.s32.totalorder %s75, %s76
    %p88 = scmp.eq.s32.totalorder %s17, 1
    %p89 = por %p87, %p88
    %p91 = scmp.ne.s32.totalorder %s76, %s90
    %p92 = scmp.eq.s32.totalorder %s17, 0
    %p93 = por %p91, %p92
    %s95 = sadd.s32 %s94, 1
    %p98 = scmp.eq.s32.totalorder %s11, 1
    %p99 = scmp.ne.s32.totalorder %s94, %s96
    %p100 = scmp.eq.s32.totalorder %s11, 0
    %p101 = por %p99, %p100
    %p102 = scmp.ne.s32.totalorder %s94, %s96
    %p103 = scmp.eq.s32.totalorder %s16, 1
    %p104 = por %p102, %p103
    %p105 = scmp.ne.s32.totalorder %s96, %s97
    %p106 = scmp.eq.s32.totalorder %s16, 0
    %p107 = por %p105, %p106
    %p108 = scmp.ne.s32.totalorder %s96, %s97
    %p109 = scmp.eq.s32.totalorder %s17, 1
    %p110 = por %p108, %p109
    %p112 = scmp.ne.s32.totalorder %s97, %s111
    %p113 = scmp.eq.s32.totalorder %s17, 0
    %p114 = por %p112, %p113
    %s115 = ssub.s32 %s18, %s30
    %s116 = ssub.s32 %s19, %s26
    %s117 = sor.u32 %s115, %s116
    %p118 = scmp.eq.s32.totalorder %s117, 0
    %s120 = sadd.s32 %s119, 1
    %s121 = scalar_select %p118, %s119, %s120
    %p124 = pneg %p118
    %p125 = scmp.eq.s32.totalorder %s11, 1
    %p126 = por %p124, %p125
    %p127 = scmp.ne.s32.totalorder %s119, %s122
    %p128 = scmp.eq.s32.totalorder %s11, 0
    %p129 = por %p127, %p128
    %p130 = scmp.ne.s32.totalorder %s119, %s122
    %p131 = scmp.eq.s32.totalorder %s16, 1
    %p132 = por %p130, %p131
    %p133 = scmp.ne.s32.totalorder %s122, %s123
    %p134 = scmp.eq.s32.totalorder %s16, 0
    %p135 = por %p133, %p134
    %p136 = scmp.ne.s32.totalorder %s122, %s123
    %p137 = scmp.eq.s32.totalorder %s17, 1
    %p138 = por %p136, %p137
    %p140 = scmp.ne.s32.totalorder %s123, %s139
    %p141 = scmp.eq.s32.totalorder %s17, 0
    %p142 = por %p140, %p141
    %p143 = scmp.le.s32.totalorder 1, %s11
    %p144 = scmp.lt.s32.totalorder %s11, 3
    %p145 = pnand %p143, %p144
    %p146 = pneg %p145
    // Predicated region
    $region9: #{down_forward.1} parent=5 // pred_check
      _
    $region10: #{down_forward.1} parent=5 // pred_check_branch
      %148 = sbr.rel (%p145) target = $region12
    $region11: #{down_forward.1} parent=5 // pred_region
      %s149 = ssub.s32 %s11, 1
      // Predicated region
      $region13: #{down_forward.1} parent=11 // pred_check
        %p150 = pneg %p44
      $region14: #{down_forward.1} parent=11 // pred_check_branch
        %152 = sbr.rel (%p150) target = $region16
      $region15: #{down_forward.1} parent=11 // pred_region
        _
      $region16: #{down_forward.1} parent=11 // pred_fallthru
        _
      // Predicated region
      $region17: #{down_forward.1} parent=11 // pred_check
        %p153 = pneg %p65
      $region18: #{down_forward.1} parent=11 // pred_check_branch
        %155 = sbr.rel (%p153) target = $region20
      $region19: #{down_forward.1} parent=11 // pred_region
        _
      $region20: #{down_forward.1} parent=11 // pred_fallthru
        _
      // Predicated region
      $region21: #{down_forward.1} parent=11 // pred_check
        %p156 = pneg %p86
      $region22: #{down_forward.1} parent=11 // pred_check_branch
        %158 = sbr.rel (%p156) target = $region24
      $region23: #{down_forward.1} parent=11 // pred_region
        _
      $region24: #{down_forward.1} parent=11 // pred_fallthru
        _
      // Predicated region
      $region25: #{down_forward.1} parent=11 // pred_check
        %p159 = pneg %p107
      $region26: #{down_forward.1} parent=11 // pred_check_branch
        %161 = sbr.rel (%p159) target = $region28
      $region27: #{down_forward.1} parent=11 // pred_region
        _
      $region28: #{down_forward.1} parent=11 // pred_fallthru
        _
    $region12: #{down_forward.1} parent=5 // pred_fallthru
      _
    %p162 = scmp.lt.s32.totalorder %s11, 2
    // Predicated region
    $region29: #{down_forward.1} parent=5 // pred_check
      %p163 = pneg %p162
    $region30: #{down_forward.1} parent=5 // pred_check_branch
      %165 = sbr.rel (%p163) target = $region32
    $region31: #{down_forward.1} parent=5 // pred_region
      _
    $region32: #{down_forward.1} parent=5 // pred_fallthru
      _
    %p166 = scmp.le.s32.totalorder 1, %s11
    %p167 = scmp.lt.s32.totalorder %s11, 3
    %p168 = pnand %p166, %p167
    %p169 = pneg %p168
    // Predicated region
    $region33: #{down_forward.1} parent=5 // pred_check
      _
    $region34: #{down_forward.1} parent=5 // pred_check_branch
      %171 = sbr.rel (%p168) target = $region36
    $region35: #{down_forward.1} parent=5 // pred_region
      %s172 = ssub.s32 %s11, 1
      %p173 = pneg %p44
      %p174 = pneg %p41
      %p175 = pneg %p65
      %p176 = pneg %p62
      %p177 = pneg %p86
      %p178 = pneg %p83
      %p179 = pneg %p107
      %p180 = pneg %p104
      %p181 = pneg %p135
      %p182 = pneg %p132
      %s183 = smul.u32 8, %s21
      %p184 = scmp.lt.s32.totalorder %s20, 1
      %s185 = scalar_select %p184, %s20, 1
      %p186 = scmp.lt.s32.totalorder %s183, 7
      %s187 = scalar_select %p186, %s183, 7
      %s188 = smul.addr %s185, 8
      %s189 = sadd.s32 %s187, %s188
      %s190 = smul.addr %s189, 4
      %s191 = scalar_lea.vmem %s5, %s190
      %s192 = smul.u32 8, %s21
      %p193 = scmp.lt.s32.totalorder %s20, 1
      %s194 = scalar_select %p193, %s20, 1
      %p195 = scmp.lt.s32.totalorder %s192, 7
      %s196 = scalar_select %p195, %s192, 7
      %s197 = smul.addr %s194, 8
      %s198 = sadd.s32 %s196, %s197
      %s199 = smul.addr %s198, 4
      %s200 = scalar_lea.vmem %s5, %s199
      %s201 = smul.u32 8, %s21
      %s203 = smul.u32 %s21, 8
      $region37: #{down_forward.1} parent=35
        #allocation5 [shape = 's32[1]{0}', space=sflag, size = 0x4, scoped, tag = 'scoped memory for down_forward.1']
        %s204 = smul.u32 %s203, 2
        %s205 = smul.u32 %s20, 24
        %s206 = sadd.s32 %s204, %s205
        %s207 = smul.addr %s206, 4
        %s208 = scalar_lea.vmem %s0, %s207
        %p210 = scmp.lt.u32.totalorder 96, 8
        %p211 = pneg %p210
        // Predicated region
        $region38: #{down_forward.1} parent=37 // pred_check
          _
        $region39: #{down_forward.1} parent=37 // pred_check_branch
          %213 = sbr.rel (%p210) target = $region41
        $region40: #{down_forward.1} parent=37 // pred_region
          %s228 = sand.u32 96, 7
          %p229 = scmp.eq.s32.totalorder %s228, 0
          // Predicated region
          $region53: #{down_forward.1} parent=40 // pred_check
            %p230 = pneg %p229
          $region54: #{down_forward.1} parent=40 // pred_check_branch
            %232 = sbr.rel (%p230) target = $region56
          $region55: #{down_forward.1} parent=40 // pred_region
            loop: start=0, step=1, limit=1
            $region57: #{down_forward.1} parent=55 // loop_pre_header
              _
            $region58: #{down_forward.1} parent=55 // loop_header
              %s234 = sphi 0, %s238
              %p235 = scmp.ge.s32.totalorder %s234, 1
              %s239 = sphi %s208, %s208
              %s240 = sphi [#allocation2], [#allocation2]
            $region59: #{down_forward.1} parent=55 // loop_header_branch
              %237 = sbr.rel (%p235) target = $region63
            $region60: #{down_forward.1} parent=55 // loop_body
              %v241 = vld [vmem:[%s239] sm:$0xff]
              %242 = vst [vmem:[%s240] sm:$0xff] %v241
              %v243 = vld [vmem:[%s239 + $0x8] sm:$0xff]
              %244 = vst [vmem:[%s240 + $0x8] sm:$0xff] %v243
              %v245 = vld [vmem:[%s239 + $0x10] sm:$0xff]
              %246 = vst [vmem:[%s240 + $0x10] sm:$0xff] %v245
              %v247 = vld [vmem:[%s239 + $0x18] sm:$0xff]
              %248 = vst [vmem:[%s240 + $0x18] sm:$0xff] %v247
              %v249 = vld [vmem:[%s239 + $0x20] sm:$0xff]
              %250 = vst [vmem:[%s240 + $0x20] sm:$0xff] %v249
              %v251 = vld [vmem:[%s239 + $0x28] sm:$0xff]
              %252 = vst [vmem:[%s240 + $0x28] sm:$0xff] %v251
              %v253 = vld [vmem:[%s239 + $0x30] sm:$0xff]
              %254 = vst [vmem:[%s240 + $0x30] sm:$0xff] %v253
              %v255 = vld [vmem:[%s239 + $0x38] sm:$0xff]
              %256 = vst [vmem:[%s240 + $0x38] sm:$0xff] %v255
              %v257 = vld [vmem:[%s239 + $0x40] sm:$0xff]
              %258 = vst [vmem:[%s240 + $0x40] sm:$0xff] %v257
              %v259 = vld [vmem:[%s239 + $0x48] sm:$0xff]
              %260 = vst [vmem:[%s240 + $0x48] sm:$0xff] %v259
              %v261 = vld [vmem:[%s239 + $0x50] sm:$0xff]
              %262 = vst [vmem:[%s240 + $0x50] sm:$0xff] %v261
              %v263 = vld [vmem:[%s239 + $0x58] sm:$0xff]
              %264 = vst [vmem:[%s240 + $0x58] sm:$0xff] %v263
            $region61: #{down_forward.1} parent=55 // loop_footer
              %s238 = sadd.s32 1, %s234
            $region62: #{down_forward.1} parent=55 // loop_footer_branch
              %233 = sbr.rel target = $region58
            $region63: #{down_forward.1} parent=55 // loop_exit
              _
          $region56: #{down_forward.1} parent=40 // pred_fallthru
            _
          %p265 = pneg %p229
          // Predicated region
          $region64: #{down_forward.1} parent=40 // pred_check
            _
          $region65: #{down_forward.1} parent=40 // pred_check_branch
            %267 = sbr.rel (%p229) target = $region67
          $region66: #{down_forward.1} parent=40 // pred_region
            %s268 = sand.u32 96, 7
          $region67: #{down_forward.1} parent=40 // pred_fallthru
            _
        $region41: #{down_forward.1} parent=37 // pred_fallthru
          _
        // Predicated region
        $region42: #{down_forward.1} parent=37 // pred_check
          %p214 = pneg %p210
        $region43: #{down_forward.1} parent=37 // pred_check_branch
          %216 = sbr.rel (%p214) target = $region45
        $region44: #{down_forward.1} parent=37 // pred_region
          %s217 = sshllo.u32 0, 96
          loop: start=0, step=1, limit=1
          $region46: #{down_forward.1} parent=44 // loop_pre_header
            _
          $region47: #{down_forward.1} parent=44 // loop_header
            %s219 = sphi 0, %s223
            %p220 = scmp.ge.s32.totalorder %s219, 1
            %s224 = sphi %s208, %s208
            %s225 = sphi [#allocation2], [#allocation2]
          $region48: #{down_forward.1} parent=44 // loop_header_branch
            %222 = sbr.rel (%p220) target = $region52
          $region49: #{down_forward.1} parent=44 // loop_body
            %v226 = vld [vmem:[%s224] sm:%s217]
            %227 = vst [vmem:[%s225] sm:%s217] %v226
          $region50: #{down_forward.1} parent=44 // loop_footer
            %s223 = sadd.s32 1, %s219
          $region51: #{down_forward.1} parent=44 // loop_footer_branch
            %218 = sbr.rel target = $region47
          $region52: #{down_forward.1} parent=44 // loop_exit
            _
        $region45: #{down_forward.1} parent=37 // pred_fallthru
          _
        // Predicated region
        $region68: #{down_forward.1} parent=37 // pred_check
          _
        $region69: #{down_forward.1} parent=37 // pred_check_branch
          %271 = sbr.rel (0) target = $region71
        $region70: #{down_forward.1} parent=37 // pred_region
          %272 = vsyncadd [#allocation5], 1536
        $region71: #{down_forward.1} parent=37 // pred_fallthru
          _
        %s273 = smul.u32 4, 12
        %s274 = smul.u32 %s273, 2
        %s275 = smul.u32 %s274, 1
        %s276 = smul.u32 %s275, 1
        %s277 = sshll.u32 %s276, 4
        %278 = dma.done [#allocation5], %s277
      %v279 = vld [vmem:[#allocation2] sm:$0xf]
      %v280 = vld [vmem:[#allocation2 + $0x4] sm:$0xf]
      %v281 = vld [vmem:[#allocation2 + $0x8] sm:$0xf]
      %v282 = vld [vmem:[#allocation2 + $0xc] sm:$0xf]
      %v283 = vld [vmem:[#allocation2 + $0x10] sm:$0xf]
      %v284 = vld [vmem:[#allocation2 + $0x14] sm:$0xf]
      %v285 = vld [vmem:[#allocation2 + $0x18] sm:$0xf]
      %v286 = vld [vmem:[#allocation2 + $0x1c] sm:$0xf]
      %v287 = vld [vmem:[#allocation2 + $0x20] sm:$0xf]
      %v288 = vld [vmem:[#allocation2 + $0x24] sm:$0xf]
      %v289 = vld [vmem:[#allocation2 + $0x28] sm:$0xf]
      %v290 = vld [vmem:[#allocation2 + $0x2c] sm:$0xf]
      %v291 = vld [vmem:[#allocation2 + $0x30] sm:$0xf]
      %v292 = vld [vmem:[#allocation2 + $0x34] sm:$0xf]
      %v293 = vld [vmem:[#allocation2 + $0x38] sm:$0xf]
      %v294 = vld [vmem:[#allocation2 + $0x3c] sm:$0xf]
      %v295 = vld [vmem:[#allocation2 + $0x40] sm:$0xf]
      %v296 = vld [vmem:[#allocation2 + $0x44] sm:$0xf]
      %v297 = vld [vmem:[#allocation2 + $0x48] sm:$0xf]
      %v298 = vld [vmem:[#allocation2 + $0x4c] sm:$0xf]
      %v299 = vld [vmem:[#allocation2 + $0x50] sm:$0xf]
      %v300 = vld [vmem:[#allocation2 + $0x54] sm:$0xf]
      %v301 = vld [vmem:[#allocation2 + $0x58] sm:$0xf]
      %v302 = vld [vmem:[#allocation2 + $0x5c] sm:$0xf]
      %v303 = vmax.bf16 %v279, %v280
      %v304 = vmax.bf16 %v281, %v282
      %v305 = vmax.bf16 %v283, %v284
      %v306 = vmax.bf16 %v285, %v286
      %v307 = vmax.bf16 %v287, %v288
      %v308 = vmax.bf16 %v289, %v290
      %v309 = vmax.bf16 %v291, %v292
      %v310 = vmax.bf16 %v293, %v294
      %v311 = vmax.bf16 %v295, %v296
      %v312 = vmax.bf16 %v297, %v298
      %v313 = vmax.bf16 %v299, %v300
      %v314 = vmax.bf16 %v301, %v302
      %327 = vrot.lane.b32.xlu0 %v303, 64
      %v328 = vpop.permute.xlu0 %327
      %329 = vrot.lane.b32.xlu0 %v304, 64
      %v330 = vpop.permute.xlu0 %329
      %331 = vrot.lane.b32.xlu0 %v305, 64
      %v332 = vpop.permute.xlu0 %331
      %333 = vrot.lane.b32.xlu0 %v306, 64
      %v334 = vpop.permute.xlu0 %333
      %335 = vrot.lane.b32.xlu0 %v307, 64
      %v336 = vpop.permute.xlu0 %335
      %337 = vrot.lane.b32.xlu0 %v308, 64
      %v338 = vpop.permute.xlu0 %337
      %339 = vrot.lane.b32.xlu0 %v309, 64
      %v340 = vpop.permute.xlu0 %339
      %341 = vrot.lane.b32.xlu0 %v310, 64
      %v342 = vpop.permute.xlu0 %341
      %343 = vrot.lane.b32.xlu0 %v311, 64
      %v344 = vpop.permute.xlu0 %343
      %345 = vrot.lane.b32.xlu0 %v312, 64
      %v346 = vpop.permute.xlu0 %345
      %347 = vrot.lane.b32.xlu0 %v313, 64
      %v348 = vpop.permute.xlu0 %347
      %349 = vrot.lane.b32.xlu0 %v314, 64
      %v350 = vpop.permute.xlu0 %349
      %v363 = vmax.bf16 %v303, %v328
      %v364 = vmax.bf16 %v304, %v330
      %v365 = vmax.bf16 %v305, %v332
      %v366 = vmax.bf16 %v306, %v334
      %v367 = vmax.bf16 %v307, %v336
      %v368 = vmax.bf16 %v308, %v338
      %v369 = vmax.bf16 %v309, %v340
      %v370 = vmax.bf16 %v310, %v342
      %v371 = vmax.bf16 %v311, %v344
      %v372 = vmax.bf16 %v312, %v346
      %v373 = vmax.bf16 %v313, %v348
      %v374 = vmax.bf16 %v314, %v350
      %v376 = vshrl.u32 %v363, 16
      %v378 = vrot.slane %v376, 7
      %v379 = vshll.u32 %v363, 16
      %v381 = vor.u32 %v378, %v379
      %v382 = vrot.slane %v378, 4
      %v384 = vshrl.u32 %v364, 16
      %v386 = vrot.slane %v384, 7
      %v387 = vshll.u32 %v364, 16
      %v389 = vor.u32 %v386, %v387
      %v390 = vrot.slane %v386, 4
      %v392 = vshrl.u32 %v365, 16
      %v394 = vrot.slane %v392, 7
      %v395 = vshll.u32 %v365, 16
      %v397 = vor.u32 %v394, %v395
      %v398 = vrot.slane %v394, 4
      %v400 = vshrl.u32 %v366, 16
      %v402 = vrot.slane %v400, 7
      %v403 = vshll.u32 %v366, 16
      %v405 = vor.u32 %v402, %v403
      %v406 = vrot.slane %v402, 4
      %v408 = vshrl.u32 %v367, 16
      %v410 = vrot.slane %v408, 7
      %v411 = vshll.u32 %v367, 16
      %v413 = vor.u32 %v410, %v411
      %v414 = vrot.slane %v410, 4
      %v416 = vshrl.u32 %v368, 16
      %v418 = vrot.slane %v416, 7
      %v419 = vshll.u32 %v368, 16
      %v421 = vor.u32 %v418, %v419
      %v422 = vrot.slane %v418, 4
      %v424 = vshrl.u32 %v369, 16
      %v426 = vrot.slane %v424, 7
      %v427 = vshll.u32 %v369, 16
      %v429 = vor.u32 %v426, %v427
      %v430 = vrot.slane %v426, 4
      %v432 = vshrl.u32 %v370, 16
      %v434 = vrot.slane %v432, 7
      %v435 = vshll.u32 %v370, 16
      %v437 = vor.u32 %v434, %v435
      %v438 = vrot.slane %v434, 4
      %v440 = vshrl.u32 %v371, 16
      %v442 = vrot.slane %v440, 7
      %v443 = vshll.u32 %v371, 16
      %v445 = vor.u32 %v442, %v443
      %v446 = vrot.slane %v442, 4
      %v448 = vshrl.u32 %v372, 16
      %v450 = vrot.slane %v448, 7
      %v451 = vshll.u32 %v372, 16
      %v453 = vor.u32 %v450, %v451
      %v454 = vrot.slane %v450, 4
      %v456 = vshrl.u32 %v373, 16
      %v458 = vrot.slane %v456, 7
      %v459 = vshll.u32 %v373, 16
      %v461 = vor.u32 %v458, %v459
      %v462 = vrot.slane %v458, 4
      %v464 = vshrl.u32 %v374, 16
      %v466 = vrot.slane %v464, 7
      %v467 = vshll.u32 %v374, 16
      %v469 = vor.u32 %v466, %v467
      %v470 = vrot.slane %v466, 4
      %vm495 = vcmask 519168
      %vm496 = vsmask.f32 7938
      %vm497 = vmand %vm495, %vm496
      %v498 = vld [vmem:[#allocation3] sm:$0xf]
      %v499 = vsel %vm497, %v381, %v498
      %500 = vst [vmem:[#allocation3] sm:$0xf] %v499
      %vm501 = vcmask 516096
      %vm502 = vsmask.f32 256
      %vm503 = vmand %vm501, %vm502
      %v504 = vld [vmem:[#allocation3 + $0x4] sm:$0x1]
      %v505 = vsel %vm503, %v382, %v504
      %506 = vst [vmem:[#allocation3 + $0x4] sm:$0x1] %v505
      %v507 = vld [vmem:[#allocation3 + $0x8] sm:$0xf]
      %v508 = vsel %vm497, %v389, %v507
      %509 = vst [vmem:[#allocation3 + $0x8] sm:$0xf] %v508
      %v510 = vld [vmem:[#allocation3 + $0xc] sm:$0x1]
      %v511 = vsel %vm503, %v390, %v510
      %512 = vst [vmem:[#allocation3 + $0xc] sm:$0x1] %v511
      %v513 = vld [vmem:[#allocation3 + $0x10] sm:$0xf]
      %v514 = vsel %vm497, %v397, %v513
      %515 = vst [vmem:[#allocation3 + $0x10] sm:$0xf] %v514
      %v516 = vld [vmem:[#allocation3 + $0x14] sm:$0x1]
      %v517 = vsel %vm503, %v398, %v516
      %518 = vst [vmem:[#allocation3 + $0x14] sm:$0x1] %v517
      %v519 = vld [vmem:[#allocation3 + $0x18] sm:$0xf]
      %v520 = vsel %vm497, %v405, %v519
      %521 = vst [vmem:[#allocation3 + $0x18] sm:$0xf] %v520
      %v522 = vld [vmem:[#allocation3 + $0x1c] sm:$0x1]
      %v523 = vsel %vm503, %v406, %v522
      %524 = vst [vmem:[#allocation3 + $0x1c] sm:$0x1] %v523
      %v525 = vld [vmem:[#allocation3 + $0x20] sm:$0xf]
      %v526 = vsel %vm497, %v413, %v525
      %527 = vst [vmem:[#allocation3 + $0x20] sm:$0xf] %v526
      %v528 = vld [vmem:[#allocation3 + $0x24] sm:$0x1]
      %v529 = vsel %vm503, %v414, %v528
      %530 = vst [vmem:[#allocation3 + $0x24] sm:$0x1] %v529
      %v531 = vld [vmem:[#allocation3 + $0x28] sm:$0xf]
      %v532 = vsel %vm497, %v421, %v531
      %533 = vst [vmem:[#allocation3 + $0x28] sm:$0xf] %v532
      %v534 = vld [vmem:[#allocation3 + $0x2c] sm:$0x1]
      %v535 = vsel %vm503, %v422, %v534
      %536 = vst [vmem:[#allocation3 + $0x2c] sm:$0x1] %v535
      %v537 = vld [vmem:[#allocation3 + $0x30] sm:$0xf]
      %v538 = vsel %vm497, %v429, %v537
      %539 = vst [vmem:[#allocation3 + $0x30] sm:$0xf] %v538
      %v540 = vld [vmem:[#allocation3 + $0x34] sm:$0x1]
      %v541 = vsel %vm503, %v430, %v540
      %542 = vst [vmem:[#allocation3 + $0x34] sm:$0x1] %v541
      %v543 = vld [vmem:[#allocation3 + $0x38] sm:$0xf]
      %v544 = vsel %vm497, %v437, %v543
      %545 = vst [vmem:[#allocation3 + $0x38] sm:$0xf] %v544
      %v546 = vld [vmem:[#allocation3 + $0x3c] sm:$0x1]
      %v547 = vsel %vm503, %v438, %v546
      %548 = vst [vmem:[#allocation3 + $0x3c] sm:$0x1] %v547
      %v549 = vld [vmem:[#allocation3 + $0x40] sm:$0xf]
      %v550 = vsel %vm497, %v445, %v549
      %551 = vst [vmem:[#allocation3 + $0x40] sm:$0xf] %v550
      %v552 = vld [vmem:[#allocation3 + $0x44] sm:$0x1]
      %v553 = vsel %vm503, %v446, %v552
      %554 = vst [vmem:[#allocation3 + $0x44] sm:$0x1] %v553
      %v555 = vld [vmem:[#allocation3 + $0x48] sm:$0xf]
      %v556 = vsel %vm497, %v453, %v555
      %557 = vst [vmem:[#allocation3 + $0x48] sm:$0xf] %v556
      %v558 = vld [vmem:[#allocation3 + $0x4c] sm:$0x1]
      %v559 = vsel %vm503, %v454, %v558
      %560 = vst [vmem:[#allocation3 + $0x4c] sm:$0x1] %v559
      %v561 = vld [vmem:[#allocation3 + $0x50] sm:$0xf]
      %v562 = vsel %vm497, %v461, %v561
      %563 = vst [vmem:[#allocation3 + $0x50] sm:$0xf] %v562
      %v564 = vld [vmem:[#allocation3 + $0x54] sm:$0x1]
      %v565 = vsel %vm503, %v462, %v564
      %566 = vst [vmem:[#allocation3 + $0x54] sm:$0x1] %v565
      %v567 = vld [vmem:[#allocation3 + $0x58] sm:$0xf]
      %v568 = vsel %vm497, %v469, %v567
      %569 = vst [vmem:[#allocation3 + $0x58] sm:$0xf] %v568
      %v570 = vld [vmem:[#allocation3 + $0x5c] sm:$0x1]
      %v571 = vsel %vm503, %v470, %v570
      %572 = vst [vmem:[#allocation3 + $0x5c] sm:$0x1] %v571
      %v573 = vld [vmem:[#allocation3] sm:$0x1]
      %v574 = vsel %vm503, 0, %v573
      %575 = vst [vmem:[#allocation3] sm:$0x1] %v574
      %v576 = vld [vmem:[#allocation3 + $0x8] sm:$0x1]
      %v577 = vsel %vm503, 0, %v576
      %578 = vst [vmem:[#allocation3 + $0x8] sm:$0x1] %v577
      %v579 = vld [vmem:[#allocation3 + $0x10] sm:$0x1]
      %v580 = vsel %vm503, 0, %v579
      %581 = vst [vmem:[#allocation3 + $0x10] sm:$0x1] %v580
      %v582 = vld [vmem:[#allocation3 + $0x18] sm:$0x1]
      %v583 = vsel %vm503, 0, %v582
      %584 = vst [vmem:[#allocation3 + $0x18] sm:$0x1] %v583
      %v585 = vld [vmem:[#allocation3 + $0x20] sm:$0x1]
      %v586 = vsel %vm503, 0, %v585
      %587 = vst [vmem:[#allocation3 + $0x20] sm:$0x1] %v586
      %v588 = vld [vmem:[#allocation3 + $0x28] sm:$0x1]
      %v589 = vsel %vm503, 0, %v588
      %590 = vst [vmem:[#allocation3 + $0x28] sm:$0x1] %v589
      %v591 = vld [vmem:[#allocation3 + $0x30] sm:$0x1]
      %v592 = vsel %vm503, 0, %v591
      %593 = vst [vmem:[#allocation3 + $0x30] sm:$0x1] %v592
      %v594 = vld [vmem:[#allocation3 + $0x38] sm:$0x1]
      %v595 = vsel %vm503, 0, %v594
      %596 = vst [vmem:[#allocation3 + $0x38] sm:$0x1] %v595
      %v597 = vld [vmem:[#allocation3 + $0x40] sm:$0x1]
      %v598 = vsel %vm503, 0, %v597
      %599 = vst [vmem:[#allocation3 + $0x40] sm:$0x1] %v598
      %v600 = vld [vmem:[#allocation3 + $0x48] sm:$0x1]
      %v601 = vsel %vm503, 0, %v600
      %602 = vst [vmem:[#allocation3 + $0x48] sm:$0x1] %v601
      %v603 = vld [vmem:[#allocation3 + $0x50] sm:$0x1]
      %v604 = vsel %vm503, 0, %v603
      %605 = vst [vmem:[#allocation3 + $0x50] sm:$0x1] %v604
      %v606 = vld [vmem:[#allocation3 + $0x58] sm:$0x1]
      %v607 = vsel %vm503, 0, %v606
      %608 = vst [vmem:[#allocation3 + $0x58] sm:$0x1] %v607
      %vm609 = vmand %vm501, %vm496
      %v610 = vld [vmem:[#allocation3 + $0x4] sm:$0x1]
      %v611 = vsel %vm609, 0, %v610
      %612 = vst [vmem:[#allocation3 + $0x4] sm:$0x1] %v611
      %v613 = vld [vmem:[#allocation3 + $0xc] sm:$0x1]
      %v614 = vsel %vm609, 0, %v613
      %615 = vst [vmem:[#allocation3 + $0xc] sm:$0x1] %v614
      %v616 = vld [vmem:[#allocation3 + $0x14] sm:$0x1]
      %v617 = vsel %vm609, 0, %v616
      %618 = vst [vmem:[#allocation3 + $0x14] sm:$0x1] %v617
      %v619 = vld [vmem:[#allocation3 + $0x1c] sm:$0x1]
      %v620 = vsel %vm609, 0, %v619
      %621 = vst [vmem:[#allocation3 + $0x1c] sm:$0x1] %v620
      %v622 = vld [vmem:[#allocation3 + $0x24] sm:$0x1]
      %v623 = vsel %vm609, 0, %v622
      %624 = vst [vmem:[#allocation3 + $0x24] sm:$0x1] %v623
      %v625 = vld [vmem:[#allocation3 + $0x2c] sm:$0x1]
      %v626 = vsel %vm609, 0, %v625
      %627 = vst [vmem:[#allocation3 + $0x2c] sm:$0x1] %v626
      %v628 = vld [vmem:[#allocation3 + $0x34] sm:$0x1]
      %v629 = vsel %vm609, 0, %v628
      %630 = vst [vmem:[#allocation3 + $0x34] sm:$0x1] %v629
      %v631 = vld [vmem:[#allocation3 + $0x3c] sm:$0x1]
      %v632 = vsel %vm609, 0, %v631
      %633 = vst [vmem:[#allocation3 + $0x3c] sm:$0x1] %v632
      %v634 = vld [vmem:[#allocation3 + $0x44] sm:$0x1]
      %v635 = vsel %vm609, 0, %v634
      %636 = vst [vmem:[#allocation3 + $0x44] sm:$0x1] %v635
      %v637 = vld [vmem:[#allocation3 + $0x4c] sm:$0x1]
      %v638 = vsel %vm609, 0, %v637
      %639 = vst [vmem:[#allocation3 + $0x4c] sm:$0x1] %v638
      %v640 = vld [vmem:[#allocation3 + $0x54] sm:$0x1]
      %v641 = vsel %vm609, 0, %v640
      %642 = vst [vmem:[#allocation3 + $0x54] sm:$0x1] %v641
      %v643 = vld [vmem:[#allocation3 + $0x5c] sm:$0x1]
      %v644 = vsel %vm609, 0, %v643
      %645 = vst [vmem:[#allocation3 + $0x5c] sm:$0x1] %v644
      %v646 = vld [vmem:[#allocation3] sm:$0xf]
      %v647 = vld [vmem:[#allocation3 + $0x8] sm:$0xf]
      %v648 = vld [vmem:[#allocation3 + $0x10] sm:$0xf]
      %v649 = vld [vmem:[#allocation3 + $0x18] sm:$0xf]
      %v650 = vld [vmem:[#allocation3 + $0x20] sm:$0xf]
      %v651 = vld [vmem:[#allocation3 + $0x28] sm:$0xf]
      %v652 = vld [vmem:[#allocation3 + $0x30] sm:$0xf]
      %v653 = vld [vmem:[#allocation3 + $0x38] sm:$0xf]
      %v654 = vld [vmem:[#allocation3 + $0x40] sm:$0xf]
      %v655 = vld [vmem:[#allocation3 + $0x48] sm:$0xf]
      %v656 = vld [vmem:[#allocation3 + $0x4] sm:$0x1]
      %v657 = vld [vmem:[#allocation3 + $0xc] sm:$0x1]
      %v658 = vld [vmem:[#allocation3 + $0x14] sm:$0x1]
      %v659 = vld [vmem:[#allocation3 + $0x1c] sm:$0x1]
      %v660 = vld [vmem:[#allocation3 + $0x24] sm:$0x1]
      %v661 = vld [vmem:[#allocation3 + $0x2c] sm:$0x1]
      %v662 = vld [vmem:[#allocation3 + $0x34] sm:$0x1]
      %v663 = vld [vmem:[#allocation3 + $0x3c] sm:$0x1]
      %v664 = vld [vmem:[#allocation3 + $0x44] sm:$0x1]
      %v665 = vld [vmem:[#allocation3 + $0x4c] sm:$0x1]
      %v666 = vld [vmem:[#allocation3] sm:$0xe]
      %v667 = vld [vmem:[#allocation3 + $0x8] sm:$0xe]
      %v668 = vld [vmem:[#allocation3 + $0x10] sm:$0xe]
      %v669 = vld [vmem:[#allocation3 + $0x18] sm:$0xe]
      %v670 = vld [vmem:[#allocation3 + $0x20] sm:$0xe]
      %v671 = vld [vmem:[#allocation3 + $0x28] sm:$0xe]
      %v672 = vld [vmem:[#allocation3 + $0x30] sm:$0xe]
      %v673 = vld [vmem:[#allocation3 + $0x38] sm:$0xe]
      %v674 = vld [vmem:[#allocation3 + $0x40] sm:$0xe]
      %v675 = vld [vmem:[#allocation3 + $0x48] sm:$0xe]
      %v696 = vunpack.c.l.b16 %v646
      %v697 = vunpack.c.l.b16 %v656
      %v698 = vunpack.c.l.b16 %v647
      %v699 = vunpack.c.l.b16 %v657
      %v700 = vunpack.c.l.b16 %v648
      %v701 = vunpack.c.l.b16 %v658
      %v702 = vunpack.c.l.b16 %v649
      %v703 = vunpack.c.l.b16 %v659
      %v704 = vunpack.c.l.b16 %v650
      %v705 = vunpack.c.l.b16 %v660
      %v706 = vunpack.c.l.b16 %v651
      %v707 = vunpack.c.l.b16 %v661
      %v708 = vunpack.c.l.b16 %v652
      %v709 = vunpack.c.l.b16 %v662
      %v710 = vunpack.c.l.b16 %v653
      %v711 = vunpack.c.l.b16 %v663
      %v712 = vunpack.c.l.b16 %v654
      %v713 = vunpack.c.l.b16 %v664
      %v714 = vunpack.c.l.b16 %v655
      %v715 = vunpack.c.l.b16 %v665
      %v716 = vpack.c.b16 %v697, %v696
      %v717 = vpack.c.b16 %v699, %v698
      %v718 = vpack.c.b16 %v701, %v700
      %v719 = vpack.c.b16 %v703, %v702
      %v720 = vpack.c.b16 %v705, %v704
      %v721 = vpack.c.b16 %v707, %v706
      %v722 = vpack.c.b16 %v709, %v708
      %v723 = vpack.c.b16 %v711, %v710
      %v724 = vpack.c.b16 %v713, %v712
      %v725 = vpack.c.b16 %v715, %v714
      %v727 = vshrl.u32 %v716, 16
      %v729 = vshll.u32 %v716, 16
      %v731 = vrot.slane %v729, 1
      %v732 = vor.u32 %v727, %v731
      %v734 = vshrl.u32 %v717, 16
      %v736 = vshll.u32 %v717, 16
      %v738 = vrot.slane %v736, 1
      %v739 = vor.u32 %v734, %v738
      %v741 = vshrl.u32 %v718, 16
      %v743 = vshll.u32 %v718, 16
      %v745 = vrot.slane %v743, 1
      %v746 = vor.u32 %v741, %v745
      %v748 = vshrl.u32 %v719, 16
      %v750 = vshll.u32 %v719, 16
      %v752 = vrot.slane %v750, 1
      %v753 = vor.u32 %v748, %v752
      %v755 = vshrl.u32 %v720, 16
      %v757 = vshll.u32 %v720, 16
      %v759 = vrot.slane %v757, 1
      %v760 = vor.u32 %v755, %v759
      %v762 = vshrl.u32 %v721, 16
      %v764 = vshll.u32 %v721, 16
      %v766 = vrot.slane %v764, 1
      %v767 = vor.u32 %v762, %v766
      %v769 = vshrl.u32 %v722, 16
      %v771 = vshll.u32 %v722, 16
      %v773 = vrot.slane %v771, 1
      %v774 = vor.u32 %v769, %v773
      %v776 = vshrl.u32 %v723, 16
      %v778 = vshll.u32 %v723, 16
      %v780 = vrot.slane %v778, 1
      %v781 = vor.u32 %v776, %v780
      %v783 = vshrl.u32 %v724, 16
      %v785 = vshll.u32 %v724, 16
      %v787 = vrot.slane %v785, 1
      %v788 = vor.u32 %v783, %v787
      %v790 = vshrl.u32 %v725, 16
      %v792 = vshll.u32 %v725, 16
      %v794 = vrot.slane %v792, 1
      %v795 = vor.u32 %v790, %v794
      %796 = vrot.lane.b32.xlu0 %v732, 64
      %v797 = vpop.permute.xlu0 %796
      %798 = vrot.lane.b32.xlu0 %v739, 64
      %v799 = vpop.permute.xlu0 %798
      %800 = vrot.lane.b32.xlu0 %v746, 64
      %v801 = vpop.permute.xlu0 %800
      %802 = vrot.lane.b32.xlu0 %v753, 64
      %v803 = vpop.permute.xlu0 %802
      %804 = vrot.lane.b32.xlu0 %v760, 64
      %v805 = vpop.permute.xlu0 %804
      %806 = vrot.lane.b32.xlu0 %v767, 64
      %v807 = vpop.permute.xlu0 %806
      %808 = vrot.lane.b32.xlu0 %v774, 64
      %v809 = vpop.permute.xlu0 %808
      %810 = vrot.lane.b32.xlu0 %v781, 64
      %v811 = vpop.permute.xlu0 %810
      %812 = vrot.lane.b32.xlu0 %v788, 64
      %v813 = vpop.permute.xlu0 %812
      %814 = vrot.lane.b32.xlu0 %v795, 64
      %v815 = vpop.permute.xlu0 %814
      %v826 = vunpack.c.l.b16 %v666
      %v827 = vunpack.c.l.b16 %v667
      %v828 = vunpack.c.l.b16 %v668
      %v829 = vunpack.c.l.b16 %v669
      %v830 = vunpack.c.l.b16 %v670
      %v831 = vunpack.c.l.b16 %v671
      %v832 = vunpack.c.l.b16 %v672
      %v833 = vunpack.c.l.b16 %v673
      %v834 = vunpack.c.l.b16 %v674
      %v835 = vunpack.c.l.b16 %v675
      %v836 = vpack.c.b16 %v697, %v826
      %v837 = vpack.c.b16 %v699, %v827
      %v838 = vpack.c.b16 %v701, %v828
      %v839 = vpack.c.b16 %v703, %v829
      %v840 = vpack.c.b16 %v705, %v830
      %v841 = vpack.c.b16 %v707, %v831
      %v842 = vpack.c.b16 %v709, %v832
      %v843 = vpack.c.b16 %v711, %v833
      %v844 = vpack.c.b16 %v713, %v834
      %v845 = vpack.c.b16 %v715, %v835
      %v846 = vrot.slane %v836, 1
      %v847 = vrot.slane %v837, 1
      %v848 = vrot.slane %v838, 1
      %v849 = vrot.slane %v839, 1
      %v850 = vrot.slane %v840, 1
      %v851 = vrot.slane %v841, 1
      %v852 = vrot.slane %v842, 1
      %v853 = vrot.slane %v843, 1
      %v854 = vrot.slane %v844, 1
      %v855 = vrot.slane %v845, 1
      %vm856 = vcmask 523264
      %v859 = vsel %vm856, %v646, %v797
      %v862 = vsel %vm856, %v647, %v799
      %v865 = vsel %vm856, %v648, %v801
      %v868 = vsel %vm856, %v649, %v803
      %v871 = vsel %vm856, %v650, %v805
      %v874 = vsel %vm856, %v651, %v807
      %v877 = vsel %vm856, %v652, %v809
      %v880 = vsel %vm856, %v653, %v811
      %v883 = vsel %vm856, %v654, %v813
      %v886 = vsel %vm856, %v655, %v815
      %v897 = vunpack.c.l.b16 %v859
      %v898 = vunpack.c.l.b16 %v846
      %v899 = vunpack.c.l.b16 %v862
      %v900 = vunpack.c.l.b16 %v847
      %v901 = vunpack.c.l.b16 %v865
      %v902 = vunpack.c.l.b16 %v848
      %v903 = vunpack.c.l.b16 %v868
      %v904 = vunpack.c.l.b16 %v849
      %v905 = vunpack.c.l.b16 %v871
      %v906 = vunpack.c.l.b16 %v850
      %v907 = vunpack.c.l.b16 %v874
      %v908 = vunpack.c.l.b16 %v851
      %v909 = vunpack.c.l.b16 %v877
      %v910 = vunpack.c.l.b16 %v852
      %v911 = vunpack.c.l.b16 %v880
      %v912 = vunpack.c.l.b16 %v853
      %v913 = vunpack.c.l.b16 %v883
      %v914 = vunpack.c.l.b16 %v854
      %v915 = vunpack.c.l.b16 %v886
      %v916 = vunpack.c.l.b16 %v855
      %v917 = vld [vmem:[%s1] sm:$0xf]
      %v918 = vld [vmem:[%s1 + $0x4] sm:$0xf]
      %v919 = vld [vmem:[%s1 + $0x8] sm:$0xf]
      %v920 = vld [vmem:[%s1 + $0xc] sm:$0xf]
      %v921 = vld [vmem:[%s1 + $0x10] sm:$0xf]
      %v922 = vld [vmem:[%s1 + $0x14] sm:$0xf]
      %v923 = vld [vmem:[%s1 + $0x18] sm:$0xf]
      %v924 = vld [vmem:[%s1 + $0x1c] sm:$0xf]
      %v925 = vld [vmem:[%s1 + $0x20] sm:$0xf]
      %v926 = vld [vmem:[%s1 + $0x24] sm:$0xf]
      %v927 = vld [vmem:[%s1 + $0x28] sm:$0xf]
      %v928 = vld [vmem:[%s1 + $0x2c] sm:$0xf]
      %v929 = vld [vmem:[%s1 + $0x30] sm:$0xf]
      %v930 = vld [vmem:[%s1 + $0x34] sm:$0xf]
      %v931 = vld [vmem:[%s1 + $0x38] sm:$0xf]
      %v932 = vld [vmem:[%s1 + $0x3c] sm:$0xf]
      %v933 = vld [vmem:[%s1 + $0x40] sm:$0xf]
      %v934 = vld [vmem:[%s1 + $0x44] sm:$0xf]
      %v935 = vld [vmem:[%s1 + $0x48] sm:$0xf]
      %v936 = vld [vmem:[%s1 + $0x4c] sm:$0xf]
      %v937 = vld [vmem:[%s1 + $0x50] sm:$0xf]
      %v938 = vld [vmem:[%s1 + $0x54] sm:$0xf]
      %v939 = vld [vmem:[%s1 + $0x58] sm:$0xf]
      %v940 = vld [vmem:[%s1 + $0x5c] sm:$0xf]
      %s941 = scalar_lea.vmem [#allocation3], 8
      %v942 = vld [vmem:[%s941] sm:$0xf]
      %v943 = vld [vmem:[%s941 + $0x8] sm:$0xf]
      %v944 = vld [vmem:[%s941 + $0x10] sm:$0xf]
      %v945 = vld [vmem:[%s941 + $0x18] sm:$0xf]
      %v946 = vld [vmem:[%s941 + $0x20] sm:$0xf]
      %v947 = vld [vmem:[%s941 + $0x28] sm:$0xf]
      %v948 = vld [vmem:[%s941 + $0x30] sm:$0xf]
      %v949 = vld [vmem:[%s941 + $0x38] sm:$0xf]
      %v950 = vld [vmem:[%s941 + $0x40] sm:$0xf]
      %v951 = vld [vmem:[%s941 + $0x48] sm:$0xf]
      %v952 = vld [vmem:[%s941 + $0x4] sm:$0x1]
      %v953 = vld [vmem:[%s941 + $0xc] sm:$0x1]
      %v954 = vld [vmem:[%s941 + $0x14] sm:$0x1]
      %v955 = vld [vmem:[%s941 + $0x1c] sm:$0x1]
      %v956 = vld [vmem:[%s941 + $0x24] sm:$0x1]
      %v957 = vld [vmem:[%s941 + $0x2c] sm:$0x1]
      %v958 = vld [vmem:[%s941 + $0x34] sm:$0x1]
      %v959 = vld [vmem:[%s941 + $0x3c] sm:$0x1]
      %v960 = vld [vmem:[%s941 + $0x44] sm:$0x1]
      %v961 = vld [vmem:[%s941 + $0x4c] sm:$0x1]
      %v962 = vld [vmem:[%s941] sm:$0xe]
      %v963 = vld [vmem:[%s941 + $0x8] sm:$0xe]
      %v964 = vld [vmem:[%s941 + $0x10] sm:$0xe]
      %v965 = vld [vmem:[%s941 + $0x18] sm:$0xe]
      %v966 = vld [vmem:[%s941 + $0x20] sm:$0xe]
      %v967 = vld [vmem:[%s941 + $0x28] sm:$0xe]
      %v968 = vld [vmem:[%s941 + $0x30] sm:$0xe]
      %v969 = vld [vmem:[%s941 + $0x38] sm:$0xe]
      %v970 = vld [vmem:[%s941 + $0x40] sm:$0xe]
      %v971 = vld [vmem:[%s941 + $0x48] sm:$0xe]
      %v992 = vunpack.c.l.b16 %v942
      %v993 = vunpack.c.l.b16 %v952
      %v994 = vunpack.c.l.b16 %v943
      %v995 = vunpack.c.l.b16 %v953
      %v996 = vunpack.c.l.b16 %v944
      %v997 = vunpack.c.l.b16 %v954
      %v998 = vunpack.c.l.b16 %v945
      %v999 = vunpack.c.l.b16 %v955
      %v1000 = vunpack.c.l.b16 %v946
      %v1001 = vunpack.c.l.b16 %v956
      %v1002 = vunpack.c.l.b16 %v947
      %v1003 = vunpack.c.l.b16 %v957
      %v1004 = vunpack.c.l.b16 %v948
      %v1005 = vunpack.c.l.b16 %v958
      %v1006 = vunpack.c.l.b16 %v949
      %v1007 = vunpack.c.l.b16 %v959
      %v1008 = vunpack.c.l.b16 %v950
      %v1009 = vunpack.c.l.b16 %v960
      %v1010 = vunpack.c.l.b16 %v951
      %v1011 = vunpack.c.l.b16 %v961
      %v1012 = vpack.c.b16 %v993, %v992
      %v1013 = vpack.c.b16 %v995, %v994
      %v1014 = vpack.c.b16 %v997, %v996
      %v1015 = vpack.c.b16 %v999, %v998
      %v1016 = vpack.c.b16 %v1001, %v1000
      %v1017 = vpack.c.b16 %v1003, %v1002
      %v1018 = vpack.c.b16 %v1005, %v1004
      %v1019 = vpack.c.b16 %v1007, %v1006
      %v1020 = vpack.c.b16 %v1009, %v1008
      %v1021 = vpack.c.b16 %v1011, %v1010
      %v1023 = vshrl.u32 %v1012, 16
      %v1025 = vshll.u32 %v1012, 16
      %v1027 = vrot.slane %v1025, 1
      %v1028 = vor.u32 %v1023, %v1027
      %v1030 = vshrl.u32 %v1013, 16
      %v1032 = vshll.u32 %v1013, 16
      %v1034 = vrot.slane %v1032, 1
      %v1035 = vor.u32 %v1030, %v1034
      %v1037 = vshrl.u32 %v1014, 16
      %v1039 = vshll.u32 %v1014, 16
      %v1041 = vrot.slane %v1039, 1
      %v1042 = vor.u32 %v1037, %v1041
      %v1044 = vshrl.u32 %v1015, 16
      %v1046 = vshll.u32 %v1015, 16
      %v1048 = vrot.slane %v1046, 1
      %v1049 = vor.u32 %v1044, %v1048
      %v1051 = vshrl.u32 %v1016, 16
      %v1053 = vshll.u32 %v1016, 16
      %v1055 = vrot.slane %v1053, 1
      %v1056 = vor.u32 %v1051, %v1055
      %v1058 = vshrl.u32 %v1017, 16
      %v1060 = vshll.u32 %v1017, 16
      %v1062 = vrot.slane %v1060, 1
      %v1063 = vor.u32 %v1058, %v1062
      %v1065 = vshrl.u32 %v1018, 16
      %v1067 = vshll.u32 %v1018, 16
      %v1069 = vrot.slane %v1067, 1
      %v1070 = vor.u32 %v1065, %v1069
      %v1072 = vshrl.u32 %v1019, 16
      %v1074 = vshll.u32 %v1019, 16
      %v1076 = vrot.slane %v1074, 1
      %v1077 = vor.u32 %v1072, %v1076
      %v1079 = vshrl.u32 %v1020, 16
      %v1081 = vshll.u32 %v1020, 16
      %v1083 = vrot.slane %v1081, 1
      %v1084 = vor.u32 %v1079, %v1083
      %v1086 = vshrl.u32 %v1021, 16
      %v1088 = vshll.u32 %v1021, 16
      %v1090 = vrot.slane %v1088, 1
      %v1091 = vor.u32 %v1086, %v1090
      %1092 = vrot.lane.b32.xlu0 %v1028, 64
      %v1093 = vpop.permute.xlu0 %1092
      %1094 = vrot.lane.b32.xlu0 %v1035, 64
      %v1095 = vpop.permute.xlu0 %1094
      %1096 = vrot.lane.b32.xlu0 %v1042, 64
      %v1097 = vpop.permute.xlu0 %1096
      %1098 = vrot.lane.b32.xlu0 %v1049, 64
      %v1099 = vpop.permute.xlu0 %1098
      %1100 = vrot.lane.b32.xlu0 %v1056, 64
      %v1101 = vpop.permute.xlu0 %1100
      %1102 = vrot.lane.b32.xlu0 %v1063, 64
      %v1103 = vpop.permute.xlu0 %1102
      %1104 = vrot.lane.b32.xlu0 %v1070, 64
      %v1105 = vpop.permute.xlu0 %1104
      %1106 = vrot.lane.b32.xlu0 %v1077, 64
      %v1107 = vpop.permute.xlu0 %1106
      %1108 = vrot.lane.b32.xlu0 %v1084, 64
      %v1109 = vpop.permute.xlu0 %1108
      %1110 = vrot.lane.b32.xlu0 %v1091, 64
      %v1111 = vpop.permute.xlu0 %1110
      %v1122 = vunpack.c.l.b16 %v962
      %v1123 = vunpack.c.l.b16 %v963
      %v1124 = vunpack.c.l.b16 %v964
      %v1125 = vunpack.c.l.b16 %v965
      %v1126 = vunpack.c.l.b16 %v966
      %v1127 = vunpack.c.l.b16 %v967
      %v1128 = vunpack.c.l.b16 %v968
      %v1129 = vunpack.c.l.b16 %v969
      %v1130 = vunpack.c.l.b16 %v970
      %v1131 = vunpack.c.l.b16 %v971
      %v1132 = vpack.c.b16 %v993, %v1122
      %v1133 = vpack.c.b16 %v995, %v1123
      %v1134 = vpack.c.b16 %v997, %v1124
      %v1135 = vpack.c.b16 %v999, %v1125
      %v1136 = vpack.c.b16 %v1001, %v1126
      %v1137 = vpack.c.b16 %v1003, %v1127
      %v1138 = vpack.c.b16 %v1005, %v1128
      %v1139 = vpack.c.b16 %v1007, %v1129
      %v1140 = vpack.c.b16 %v1009, %v1130
      %v1141 = vpack.c.b16 %v1011, %v1131
      %v1142 = vrot.slane %v1132, 1
      %v1143 = vrot.slane %v1133, 1
      %v1144 = vrot.slane %v1134, 1
      %v1145 = vrot.slane %v1135, 1
      %v1146 = vrot.slane %v1136, 1
      %v1147 = vrot.slane %v1137, 1
      %v1148 = vrot.slane %v1138, 1
      %v1149 = vrot.slane %v1139, 1
      %v1150 = vrot.slane %v1140, 1
      %v1151 = vrot.slane %v1141, 1
      %v1154 = vsel %vm856, %v942, %v1093
      %v1157 = vsel %vm856, %v943, %v1095
      %v1160 = vsel %vm856, %v944, %v1097
      %v1163 = vsel %vm856, %v945, %v1099
      %v1166 = vsel %vm856, %v946, %v1101
      %v1169 = vsel %vm856, %v947, %v1103
      %v1172 = vsel %vm856, %v948, %v1105
      %v1175 = vsel %vm856, %v949, %v1107
      %v1178 = vsel %vm856, %v950, %v1109
      %v1181 = vsel %vm856, %v951, %v1111
      %v1192 = vunpack.c.l.b16 %v1154
      %v1193 = vunpack.c.l.b16 %v1142
      %v1194 = vunpack.c.l.b16 %v1157
      %v1195 = vunpack.c.l.b16 %v1143
      %v1196 = vunpack.c.l.b16 %v1160
      %v1197 = vunpack.c.l.b16 %v1144
      %v1198 = vunpack.c.l.b16 %v1163
      %v1199 = vunpack.c.l.b16 %v1145
      %v1200 = vunpack.c.l.b16 %v1166
      %v1201 = vunpack.c.l.b16 %v1146
      %v1202 = vunpack.c.l.b16 %v1169
      %v1203 = vunpack.c.l.b16 %v1147
      %v1204 = vunpack.c.l.b16 %v1172
      %v1205 = vunpack.c.l.b16 %v1148
      %v1206 = vunpack.c.l.b16 %v1175
      %v1207 = vunpack.c.l.b16 %v1149
      %v1208 = vunpack.c.l.b16 %v1178
      %v1209 = vunpack.c.l.b16 %v1150
      %v1210 = vunpack.c.l.b16 %v1181
      %v1211 = vunpack.c.l.b16 %v1151
      %v1212 = vld [vmem:[%s1 + $0x60] sm:$0xf]
      %v1213 = vld [vmem:[%s1 + $0x64] sm:$0xf]
      %v1214 = vld [vmem:[%s1 + $0x68] sm:$0xf]
      %v1215 = vld [vmem:[%s1 + $0x6c] sm:$0xf]
      %v1216 = vld [vmem:[%s1 + $0x70] sm:$0xf]
      %v1217 = vld [vmem:[%s1 + $0x74] sm:$0xf]
      %v1218 = vld [vmem:[%s1 + $0x78] sm:$0xf]
      %v1219 = vld [vmem:[%s1 + $0x7c] sm:$0xf]
      %v1220 = vld [vmem:[%s1 + $0x80] sm:$0xf]
      %v1221 = vld [vmem:[%s1 + $0x84] sm:$0xf]
      %v1222 = vld [vmem:[%s1 + $0x88] sm:$0xf]
      %v1223 = vld [vmem:[%s1 + $0x8c] sm:$0xf]
      %v1224 = vld [vmem:[%s1 + $0x90] sm:$0xf]
      %v1225 = vld [vmem:[%s1 + $0x94] sm:$0xf]
      %v1226 = vld [vmem:[%s1 + $0x98] sm:$0xf]
      %v1227 = vld [vmem:[%s1 + $0x9c] sm:$0xf]
      %v1228 = vld [vmem:[%s1 + $0xa0] sm:$0xf]
      %v1229 = vld [vmem:[%s1 + $0xa4] sm:$0xf]
      %v1230 = vld [vmem:[%s1 + $0xa8] sm:$0xf]
      %v1231 = vld [vmem:[%s1 + $0xac] sm:$0xf]
      %v1232 = vld [vmem:[%s1 + $0xb0] sm:$0xf]
      %v1233 = vld [vmem:[%s1 + $0xb4] sm:$0xf]
      %v1234 = vld [vmem:[%s1 + $0xb8] sm:$0xf]
      %v1235 = vld [vmem:[%s1 + $0xbc] sm:$0xf]
      %v1236 = vpack.c.b16 %v1194, %v1192
      %v1237 = vpack.c.b16 %v1195, %v1193
      %v1238 = vpack.c.b16 %v1198, %v1196
      %v1239 = vpack.c.b16 %v1199, %v1197
      %v1240 = vpack.c.b16 %v1202, %v1200
      %v1241 = vpack.c.b16 %v1203, %v1201
      %v1242 = vpack.c.b16 %v1206, %v1204
      %v1243 = vpack.c.b16 %v1207, %v1205
      %v1244 = vpack.c.b16 %v1210, %v1208
      %v1245 = vpack.c.b16 %v1211, %v1209
      %v1275 = vunpack.c.l.b16 %v1212
      %v1276 = vunpack.c.l.b16 %v1213
      %v1277 = vunpack.c.l.b16 %v1214
      %v1278 = vunpack.c.l.b16 %v1215
      %v1279 = vunpack.c.l.b16 %v1216
      %v1280 = vunpack.c.l.b16 %v1217
      %v1281 = vunpack.c.l.b16 %v1218
      %v1282 = vunpack.c.l.b16 %v1219
      %v1283 = vunpack.c.l.b16 %v1220
      %v1284 = vunpack.c.l.b16 %v1221
      %v1285 = vunpack.c.l.b16 %v1222
      %v1286 = vunpack.c.l.b16 %v1223
      %v1287 = vunpack.c.l.b16 %v1224
      %v1288 = vunpack.c.l.b16 %v1225
      %v1289 = vunpack.c.l.b16 %v1226
      %v1290 = vunpack.c.l.b16 %v1227
      %v1291 = vunpack.c.l.b16 %v1228
      %v1292 = vunpack.c.l.b16 %v1229
      %v1293 = vunpack.c.l.b16 %v1230
      %v1294 = vunpack.c.l.b16 %v1231
      %v1295 = vunpack.c.l.b16 %v1232
      %v1296 = vunpack.c.l.b16 %v1233
      %v1297 = vunpack.c.l.b16 %v1234
      %v1298 = vunpack.c.l.b16 %v1235
      %v1299 = vpack.c.b16 %v1276, %v1275
      %v1300 = vpack.c.b16 %v1278, %v1277
      %v1301 = vpack.c.b16 %v1280, %v1279
      %v1302 = vpack.c.b16 %v1282, %v1281
      %v1303 = vpack.c.b16 %v1284, %v1283
      %v1304 = vpack.c.b16 %v1286, %v1285
      %v1305 = vpack.c.b16 %v1288, %v1287
      %v1306 = vpack.c.b16 %v1290, %v1289
      %v1307 = vpack.c.b16 %v1292, %v1291
      %v1308 = vpack.c.b16 %v1294, %v1293
      %v1309 = vpack.c.b16 %v1296, %v1295
      %v1310 = vpack.c.b16 %v1298, %v1297
      %v1324 = vsel %vm856, %v1237, 0
      %v1327 = vsel %vm856, %v1239, 0
      %v1330 = vsel %vm856, %v1241, 0
      %v1333 = vsel %vm856, %v1243, 0
      %v1336 = vsel %vm856, %v1245, 0
      %1338 = vmatprep.subr.bf16.mxu0 0
      %1339 = vmatpush1.bf16.msra.mxu0 %v1299
      %1340 = vmatprep.subr.bf16.mxu0 0
      %1341 = vmatpush1.bf16.msra.mxu0 %v1300
      %1342 = vmatprep.subr.bf16.mxu0 0
      %1343 = vmatpush1.bf16.msra.mxu0 %v1301
      %1344 = vmatprep.subr.bf16.mxu0 0
      %1345 = vmatpush1.bf16.msra.mxu0 %v1302
      %1346 = vmatprep.subr.bf16.mxu0 0
      %1347 = vmatpush1.bf16.msra.mxu0 %v1303
      %1348 = vmatprep.subr.bf16.mxu0 0
      %1349 = vmatpush1.bf16.msra.mxu0 %v1304
      %1350 = vmatprep.subr.bf16.mxu0 0
      %1351 = vmatpush1.bf16.msra.mxu0 %v1305
      %1352 = vmatprep.subr.bf16.mxu0 0
      %1353 = vmatpush1.bf16.msra.mxu0 %v1306
      %1354 = vmatprep.subr.bf16.mxu0 0
      %1355 = vmatpush1.bf16.msra.mxu0 %v1307
      %1356 = vmatprep.subr.bf16.mxu0 0
      %1357 = vmatpush1.bf16.msra.mxu0 %v1308
      %1358 = vmatprep.subr.bf16.mxu0 0
      %1359 = vmatpush1.bf16.msra.mxu0 %v1309
      %1360 = vmatprep.subr.bf16.mxu0 0
      %1361 = vmatpush1.bf16.msra.mxu0 %v1310
      %1362 = vmatprep.subr.bf16.mxu0 0
      %1363 = vmatpush1.bf16.msra.mxu0 0
      %1364 = vmatprep.subr.bf16.mxu0 0
      %1365 = vmatpush1.bf16.msra.mxu0 0
      %1366 = vmatprep.subr.bf16.mxu0 0
      %1367 = vmatpush1.bf16.msra.mxu0 0
      %1368 = vmatprep.subr.bf16.mxu0 0
      %1369 = vmatpush1.bf16.msra.mxu0 0
      %1370 = vmatprep.mubr.bf16.mxu0 %v1324
      %1371 = vmatmul.mubr.bf16.gmra.mrb[0].mxu0 %v1236
      %v1372 = vpop.f32.mrb[0].mxu0
      %v1373 = vadd.f32 0.0, %v1372
      %v1374 = vpop.f32.mrb[0].mxu0
      %v1375 = vpop.f32.mrb[0].mxu0
      %v1376 = vadd.f32 0.0, %v1375
      %v1377 = vpop.f32.mrb[0].mxu0
      %1378 = vmatprep.mubr.bf16.mxu0 %v1327
      %1379 = vmatmul.mubr.bf16.gmra.mrb[0].mxu0 %v1238
      %v1380 = vpop.f32.mrb[0].mxu0
      %v1381 = vadd.f32 0.0, %v1380
      %v1382 = vpop.f32.mrb[0].mxu0
      %v1383 = vpop.f32.mrb[0].mxu0
      %v1384 = vadd.f32 0.0, %v1383
      %v1385 = vpop.f32.mrb[0].mxu0
      %1386 = vmatprep.mubr.bf16.mxu0 %v1330
      %1387 = vmatmul.mubr.bf16.gmra.mrb[0].mxu0 %v1240
      %v1388 = vpop.f32.mrb[0].mxu0
      %v1389 = vadd.f32 0.0, %v1388
      %v1390 = vpop.f32.mrb[0].mxu0
      %v1391 = vpop.f32.mrb[0].mxu0
      %v1392 = vadd.f32 0.0, %v1391
      %v1393 = vpop.f32.mrb[0].mxu0
      %1394 = vmatprep.mubr.bf16.mxu0 %v1333
      %1395 = vmatmul.mubr.bf16.gmra.mrb[0].mxu0 %v1242
      %v1396 = vpop.f32.mrb[0].mxu0
      %v1397 = vadd.f32 0.0, %v1396
      %v1398 = vpop.f32.mrb[0].mxu0
      %v1399 = vpop.f32.mrb[0].mxu0
      %v1400 = vadd.f32 0.0, %v1399
      %v1401 = vpop.f32.mrb[0].mxu0
      %1402 = vmatprep.mubr.bf16.mxu0 %v1336
      %1403 = vmatmul.mubr.bf16.gmra.mrb[0].mxu0 %v1244
      %v1404 = vpop.f32.mrb[0].mxu0
      %v1405 = vadd.f32 0.0, %v1404
      %v1406 = vpop.f32.mrb[0].mxu0
      %v1407 = vpop.f32.mrb[0].mxu0
      %v1408 = vadd.f32 0.0, %v1407
      %v1409 = vpop.f32.mrb[0].mxu0
      %1410 = vdwg.mxu0
      %v1411 = vpack.c.b16 %v899, %v897
      %v1412 = vpack.c.b16 %v900, %v898
      %v1413 = vpack.c.b16 %v903, %v901
      %v1414 = vpack.c.b16 %v904, %v902
      %v1415 = vpack.c.b16 %v907, %v905
      %v1416 = vpack.c.b16 %v908, %v906
      %v1417 = vpack.c.b16 %v911, %v909
      %v1418 = vpack.c.b16 %v912, %v910
      %v1419 = vpack.c.b16 %v915, %v913
      %v1420 = vpack.c.b16 %v916, %v914
      %v1450 = vunpack.c.l.b16 %v917
      %v1451 = vunpack.c.l.b16 %v918
      %v1452 = vunpack.c.l.b16 %v919
      %v1453 = vunpack.c.l.b16 %v920
      %v1454 = vunpack.c.l.b16 %v921
      %v1455 = vunpack.c.l.b16 %v922
      %v1456 = vunpack.c.l.b16 %v923
      %v1457 = vunpack.c.l.b16 %v924
      %v1458 = vunpack.c.l.b16 %v925
      %v1459 = vunpack.c.l.b16 %v926
      %v1460 = vunpack.c.l.b16 %v927
      %v1461 = vunpack.c.l.b16 %v928
      %v1462 = vunpack.c.l.b16 %v929
      %v1463 = vunpack.c.l.b16 %v930
      %v1464 = vunpack.c.l.b16 %v931
      %v1465 = vunpack.c.l.b16 %v932
      %v1466 = vunpack.c.l.b16 %v933
      %v1467 = vunpack.c.l.b16 %v934
      %v1468 = vunpack.c.l.b16 %v935
      %v1469 = vunpack.c.l.b16 %v936
      %v1470 = vunpack.c.l.b16 %v937
      %v1471 = vunpack.c.l.b16 %v938
      %v1472 = vunpack.c.l.b16 %v939
      %v1473 = vunpack.c.l.b16 %v940
      %v1474 = vpack.c.b16 %v1451, %v1450
      %v1475 = vpack.c.b16 %v1453, %v1452
      %v1476 = vpack.c.b16 %v1455, %v1454
      %v1477 = vpack.c.b16 %v1457, %v1456
      %v1478 = vpack.c.b16 %v1459, %v1458
      %v1479 = vpack.c.b16 %v1461, %v1460
      %v1480 = vpack.c.b16 %v1463, %v1462
      %v1481 = vpack.c.b16 %v1465, %v1464
      %v1482 = vpack.c.b16 %v1467, %v1466
      %v1483 = vpack.c.b16 %v1469, %v1468
      %v1484 = vpack.c.b16 %v1471, %v1470
      %v1485 = vpack.c.b16 %v1473, %v1472
      %v1499 = vsel %vm856, %v1412, 0
      %v1502 = vsel %vm856, %v1414, 0
      %v1505 = vsel %vm856, %v1416, 0
      %v1508 = vsel %vm856, %v1418, 0
      %v1511 = vsel %vm856, %v1420, 0
      %1513 = vmatprep.subr.bf16.mxu0 0
      %1514 = vmatpush1.bf16.msra.mxu0 %v1474
      %1515 = vmatprep.subr.bf16.mxu0 0
      %1516 = vmatpush1.bf16.msra.mxu0 %v1475
      %1517 = vmatprep.subr.bf16.mxu0 0
      %1518 = vmatpush1.bf16.msra.mxu0 %v1476
      %1519 = vmatprep.subr.bf16.mxu0 0
      %1520 = vmatpush1.bf16.msra.mxu0 %v1477
      %1521 = vmatprep.subr.bf16.mxu0 0
      %1522 = vmatpush1.bf16.msra.mxu0 %v1478
      %1523 = vmatprep.subr.bf16.mxu0 0
      %1524 = vmatpush1.bf16.msra.mxu0 %v1479
      %1525 = vmatprep.subr.bf16.mxu0 0
      %1526 = vmatpush1.bf16.msra.mxu0 %v1480
      %1527 = vmatprep.subr.bf16.mxu0 0
      %1528 = vmatpush1.bf16.msra.mxu0 %v1481
      %1529 = vmatprep.subr.bf16.mxu0 0
      %1530 = vmatpush1.bf16.msra.mxu0 %v1482
      %1531 = vmatprep.subr.bf16.mxu0 0
      %1532 = vmatpush1.bf16.msra.mxu0 %v1483
      %1533 = vmatprep.subr.bf16.mxu0 0
      %1534 = vmatpush1.bf16.msra.mxu0 %v1484
      %1535 = vmatprep.subr.bf16.mxu0 0
      %1536 = vmatpush1.bf16.msra.mxu0 %v1485
      %1537 = vmatprep.subr.bf16.mxu0 0
      %1538 = vmatpush1.bf16.msra.mxu0 0
      %1539 = vmatprep.subr.bf16.mxu0 0
      %1540 = vmatpush1.bf16.msra.mxu0 0
      %1541 = vmatprep.subr.bf16.mxu0 0
      %1542 = vmatpush1.bf16.msra.mxu0 0
      %1543 = vmatprep.subr.bf16.mxu0 0
      %1544 = vmatpush1.bf16.msra.mxu0 0
      %1545 = vmatprep.mubr.bf16.mxu0 %v1499
      %1546 = vmatmul.mubr.bf16.gmra.mrb[0].mxu0 %v1411
      %v1547 = vpop.f32.mrb[0].mxu0
      %v1548 = vadd.f32 %v1373, %v1547
      %v1549 = vpop.f32.mrb[0].mxu0
      %v1550 = vpop.f32.mrb[0].mxu0
      %v1551 = vadd.f32 %v1376, %v1550
      %v1552 = vpop.f32.mrb[0].mxu0
      %1553 = vmatprep.mubr.bf16.mxu0 %v1502
      %1554 = vmatmul.mubr.bf16.gmra.mrb[0].mxu0 %v1413
      %v1555 = vpop.f32.mrb[0].mxu0
      %v1556 = vadd.f32 %v1381, %v1555
      %v1557 = vpop.f32.mrb[0].mxu0
      %v1558 = vpop.f32.mrb[0].mxu0
      %v1559 = vadd.f32 %v1384, %v1558
      %v1560 = vpop.f32.mrb[0].mxu0
      %1561 = vmatprep.mubr.bf16.mxu0 %v1505
      %1562 = vmatmul.mubr.bf16.gmra.mrb[0].mxu0 %v1415
      %v1563 = vpop.f32.mrb[0].mxu0
      %v1564 = vadd.f32 %v1389, %v1563
      %v1565 = vpop.f32.mrb[0].mxu0
      %v1566 = vpop.f32.mrb[0].mxu0
      %v1567 = vadd.f32 %v1392, %v1566
      %v1568 = vpop.f32.mrb[0].mxu0
      %1569 = vmatprep.mubr.bf16.mxu0 %v1508
      %1570 = vmatmul.mubr.bf16.gmra.mrb[0].mxu0 %v1417
      %v1571 = vpop.f32.mrb[0].mxu0
      %v1572 = vadd.f32 %v1397, %v1571
      %v1573 = vpop.f32.mrb[0].mxu0
      %v1574 = vpop.f32.mrb[0].mxu0
      %v1575 = vadd.f32 %v1400, %v1574
      %v1576 = vpop.f32.mrb[0].mxu0
      %1577 = vmatprep.mubr.bf16.mxu0 %v1511
      %1578 = vmatmul.mubr.bf16.gmra.mrb[0].mxu0 %v1419
      %v1579 = vpop.f32.mrb[0].mxu0
      %v1580 = vadd.f32 %v1405, %v1579
      %v1581 = vpop.f32.mrb[0].mxu0
      %v1582 = vpop.f32.mrb[0].mxu0
      %v1583 = vadd.f32 %v1408, %v1582
      %v1584 = vpop.f32.mrb[0].mxu0
      %1585 = vdwg.mxu0
      %s1586 = scalar_lea.vmem [#allocation3], 16
      %v1587 = vld [vmem:[%s1586] sm:$0xf]
      %v1588 = vld [vmem:[%s1586 + $0x8] sm:$0xf]
      %v1589 = vld [vmem:[%s1586 + $0x10] sm:$0xf]
      %v1590 = vld [vmem:[%s1586 + $0x18] sm:$0xf]
      %v1591 = vld [vmem:[%s1586 + $0x20] sm:$0xf]
      %v1592 = vld [vmem:[%s1586 + $0x28] sm:$0xf]
      %v1593 = vld [vmem:[%s1586 + $0x30] sm:$0xf]
      %v1594 = vld [vmem:[%s1586 + $0x38] sm:$0xf]
      %v1595 = vld [vmem:[%s1586 + $0x40] sm:$0xf]
      %v1596 = vld [vmem:[%s1586 + $0x48] sm:$0xf]
      %v1597 = vld [vmem:[%s1586 + $0x4] sm:$0x1]
      %v1598 = vld [vmem:[%s1586 + $0xc] sm:$0x1]
      %v1599 = vld [vmem:[%s1586 + $0x14] sm:$0x1]
      %v1600 = vld [vmem:[%s1586 + $0x1c] sm:$0x1]
      %v1601 = vld [vmem:[%s1586 + $0x24] sm:$0x1]
      %v1602 = vld [vmem:[%s1586 + $0x2c] sm:$0x1]
      %v1603 = vld [vmem:[%s1586 + $0x34] sm:$0x1]
      %v1604 = vld [vmem:[%s1586 + $0x3c] sm:$0x1]
      %v1605 = vld [vmem:[%s1586 + $0x44] sm:$0x1]
      %v1606 = vld [vmem:[%s1586 + $0x4c] sm:$0x1]
      %v1607 = vld [vmem:[%s1586] sm:$0xe]
      %v1608 = vld [vmem:[%s1586 + $0x8] sm:$0xe]
      %v1609 = vld [vmem:[%s1586 + $0x10] sm:$0xe]
      %v1610 = vld [vmem:[%s1586 + $0x18] sm:$0xe]
      %v1611 = vld [vmem:[%s1586 + $0x20] sm:$0xe]
      %v1612 = vld [vmem:[%s1586 + $0x28] sm:$0xe]
      %v1613 = vld [vmem:[%s1586 + $0x30] sm:$0xe]
      %v1614 = vld [vmem:[%s1586 + $0x38] sm:$0xe]
      %v1615 = vld [vmem:[%s1586 + $0x40] sm:$0xe]
      %v1616 = vld [vmem:[%s1586 + $0x48] sm:$0xe]
      %v1637 = vunpack.c.l.b16 %v1587
      %v1638 = vunpack.c.l.b16 %v1597
      %v1639 = vunpack.c.l.b16 %v1588
      %v1640 = vunpack.c.l.b16 %v1598
      %v1641 = vunpack.c.l.b16 %v1589
      %v1642 = vunpack.c.l.b16 %v1599
      %v1643 = vunpack.c.l.b16 %v1590
      %v1644 = vunpack.c.l.b16 %v1600
      %v1645 = vunpack.c.l.b16 %v1591
      %v1646 = vunpack.c.l.b16 %v1601
      %v1647 = vunpack.c.l.b16 %v1592
      %v1648 = vunpack.c.l.b16 %v1602
      %v1649 = vunpack.c.l.b16 %v1593
      %v1650 = vunpack.c.l.b16 %v1603
      %v1651 = vunpack.c.l.b16 %v1594
      %v1652 = vunpack.c.l.b16 %v1604
      %v1653 = vunpack.c.l.b16 %v1595
      %v1654 = vunpack.c.l.b16 %v1605
      %v1655 = vunpack.c.l.b16 %v1596
      %v1656 = vunpack.c.l.b16 %v1606
      %v1657 = vpack.c.b16 %v1638, %v1637
      %v1658 = vpack.c.b16 %v1640, %v1639
      %v1659 = vpack.c.b16 %v1642, %v1641
      %v1660 = vpack.c.b16 %v1644, %v1643
      %v1661 = vpack.c.b16 %v1646, %v1645
      %v1662 = vpack.c.b16 %v1648, %v1647
      %v1663 = vpack.c.b16 %v1650, %v1649
      %v1664 = vpack.c.b16 %v1652, %v1651
      %v1665 = vpack.c.b16 %v1654, %v1653
      %v1666 = vpack.c.b16 %v1656, %v1655
      %v1668 = vshrl.u32 %v1657, 16
      %v1670 = vshll.u32 %v1657, 16
      %v1672 = vrot.slane %v1670, 1
      %v1673 = vor.u32 %v1668, %v1672
      %v1675 = vshrl.u32 %v1658, 16
      %v1677 = vshll.u32 %v1658, 16
      %v1679 = vrot.slane %v1677, 1
      %v1680 = vor.u32 %v1675, %v1679
      %v1682 = vshrl.u32 %v1659, 16
      %v1684 = vshll.u32 %v1659, 16
      %v1686 = vrot.slane %v1684, 1
      %v1687 = vor.u32 %v1682, %v1686
      %v1689 = vshrl.u32 %v1660, 16
      %v1691 = vshll.u32 %v1660, 16
      %v1693 = vrot.slane %v1691, 1
      %v1694 = vor.u32 %v1689, %v1693
      %v1696 = vshrl.u32 %v1661, 16
      %v1698 = vshll.u32 %v1661, 16
      %v1700 = vrot.slane %v1698, 1
      %v1701 = vor.u32 %v1696, %v1700
      %v1703 = vshrl.u32 %v1662, 16
      %v1705 = vshll.u32 %v1662, 16
      %v1707 = vrot.slane %v1705, 1
      %v1708 = vor.u32 %v1703, %v1707
      %v1710 = vshrl.u32 %v1663, 16
      %v1712 = vshll.u32 %v1663, 16
      %v1714 = vrot.slane %v1712, 1
      %v1715 = vor.u32 %v1710, %v1714
      %v1717 = vshrl.u32 %v1664, 16
      %v1719 = vshll.u32 %v1664, 16
      %v1721 = vrot.slane %v1719, 1
      %v1722 = vor.u32 %v1717, %v1721
      %v1724 = vshrl.u32 %v1665, 16
      %v1726 = vshll.u32 %v1665, 16
      %v1728 = vrot.slane %v1726, 1
      %v1729 = vor.u32 %v1724, %v1728
      %v1731 = vshrl.u32 %v1666, 16
      %v1733 = vshll.u32 %v1666, 16
      %v1735 = vrot.slane %v1733, 1
      %v1736 = vor.u32 %v1731, %v1735
      %1737 = vrot.lane.b32.xlu0 %v1673, 64
      %v1738 = vpop.permute.xlu0 %1737
      %1739 = vrot.lane.b32.xlu0 %v1680, 64
      %v1740 = vpop.permute.xlu0 %1739
      %1741 = vrot.lane.b32.xlu0 %v1687, 64
      %v1742 = vpop.permute.xlu0 %1741
      %1743 = vrot.lane.b32.xlu0 %v1694, 64
      %v1744 = vpop.permute.xlu0 %1743
      %1745 = vrot.lane.b32.xlu0 %v1701, 64
      %v1746 = vpop.permute.xlu0 %1745
      %1747 = vrot.lane.b32.xlu0 %v1708, 64
      %v1748 = vpop.permute.xlu0 %1747
      %1749 = vrot.lane.b32.xlu0 %v1715, 64
      %v1750 = vpop.permute.xlu0 %1749
      %1751 = vrot.lane.b32.xlu0 %v1722, 64
      %v1752 = vpop.permute.xlu0 %1751
      %1753 = vrot.lane.b32.xlu0 %v1729, 64
      %v1754 = vpop.permute.xlu0 %1753
      %1755 = vrot.lane.b32.xlu0 %v1736, 64
      %v1756 = vpop.permute.xlu0 %1755
      %v1767 = vunpack.c.l.b16 %v1607
      %v1768 = vunpack.c.l.b16 %v1608
      %v1769 = vunpack.c.l.b16 %v1609
      %v1770 = vunpack.c.l.b16 %v1610
      %v1771 = vunpack.c.l.b16 %v1611
      %v1772 = vunpack.c.l.b16 %v1612
      %v1773 = vunpack.c.l.b16 %v1613
      %v1774 = vunpack.c.l.b16 %v1614
      %v1775 = vunpack.c.l.b16 %v1615
      %v1776 = vunpack.c.l.b16 %v1616
      %v1777 = vpack.c.b16 %v1638, %v1767
      %v1778 = vpack.c.b16 %v1640, %v1768
      %v1779 = vpack.c.b16 %v1642, %v1769
      %v1780 = vpack.c.b16 %v1644, %v1770
      %v1781 = vpack.c.b16 %v1646, %v1771
      %v1782 = vpack.c.b16 %v1648, %v1772
      %v1783 = vpack.c.b16 %v1650, %v1773
      %v1784 = vpack.c.b16 %v1652, %v1774
      %v1785 = vpack.c.b16 %v1654, %v1775
      %v1786 = vpack.c.b16 %v1656, %v1776
      %v1787 = vrot.slane %v1777, 1
      %v1788 = vrot.slane %v1778, 1
      %v1789 = vrot.slane %v1779, 1
      %v1790 = vrot.slane %v1780, 1
      %v1791 = vrot.slane %v1781, 1
      %v1792 = vrot.slane %v1782, 1
      %v1793 = vrot.slane %v1783, 1
      %v1794 = vrot.slane %v1784, 1
      %v1795 = vrot.slane %v1785, 1
      %v1796 = vrot.slane %v1786, 1
      %v1799 = vsel %vm856, %v1587, %v1738
      %v1802 = vsel %vm856, %v1588, %v1740
      %v1805 = vsel %vm856, %v1589, %v1742
      %v1808 = vsel %vm856, %v1590, %v1744
      %v1811 = vsel %vm856, %v1591, %v1746
      %v1814 = vsel %vm856, %v1592, %v1748
      %v1817 = vsel %vm856, %v1593, %v1750
      %v1820 = vsel %vm856, %v1594, %v1752
      %v1823 = vsel %vm856, %v1595, %v1754
      %v1826 = vsel %vm856, %v1596, %v1756
      %v1837 = vunpack.c.l.b16 %v1799
      %v1838 = vunpack.c.l.b16 %v1787
      %v1839 = vunpack.c.l.b16 %v1802
      %v1840 = vunpack.c.l.b16 %v1788
      %v1841 = vunpack.c.l.b16 %v1805
      %v1842 = vunpack.c.l.b16 %v1789
      %v1843 = vunpack.c.l.b16 %v1808
      %v1844 = vunpack.c.l.b16 %v1790
      %v1845 = vunpack.c.l.b16 %v1811
      %v1846 = vunpack.c.l.b16 %v1791
      %v1847 = vunpack.c.l.b16 %v1814
      %v1848 = vunpack.c.l.b16 %v1792
      %v1849 = vunpack.c.l.b16 %v1817
      %v1850 = vunpack.c.l.b16 %v1793
      %v1851 = vunpack.c.l.b16 %v1820
      %v1852 = vunpack.c.l.b16 %v1794
      %v1853 = vunpack.c.l.b16 %v1823
      %v1854 = vunpack.c.l.b16 %v1795
      %v1855 = vunpack.c.l.b16 %v1826
      %v1856 = vunpack.c.l.b16 %v1796
      %v1857 = vld [vmem:[%s1 + $0xc0] sm:$0xf]
      %v1858 = vld [vmem:[%s1 + $0xc4] sm:$0xf]
      %v1859 = vld [vmem:[%s1 + $0xc8] sm:$0xf]
      %v1860 = vld [vmem:[%s1 + $0xcc] sm:$0xf]
      %v1861 = vld [vmem:[%s1 + $0xd0] sm:$0xf]
      %v1862 = vld [vmem:[%s1 + $0xd4] sm:$0xf]
      %v1863 = vld [vmem:[%s1 + $0xd8] sm:$0xf]
      %v1864 = vld [vmem:[%s1 + $0xdc] sm:$0xf]
      %v1865 = vld [vmem:[%s1 + $0xe0] sm:$0xf]
      %v1866 = vld [vmem:[%s1 + $0xe4] sm:$0xf]
      %v1867 = vld [vmem:[%s1 + $0xe8] sm:$0xf]
      %v1868 = vld [vmem:[%s1 + $0xec] sm:$0xf]
      %v1869 = vld [vmem:[%s1 + $0xf0] sm:$0xf]
      %v1870 = vld [vmem:[%s1 + $0xf4] sm:$0xf]
      %v1871 = vld [vmem:[%s1 + $0xf8] sm:$0xf]
      %v1872 = vld [vmem:[%s1 + $0xfc] sm:$0xf]
      %v1873 = vld [vmem:[%s1 + $0x100] sm:$0xf]
      %v1874 = vld [vmem:[%s1 + $0x104] sm:$0xf]
      %v1875 = vld [vmem:[%s1 + $0x108] sm:$0xf]
      %v1876 = vld [vmem:[%s1 + $0x10c] sm:$0xf]
      %v1877 = vld [vmem:[%s1 + $0x110] sm:$0xf]
      %v1878 = vld [vmem:[%s1 + $0x114] sm:$0xf]
      %v1879 = vld [vmem:[%s1 + $0x118] sm:$0xf]
      %v1880 = vld [vmem:[%s1 + $0x11c] sm:$0xf]
      %v1881 = vpack.c.b16 %v1839, %v1837
      %v1882 = vpack.c.b16 %v1840, %v1838
      %v1883 = vpack.c.b16 %v1843, %v1841
      %v1884 = vpack.c.b16 %v1844, %v1842
      %v1885 = vpack.c.b16 %v1847, %v1845
      %v1886 = vpack.c.b16 %v1848, %v1846
      %v1887 = vpack.c.b16 %v1851, %v1849
      %v1888 = vpack.c.b16 %v1852, %v1850
      %v1889 = vpack.c.b16 %v1855, %v1853
      %v1890 = vpack.c.b16 %v1856, %v1854
      %v1920 = vunpack.c.l.b16 %v1857
      %v1921 = vunpack.c.l.b16 %v1858
      %v1922 = vunpack.c.l.b16 %v1859
      %v1923 = vunpack.c.l.b16 %v1860
      %v1924 = vunpack.c.l.b16 %v1861
      %v1925 = vunpack.c.l.b16 %v1862
      %v1926 = vunpack.c.l.b16 %v1863
      %v1927 = vunpack.c.l.b16 %v1864
      %v1928 = vunpack.c.l.b16 %v1865
      %v1929 = vunpack.c.l.b16 %v1866
      %v1930 = vunpack.c.l.b16 %v1867
      %v1931 = vunpack.c.l.b16 %v1868
      %v1932 = vunpack.c.l.b16 %v1869
      %v1933 = vunpack.c.l.b16 %v1870
      %v1934 = vunpack.c.l.b16 %v1871
      %v1935 = vunpack.c.l.b16 %v1872
      %v1936 = vunpack.c.l.b16 %v1873
      %v1937 = vunpack.c.l.b16 %v1874
      %v1938 = vunpack.c.l.b16 %v1875
      %v1939 = vunpack.c.l.b16 %v1876
      %v1940 = vunpack.c.l.b16 %v1877
      %v1941 = vunpack.c.l.b16 %v1878
      %v1942 = vunpack.c.l.b16 %v1879
      %v1943 = vunpack.c.l.b16 %v1880
      %v1944 = vpack.c.b16 %v1921, %v1920
      %v1945 = vpack.c.b16 %v1923, %v1922
      %v1946 = vpack.c.b16 %v1925, %v1924
      %v1947 = vpack.c.b16 %v1927, %v1926
      %v1948 = vpack.c.b16 %v1929, %v1928
      %v1949 = vpack.c.b16 %v1931, %v1930
      %v1950 = vpack.c.b16 %v1933, %v1932
      %v1951 = vpack.c.b16 %v1935, %v1934
      %v1952 = vpack.c.b16 %v1937, %v1936
      %v1953 = vpack.c.b16 %v1939, %v1938
      %v1954 = vpack.c.b16 %v1941, %v1940
      %v1955 = vpack.c.b16 %v1943, %v1942
      %v1969 = vsel %vm856, %v1882, 0
      %v1972 = vsel %vm856, %v1884, 0
      %v1975 = vsel %vm856, %v1886, 0
      %v1978 = vsel %vm856, %v1888, 0
      %v1981 = vsel %vm856, %v1890, 0
      %1983 = vmatprep.subr.bf16.mxu0 0
      %1984 = vmatpush1.bf16.msra.mxu0 %v1944
      %1985 = vmatprep.subr.bf16.mxu0 0
      %1986 = vmatpush1.bf16.msra.mxu0 %v1945
      %1987 = vmatprep.subr.bf16.mxu0 0
      %1988 = vmatpush1.bf16.msra.mxu0 %v1946
      %1989 = vmatprep.subr.bf16.mxu0 0
      %1990 = vmatpush1.bf16.msra.mxu0 %v1947
      %1991 = vmatprep.subr.bf16.mxu0 0
      %1992 = vmatpush1.bf16.msra.mxu0 %v1948
      %1993 = vmatprep.subr.bf16.mxu0 0
      %1994 = vmatpush1.bf16.msra.mxu0 %v1949
      %1995 = vmatprep.subr.bf16.mxu0 0
      %1996 = vmatpush1.bf16.msra.mxu0 %v1950
      %1997 = vmatprep.subr.bf16.mxu0 0
      %1998 = vmatpush1.bf16.msra.mxu0 %v1951
      %1999 = vmatprep.subr.bf16.mxu0 0
      %2000 = vmatpush1.bf16.msra.mxu0 %v1952
      %2001 = vmatprep.subr.bf16.mxu0 0
      %2002 = vmatpush1.bf16.msra.mxu0 %v1953
      %2003 = vmatprep.subr.bf16.mxu0 0
      %2004 = vmatpush1.bf16.msra.mxu0 %v1954
      %2005 = vmatprep.subr.bf16.mxu0 0
      %2006 = vmatpush1.bf16.msra.mxu0 %v1955
      %2007 = vmatprep.subr.bf16.mxu0 0
      %2008 = vmatpush1.bf16.msra.mxu0 0
      %2009 = vmatprep.subr.bf16.mxu0 0
      %2010 = vmatpush1.bf16.msra.mxu0 0
      %2011 = vmatprep.subr.bf16.mxu0 0
      %2012 = vmatpush1.bf16.msra.mxu0 0
      %2013 = vmatprep.subr.bf16.mxu0 0
      %2014 = vmatpush1.bf16.msra.mxu0 0
      %2015 = vmatprep.mubr.bf16.mxu0 %v1969
      %2016 = vmatmul.mubr.bf16.gmra.mrb[0].mxu0 %v1881
      %v2017 = vpop.f32.mrb[0].mxu0
      %v2018 = vadd.f32 0.0, %v2017
      %v2019 = vpop.f32.mrb[0].mxu0
      %v2020 = vpop.f32.mrb[0].mxu0
      %v2021 = vadd.f32 0.0, %v2020
      %v2022 = vpop.f32.mrb[0].mxu0
      %2023 = vmatprep.mubr.bf16.mxu0 %v1972
      %2024 = vmatmul.mubr.bf16.gmra.mrb[0].mxu0 %v1883
      %v2025 = vpop.f32.mrb[0].mxu0
      %v2026 = vadd.f32 0.0, %v2025
      %v2027 = vpop.f32.mrb[0].mxu0
      %v2028 = vpop.f32.mrb[0].mxu0
      %v2029 = vadd.f32 0.0, %v2028
      %v2030 = vpop.f32.mrb[0].mxu0
      %2031 = vmatprep.mubr.bf16.mxu0 %v1975
      %2032 = vmatmul.mubr.bf16.gmra.mrb[0].mxu0 %v1885
      %v2033 = vpop.f32.mrb[0].mxu0
      %v2034 = vadd.f32 0.0, %v2033
      %v2035 = vpop.f32.mrb[0].mxu0
      %v2036 = vpop.f32.mrb[0].mxu0
      %v2037 = vadd.f32 0.0, %v2036
      %v2038 = vpop.f32.mrb[0].mxu0
      %2039 = vmatprep.mubr.bf16.mxu0 %v1978
      %2040 = vmatmul.mubr.bf16.gmra.mrb[0].mxu0 %v1887
      %v2041 = vpop.f32.mrb[0].mxu0
      %v2042 = vadd.f32 0.0, %v2041
      %v2043 = vpop.f32.mrb[0].mxu0
      %v2044 = vpop.f32.mrb[0].mxu0
      %v2045 = vadd.f32 0.0, %v2044
      %v2046 = vpop.f32.mrb[0].mxu0
      %2047 = vmatprep.mubr.bf16.mxu0 %v1981
      %2048 = vmatmul.mubr.bf16.gmra.mrb[0].mxu0 %v1889
      %v2049 = vpop.f32.mrb[0].mxu0
      %v2050 = vadd.f32 0.0, %v2049
      %v2051 = vpop.f32.mrb[0].mxu0
      %v2052 = vpop.f32.mrb[0].mxu0
      %v2053 = vadd.f32 0.0, %v2052
      %v2054 = vpop.f32.mrb[0].mxu0
      %2055 = vdwg.mxu0
      %v2056 = vadd.f32 %v1548, %v2018
      %v2057 = vadd.f32 %v1551, %v2021
      %v2058 = vadd.f32 %v1556, %v2026
      %v2059 = vadd.f32 %v1559, %v2029
      %v2060 = vadd.f32 %v1564, %v2034
      %v2061 = vadd.f32 %v1567, %v2037
      %v2062 = vadd.f32 %v1572, %v2042
      %v2063 = vadd.f32 %v1575, %v2045
      %v2064 = vadd.f32 %v1580, %v2050
      %v2065 = vadd.f32 %v1583, %v2053
      %v2066 = vld [vmem:[%s2] sm:$0x1]
      %v2068 = vlaneseq
      %v2069 = vshrl.u32 %v2068, 7
      %v2070 = vsub.s32 0, %v2069
      %v2071 = vrot.slane %v2066, %v2070
      %v2073 = vadd.f32 %v2056, %v2071
      %v2074 = vadd.f32 %v2057, %v2071
      %v2075 = vadd.f32 %v2058, %v2071
      %v2076 = vadd.f32 %v2059, %v2071
      %v2077 = vadd.f32 %v2060, %v2071
      %v2078 = vadd.f32 %v2061, %v2071
      %v2079 = vadd.f32 %v2062, %v2071
      %v2080 = vadd.f32 %v2063, %v2071
      %v2081 = vadd.f32 %v2064, %v2071
      %v2082 = vadd.f32 %v2065, %v2071
      %v2083 = vmax.f32 %v2073, 0.0
      %v2084 = vmax.f32 %v2074, 0.0
      %v2085 = vmax.f32 %v2075, 0.0
      %v2086 = vmax.f32 %v2076, 0.0
      %v2087 = vmax.f32 %v2077, 0.0
      %v2088 = vmax.f32 %v2078, 0.0
      %v2089 = vmax.f32 %v2079, 0.0
      %v2090 = vmax.f32 %v2080, 0.0
      %v2091 = vmax.f32 %v2081, 0.0
      %v2092 = vmax.f32 %v2082, 0.0
      %v2093 = vpack.c.bf16 %v2083, %v2083
      %v2094 = vpack.c.bf16 %v2084, %v2084
      %v2095 = vpack.c.bf16 %v2085, %v2085
      %v2096 = vpack.c.bf16 %v2086, %v2086
      %v2097 = vpack.c.bf16 %v2087, %v2087
      %v2098 = vpack.c.bf16 %v2088, %v2088
      %v2099 = vpack.c.bf16 %v2089, %v2089
      %v2100 = vpack.c.bf16 %v2090, %v2090
      %v2101 = vpack.c.bf16 %v2091, %v2091
      %v2102 = vpack.c.bf16 %v2092, %v2092
      %v2113 = vunpack.c.l.b16 %v2093
      %v2114 = vunpack.c.l.b16 %v2094
      %v2115 = vunpack.c.l.b16 %v2095
      %v2116 = vunpack.c.l.b16 %v2096
      %v2117 = vunpack.c.l.b16 %v2097
      %v2118 = vunpack.c.l.b16 %v2098
      %v2119 = vunpack.c.l.b16 %v2099
      %v2120 = vunpack.c.l.b16 %v2100
      %v2121 = vunpack.c.l.b16 %v2101
      %v2122 = vunpack.c.l.b16 %v2102
      %v2123 = vpack.c.b16 %v2113, %v2113
      %v2124 = vpack.c.b16 %v2114, %v2114
      %v2125 = vpack.c.b16 %v2115, %v2115
      %v2126 = vpack.c.b16 %v2116, %v2116
      %v2127 = vpack.c.b16 %v2117, %v2117
      %v2128 = vpack.c.b16 %v2118, %v2118
      %v2129 = vpack.c.b16 %v2119, %v2119
      %v2130 = vpack.c.b16 %v2120, %v2120
      %v2131 = vpack.c.b16 %v2121, %v2121
      %v2132 = vpack.c.b16 %v2122, %v2122
      %v2134 = vshrl.u32 %v2123, 16
      %v2136 = vrot.slane %v2134, 7
      %v2137 = vshll.u32 %v2123, 16
      %v2139 = vor.u32 %v2136, %v2137
      %v2140 = vrot.slane %v2136, 4
      %v2142 = vshrl.u32 %v2124, 16
      %v2144 = vrot.slane %v2142, 7
      %v2145 = vshll.u32 %v2124, 16
      %v2147 = vor.u32 %v2144, %v2145
      %v2148 = vrot.slane %v2144, 4
      %v2150 = vshrl.u32 %v2125, 16
      %v2152 = vrot.slane %v2150, 7
      %v2153 = vshll.u32 %v2125, 16
      %v2155 = vor.u32 %v2152, %v2153
      %v2156 = vrot.slane %v2152, 4
      %v2158 = vshrl.u32 %v2126, 16
      %v2160 = vrot.slane %v2158, 7
      %v2161 = vshll.u32 %v2126, 16
      %v2163 = vor.u32 %v2160, %v2161
      %v2164 = vrot.slane %v2160, 4
      %v2166 = vshrl.u32 %v2127, 16
      %v2168 = vrot.slane %v2166, 7
      %v2169 = vshll.u32 %v2127, 16
      %v2171 = vor.u32 %v2168, %v2169
      %v2172 = vrot.slane %v2168, 4
      %v2174 = vshrl.u32 %v2128, 16
      %v2176 = vrot.slane %v2174, 7
      %v2177 = vshll.u32 %v2128, 16
      %v2179 = vor.u32 %v2176, %v2177
      %v2180 = vrot.slane %v2176, 4
      %v2182 = vshrl.u32 %v2129, 16
      %v2184 = vrot.slane %v2182, 7
      %v2185 = vshll.u32 %v2129, 16
      %v2187 = vor.u32 %v2184, %v2185
      %v2188 = vrot.slane %v2184, 4
      %v2190 = vshrl.u32 %v2130, 16
      %v2192 = vrot.slane %v2190, 7
      %v2193 = vshll.u32 %v2130, 16
      %v2195 = vor.u32 %v2192, %v2193
      %v2196 = vrot.slane %v2192, 4
      %v2198 = vshrl.u32 %v2131, 16
      %v2200 = vrot.slane %v2198, 7
      %v2201 = vshll.u32 %v2131, 16
      %v2203 = vor.u32 %v2200, %v2201
      %v2204 = vrot.slane %v2200, 4
      %v2206 = vshrl.u32 %v2132, 16
      %v2208 = vrot.slane %v2206, 7
      %v2209 = vshll.u32 %v2132, 16
      %v2211 = vor.u32 %v2208, %v2209
      %v2212 = vrot.slane %v2208, 4
      %vm2233 = vcmask 1043456
      %vm2234 = vmand %vm2233, %vm496
      %v2235 = vld [vmem:[#allocation4] sm:$0xf]
      %v2236 = vsel %vm2234, %v2139, %v2235
      %2237 = vst [vmem:[#allocation4] sm:$0xf] %v2236
      %vm2238 = vcmask 1040384
      %vm2239 = vmand %vm2238, %vm502
      %v2240 = vld [vmem:[#allocation4 + $0x4] sm:$0x1]
      %v2241 = vsel %vm2239, %v2140, %v2240
      %2242 = vst [vmem:[#allocation4 + $0x4] sm:$0x1] %v2241
      %v2243 = vld [vmem:[#allocation4 + $0x8] sm:$0xf]
      %v2244 = vsel %vm2234, %v2147, %v2243
      %2245 = vst [vmem:[#allocation4 + $0x8] sm:$0xf] %v2244
      %v2246 = vld [vmem:[#allocation4 + $0xc] sm:$0x1]
      %v2247 = vsel %vm2239, %v2148, %v2246
      %2248 = vst [vmem:[#allocation4 + $0xc] sm:$0x1] %v2247
      %v2249 = vld [vmem:[#allocation4 + $0x10] sm:$0xf]
      %v2250 = vsel %vm2234, %v2155, %v2249
      %2251 = vst [vmem:[#allocation4 + $0x10] sm:$0xf] %v2250
      %v2252 = vld [vmem:[#allocation4 + $0x14] sm:$0x1]
      %v2253 = vsel %vm2239, %v2156, %v2252
      %2254 = vst [vmem:[#allocation4 + $0x14] sm:$0x1] %v2253
      %v2255 = vld [vmem:[#allocation4 + $0x18] sm:$0xf]
      %v2256 = vsel %vm2234, %v2163, %v2255
      %2257 = vst [vmem:[#allocation4 + $0x18] sm:$0xf] %v2256
      %v2258 = vld [vmem:[#allocation4 + $0x1c] sm:$0x1]
      %v2259 = vsel %vm2239, %v2164, %v2258
      %2260 = vst [vmem:[#allocation4 + $0x1c] sm:$0x1] %v2259
      %v2261 = vld [vmem:[#allocation4 + $0x20] sm:$0xf]
      %v2262 = vsel %vm2234, %v2171, %v2261
      %2263 = vst [vmem:[#allocation4 + $0x20] sm:$0xf] %v2262
      %v2264 = vld [vmem:[#allocation4 + $0x24] sm:$0x1]
      %v2265 = vsel %vm2239, %v2172, %v2264
      %2266 = vst [vmem:[#allocation4 + $0x24] sm:$0x1] %v2265
      %v2267 = vld [vmem:[#allocation4 + $0x28] sm:$0xf]
      %v2268 = vsel %vm2234, %v2179, %v2267
      %2269 = vst [vmem:[#allocation4 + $0x28] sm:$0xf] %v2268
      %v2270 = vld [vmem:[#allocation4 + $0x2c] sm:$0x1]
      %v2271 = vsel %vm2239, %v2180, %v2270
      %2272 = vst [vmem:[#allocation4 + $0x2c] sm:$0x1] %v2271
      %v2273 = vld [vmem:[#allocation4 + $0x30] sm:$0xf]
      %v2274 = vsel %vm2234, %v2187, %v2273
      %2275 = vst [vmem:[#allocation4 + $0x30] sm:$0xf] %v2274
      %v2276 = vld [vmem:[#allocation4 + $0x34] sm:$0x1]
      %v2277 = vsel %vm2239, %v2188, %v2276
      %2278 = vst [vmem:[#allocation4 + $0x34] sm:$0x1] %v2277
      %v2279 = vld [vmem:[#allocation4 + $0x38] sm:$0xf]
      %v2280 = vsel %vm2234, %v2195, %v2279
      %2281 = vst [vmem:[#allocation4 + $0x38] sm:$0xf] %v2280
      %v2282 = vld [vmem:[#allocation4 + $0x3c] sm:$0x1]
      %v2283 = vsel %vm2239, %v2196, %v2282
      %2284 = vst [vmem:[#allocation4 + $0x3c] sm:$0x1] %v2283
      %v2285 = vld [vmem:[#allocation4 + $0x40] sm:$0xf]
      %v2286 = vsel %vm2234, %v2203, %v2285
      %2287 = vst [vmem:[#allocation4 + $0x40] sm:$0xf] %v2286
      %v2288 = vld [vmem:[#allocation4 + $0x44] sm:$0x1]
      %v2289 = vsel %vm2239, %v2204, %v2288
      %2290 = vst [vmem:[#allocation4 + $0x44] sm:$0x1] %v2289
      %v2291 = vld [vmem:[#allocation4 + $0x48] sm:$0xf]
      %v2292 = vsel %vm2234, %v2211, %v2291
      %2293 = vst [vmem:[#allocation4 + $0x48] sm:$0xf] %v2292
      %v2294 = vld [vmem:[#allocation4 + $0x4c] sm:$0x1]
      %v2295 = vsel %vm2239, %v2212, %v2294
      %2296 = vst [vmem:[#allocation4 + $0x4c] sm:$0x1] %v2295
      %v2297 = vld [vmem:[#allocation4] sm:$0x1]
      %v2298 = vsel %vm2239, 0, %v2297
      %2299 = vst [vmem:[#allocation4] sm:$0x1] %v2298
      %v2300 = vld [vmem:[#allocation4 + $0x8] sm:$0x1]
      %v2301 = vsel %vm2239, 0, %v2300
      %2302 = vst [vmem:[#allocation4 + $0x8] sm:$0x1] %v2301
      %v2303 = vld [vmem:[#allocation4 + $0x10] sm:$0x1]
      %v2304 = vsel %vm2239, 0, %v2303
      %2305 = vst [vmem:[#allocation4 + $0x10] sm:$0x1] %v2304
      %v2306 = vld [vmem:[#allocation4 + $0x18] sm:$0x1]
      %v2307 = vsel %vm2239, 0, %v2306
      %2308 = vst [vmem:[#allocation4 + $0x18] sm:$0x1] %v2307
      %v2309 = vld [vmem:[#allocation4 + $0x20] sm:$0x1]
      %v2310 = vsel %vm2239, 0, %v2309
      %2311 = vst [vmem:[#allocation4 + $0x20] sm:$0x1] %v2310
      %v2312 = vld [vmem:[#allocation4 + $0x28] sm:$0x1]
      %v2313 = vsel %vm2239, 0, %v2312
      %2314 = vst [vmem:[#allocation4 + $0x28] sm:$0x1] %v2313
      %v2315 = vld [vmem:[#allocation4 + $0x30] sm:$0x1]
      %v2316 = vsel %vm2239, 0, %v2315
      %2317 = vst [vmem:[#allocation4 + $0x30] sm:$0x1] %v2316
      %v2318 = vld [vmem:[#allocation4 + $0x38] sm:$0x1]
      %v2319 = vsel %vm2239, 0, %v2318
      %2320 = vst [vmem:[#allocation4 + $0x38] sm:$0x1] %v2319
      %v2321 = vld [vmem:[#allocation4 + $0x40] sm:$0x1]
      %v2322 = vsel %vm2239, 0, %v2321
      %2323 = vst [vmem:[#allocation4 + $0x40] sm:$0x1] %v2322
      %v2324 = vld [vmem:[#allocation4 + $0x48] sm:$0x1]
      %v2325 = vsel %vm2239, 0, %v2324
      %2326 = vst [vmem:[#allocation4 + $0x48] sm:$0x1] %v2325
      %vm2327 = vmand %vm2238, %vm496
      %v2328 = vld [vmem:[#allocation4 + $0x4] sm:$0x1]
      %v2329 = vsel %vm2327, 0, %v2328
      %2330 = vst [vmem:[#allocation4 + $0x4] sm:$0x1] %v2329
      %v2331 = vld [vmem:[#allocation4 + $0xc] sm:$0x1]
      %v2332 = vsel %vm2327, 0, %v2331
      %2333 = vst [vmem:[#allocation4 + $0xc] sm:$0x1] %v2332
      %v2334 = vld [vmem:[#allocation4 + $0x14] sm:$0x1]
      %v2335 = vsel %vm2327, 0, %v2334
      %2336 = vst [vmem:[#allocation4 + $0x14] sm:$0x1] %v2335
      %v2337 = vld [vmem:[#allocation4 + $0x1c] sm:$0x1]
      %v2338 = vsel %vm2327, 0, %v2337
      %2339 = vst [vmem:[#allocation4 + $0x1c] sm:$0x1] %v2338
      %v2340 = vld [vmem:[#allocation4 + $0x24] sm:$0x1]
      %v2341 = vsel %vm2327, 0, %v2340
      %2342 = vst [vmem:[#allocation4 + $0x24] sm:$0x1] %v2341
      %v2343 = vld [vmem:[#allocation4 + $0x2c] sm:$0x1]
      %v2344 = vsel %vm2327, 0, %v2343
      %2345 = vst [vmem:[#allocation4 + $0x2c] sm:$0x1] %v2344
      %v2346 = vld [vmem:[#allocation4 + $0x34] sm:$0x1]
      %v2347 = vsel %vm2327, 0, %v2346
      %2348 = vst [vmem:[#allocation4 + $0x34] sm:$0x1] %v2347
      %v2349 = vld [vmem:[#allocation4 + $0x3c] sm:$0x1]
      %v2350 = vsel %vm2327, 0, %v2349
      %2351 = vst [vmem:[#allocation4 + $0x3c] sm:$0x1] %v2350
      %v2352 = vld [vmem:[#allocation4 + $0x44] sm:$0x1]
      %v2353 = vsel %vm2327, 0, %v2352
      %2354 = vst [vmem:[#allocation4 + $0x44] sm:$0x1] %v2353
      %v2355 = vld [vmem:[#allocation4 + $0x4c] sm:$0x1]
      %v2356 = vsel %vm2327, 0, %v2355
      %2357 = vst [vmem:[#allocation4 + $0x4c] sm:$0x1] %v2356
      %p2358 = scmp.eq.s32.totalorder %s21, 0
      // Predicated region
      $region72: #{down_forward.1} parent=35 // pred_check
        %p2359 = pneg %p2358
      $region73: #{down_forward.1} parent=35 // pred_check_branch
        %2361 = sbr.rel (%p2359) target = $region75
      $region74: #{down_forward.1} parent=35 // pred_region
        %v2362 = vld [vmem:[#allocation4] sm:$0xf]
        %v2363 = vsel %vm2234, 0, %v2362
        %2364 = vst [vmem:[#allocation4] sm:$0xf] %v2363
        %v2365 = vld [vmem:[#allocation4 + $0x4] sm:$0x1]
        %v2366 = vsel %vm2239, 0, %v2365
        %2367 = vst [vmem:[#allocation4 + $0x4] sm:$0x1] %v2366
        %s2368 = scalar_lea.vmem [#allocation4], 72
        %v2369 = vld [vmem:[%s2368] sm:$0xf]
        %v2370 = vsel %vm2234, 0, %v2369
        %2371 = vst [vmem:[%s2368] sm:$0xf] %v2370
        %v2372 = vld [vmem:[%s2368 + $0x4] sm:$0x1]
        %v2373 = vsel %vm2239, 0, %v2372
        %2374 = vst [vmem:[%s2368 + $0x4] sm:$0x1] %v2373
      $region75: #{down_forward.1} parent=35 // pred_fallthru
        _
      %v2375 = vld [vmem:[#allocation4] sm:$0xf]
      %v2376 = vld [vmem:[#allocation4 + $0x8] sm:$0xf]
      %v2377 = vld [vmem:[#allocation4 + $0x10] sm:$0xf]
      %v2378 = vld [vmem:[#allocation4 + $0x18] sm:$0xf]
      %v2379 = vld [vmem:[#allocation4 + $0x20] sm:$0xf]
      %v2380 = vld [vmem:[#allocation4 + $0x28] sm:$0xf]
      %v2381 = vld [vmem:[#allocation4 + $0x30] sm:$0xf]
      %v2382 = vld [vmem:[#allocation4 + $0x38] sm:$0xf]
      %v2383 = vld [vmem:[#allocation4 + $0x4] sm:$0x1]
      %v2384 = vld [vmem:[#allocation4 + $0xc] sm:$0x1]
      %v2385 = vld [vmem:[#allocation4 + $0x14] sm:$0x1]
      %v2386 = vld [vmem:[#allocation4 + $0x1c] sm:$0x1]
      %v2387 = vld [vmem:[#allocation4 + $0x24] sm:$0x1]
      %v2388 = vld [vmem:[#allocation4 + $0x2c] sm:$0x1]
      %v2389 = vld [vmem:[#allocation4 + $0x34] sm:$0x1]
      %v2390 = vld [vmem:[#allocation4 + $0x3c] sm:$0x1]
      %v2391 = vld [vmem:[#allocation4] sm:$0xe]
      %v2392 = vld [vmem:[#allocation4 + $0x8] sm:$0xe]
      %v2393 = vld [vmem:[#allocation4 + $0x10] sm:$0xe]
      %v2394 = vld [vmem:[#allocation4 + $0x18] sm:$0xe]
      %v2395 = vld [vmem:[#allocation4 + $0x20] sm:$0xe]
      %v2396 = vld [vmem:[#allocation4 + $0x28] sm:$0xe]
      %v2397 = vld [vmem:[#allocation4 + $0x30] sm:$0xe]
      %v2398 = vld [vmem:[#allocation4 + $0x38] sm:$0xe]
      %v2415 = vunpack.c.l.b16 %v2375
      %v2416 = vunpack.c.l.b16 %v2383
      %v2417 = vunpack.c.l.b16 %v2376
      %v2418 = vunpack.c.l.b16 %v2384
      %v2419 = vunpack.c.l.b16 %v2377
      %v2420 = vunpack.c.l.b16 %v2385
      %v2421 = vunpack.c.l.b16 %v2378
      %v2422 = vunpack.c.l.b16 %v2386
      %v2423 = vunpack.c.l.b16 %v2379
      %v2424 = vunpack.c.l.b16 %v2387
      %v2425 = vunpack.c.l.b16 %v2380
      %v2426 = vunpack.c.l.b16 %v2388
      %v2427 = vunpack.c.l.b16 %v2381
      %v2428 = vunpack.c.l.b16 %v2389
      %v2429 = vunpack.c.l.b16 %v2382
      %v2430 = vunpack.c.l.b16 %v2390
      %v2431 = vpack.c.b16 %v2416, %v2415
      %v2432 = vpack.c.b16 %v2418, %v2417
      %v2433 = vpack.c.b16 %v2420, %v2419
      %v2434 = vpack.c.b16 %v2422, %v2421
      %v2435 = vpack.c.b16 %v2424, %v2423
      %v2436 = vpack.c.b16 %v2426, %v2425
      %v2437 = vpack.c.b16 %v2428, %v2427
      %v2438 = vpack.c.b16 %v2430, %v2429
      %v2440 = vshrl.u32 %v2431, 16
      %v2442 = vshll.u32 %v2431, 16
      %v2444 = vrot.slane %v2442, 1
      %v2445 = vor.u32 %v2440, %v2444
      %v2447 = vshrl.u32 %v2432, 16
      %v2449 = vshll.u32 %v2432, 16
      %v2451 = vrot.slane %v2449, 1
      %v2452 = vor.u32 %v2447, %v2451
      %v2454 = vshrl.u32 %v2433, 16
      %v2456 = vshll.u32 %v2433, 16
      %v2458 = vrot.slane %v2456, 1
      %v2459 = vor.u32 %v2454, %v2458
      %v2461 = vshrl.u32 %v2434, 16
      %v2463 = vshll.u32 %v2434, 16
      %v2465 = vrot.slane %v2463, 1
      %v2466 = vor.u32 %v2461, %v2465
      %v2468 = vshrl.u32 %v2435, 16
      %v2470 = vshll.u32 %v2435, 16
      %v2472 = vrot.slane %v2470, 1
      %v2473 = vor.u32 %v2468, %v2472
      %v2475 = vshrl.u32 %v2436, 16
      %v2477 = vshll.u32 %v2436, 16
      %v2479 = vrot.slane %v2477, 1
      %v2480 = vor.u32 %v2475, %v2479
      %v2482 = vshrl.u32 %v2437, 16
      %v2484 = vshll.u32 %v2437, 16
      %v2486 = vrot.slane %v2484, 1
      %v2487 = vor.u32 %v2482, %v2486
      %v2489 = vshrl.u32 %v2438, 16
      %v2491 = vshll.u32 %v2438, 16
      %v2493 = vrot.slane %v2491, 1
      %v2494 = vor.u32 %v2489, %v2493
      %v2503 = vunpack.c.l.b16 %v2391
      %v2504 = vunpack.c.l.b16 %v2392
      %v2505 = vunpack.c.l.b16 %v2393
      %v2506 = vunpack.c.l.b16 %v2394
      %v2507 = vunpack.c.l.b16 %v2395
      %v2508 = vunpack.c.l.b16 %v2396
      %v2509 = vunpack.c.l.b16 %v2397
      %v2510 = vunpack.c.l.b16 %v2398
      %v2511 = vpack.c.b16 %v2416, %v2503
      %v2512 = vpack.c.b16 %v2418, %v2504
      %v2513 = vpack.c.b16 %v2420, %v2505
      %v2514 = vpack.c.b16 %v2422, %v2506
      %v2515 = vpack.c.b16 %v2424, %v2507
      %v2516 = vpack.c.b16 %v2426, %v2508
      %v2517 = vpack.c.b16 %v2428, %v2509
      %v2518 = vpack.c.b16 %v2430, %v2510
      %v2519 = vrot.slane %v2511, 1
      %v2520 = vrot.slane %v2512, 1
      %v2521 = vrot.slane %v2513, 1
      %v2522 = vrot.slane %v2514, 1
      %v2523 = vrot.slane %v2515, 1
      %v2524 = vrot.slane %v2516, 1
      %v2525 = vrot.slane %v2517, 1
      %v2526 = vrot.slane %v2518, 1
      %v2527 = vunpack.c.l.b16 %v2445
      %v2528 = vunpack.c.l.b16 %v2519
      %v2529 = vunpack.c.l.b16 %v2452
      %v2530 = vunpack.c.l.b16 %v2520
      %v2531 = vunpack.c.l.b16 %v2459
      %v2532 = vunpack.c.l.b16 %v2521
      %v2533 = vunpack.c.l.b16 %v2466
      %v2534 = vunpack.c.l.b16 %v2522
      %v2535 = vunpack.c.l.b16 %v2473
      %v2536 = vunpack.c.l.b16 %v2523
      %v2537 = vunpack.c.l.b16 %v2480
      %v2538 = vunpack.c.l.b16 %v2524
      %v2539 = vunpack.c.l.b16 %v2487
      %v2540 = vunpack.c.l.b16 %v2525
      %v2541 = vunpack.c.l.b16 %v2494
      %v2542 = vunpack.c.l.b16 %v2526
      %v2543 = vld [vmem:[%s3] sm:$0xf]
      %v2544 = vld [vmem:[%s3 + $0x4] sm:$0xf]
      %v2545 = vld [vmem:[%s3 + $0x8] sm:$0xf]
      %v2546 = vld [vmem:[%s3 + $0xc] sm:$0xf]
      %v2547 = vld [vmem:[%s3 + $0x10] sm:$0xf]
      %v2548 = vld [vmem:[%s3 + $0x14] sm:$0xf]
      %v2549 = vld [vmem:[%s3 + $0x18] sm:$0xf]
      %v2550 = vld [vmem:[%s3 + $0x1c] sm:$0xf]
      %v2551 = vld [vmem:[%s3 + $0x20] sm:$0xf]
      %v2552 = vld [vmem:[%s3 + $0x24] sm:$0xf]
      %v2553 = vld [vmem:[%s3 + $0x28] sm:$0xf]
      %v2554 = vld [vmem:[%s3 + $0x2c] sm:$0xf]
      %v2555 = vld [vmem:[%s3 + $0x30] sm:$0xf]
      %v2556 = vld [vmem:[%s3 + $0x34] sm:$0xf]
      %v2557 = vld [vmem:[%s3 + $0x38] sm:$0xf]
      %v2558 = vld [vmem:[%s3 + $0x3c] sm:$0xf]
      %v2559 = vld [vmem:[%s3 + $0x40] sm:$0xf]
      %v2560 = vld [vmem:[%s3 + $0x44] sm:$0xf]
      %v2561 = vld [vmem:[%s3 + $0x48] sm:$0xf]
      %v2562 = vld [vmem:[%s3 + $0x4c] sm:$0xf]
      %v2563 = vld [vmem:[%s3 + $0x50] sm:$0xf]
      %v2564 = vld [vmem:[%s3 + $0x54] sm:$0xf]
      %v2565 = vld [vmem:[%s3 + $0x58] sm:$0xf]
      %v2566 = vld [vmem:[%s3 + $0x5c] sm:$0xf]
      %v2567 = vld [vmem:[%s3 + $0x60] sm:$0xf]
      %v2568 = vld [vmem:[%s3 + $0x64] sm:$0xf]
      %v2569 = vld [vmem:[%s3 + $0x68] sm:$0xf]
      %v2570 = vld [vmem:[%s3 + $0x6c] sm:$0xf]
      %v2571 = vld [vmem:[%s3 + $0x70] sm:$0xf]
      %v2572 = vld [vmem:[%s3 + $0x74] sm:$0xf]
      %v2573 = vld [vmem:[%s3 + $0x78] sm:$0xf]
      %v2574 = vld [vmem:[%s3 + $0x7c] sm:$0xf]
      %v2575 = vld [vmem:[%s3 + $0x80] sm:$0xf]
      %v2576 = vld [vmem:[%s3 + $0x84] sm:$0xf]
      %v2577 = vld [vmem:[%s3 + $0x88] sm:$0xf]
      %v2578 = vld [vmem:[%s3 + $0x8c] sm:$0xf]
      %v2579 = vld [vmem:[%s3 + $0x90] sm:$0xf]
      %v2580 = vld [vmem:[%s3 + $0x94] sm:$0xf]
      %v2581 = vld [vmem:[%s3 + $0x98] sm:$0xf]
      %v2582 = vld [vmem:[%s3 + $0x9c] sm:$0xf]
      %v2583 = vld [vmem:[%s3 + $0xa0] sm:$0xf]
      %v2584 = vld [vmem:[%s3 + $0xa4] sm:$0xf]
      %v2585 = vld [vmem:[%s3 + $0xa8] sm:$0xf]
      %v2586 = vld [vmem:[%s3 + $0xac] sm:$0xf]
      %v2587 = vld [vmem:[%s3 + $0xb0] sm:$0xf]
      %v2588 = vld [vmem:[%s3 + $0xb4] sm:$0xf]
      %v2589 = vld [vmem:[%s3 + $0xb8] sm:$0xf]
      %v2590 = vld [vmem:[%s3 + $0xbc] sm:$0xf]
      %s2591 = scalar_lea.vmem [#allocation4], 8
      %v2592 = vld [vmem:[%s2591] sm:$0xf]
      %v2593 = vld [vmem:[%s2591 + $0x8] sm:$0xf]
      %v2594 = vld [vmem:[%s2591 + $0x10] sm:$0xf]
      %v2595 = vld [vmem:[%s2591 + $0x18] sm:$0xf]
      %v2596 = vld [vmem:[%s2591 + $0x20] sm:$0xf]
      %v2597 = vld [vmem:[%s2591 + $0x28] sm:$0xf]
      %v2598 = vld [vmem:[%s2591 + $0x30] sm:$0xf]
      %v2599 = vld [vmem:[%s2591 + $0x38] sm:$0xf]
      %v2600 = vld [vmem:[%s2591 + $0x4] sm:$0x1]
      %v2601 = vld [vmem:[%s2591 + $0xc] sm:$0x1]
      %v2602 = vld [vmem:[%s2591 + $0x14] sm:$0x1]
      %v2603 = vld [vmem:[%s2591 + $0x1c] sm:$0x1]
      %v2604 = vld [vmem:[%s2591 + $0x24] sm:$0x1]
      %v2605 = vld [vmem:[%s2591 + $0x2c] sm:$0x1]
      %v2606 = vld [vmem:[%s2591 + $0x34] sm:$0x1]
      %v2607 = vld [vmem:[%s2591 + $0x3c] sm:$0x1]
      %v2608 = vld [vmem:[%s2591] sm:$0xe]
      %v2609 = vld [vmem:[%s2591 + $0x8] sm:$0xe]
      %v2610 = vld [vmem:[%s2591 + $0x10] sm:$0xe]
      %v2611 = vld [vmem:[%s2591 + $0x18] sm:$0xe]
      %v2612 = vld [vmem:[%s2591 + $0x20] sm:$0xe]
      %v2613 = vld [vmem:[%s2591 + $0x28] sm:$0xe]
      %v2614 = vld [vmem:[%s2591 + $0x30] sm:$0xe]
      %v2615 = vld [vmem:[%s2591 + $0x38] sm:$0xe]
      %v2632 = vunpack.c.l.b16 %v2592
      %v2633 = vunpack.c.l.b16 %v2600
      %v2634 = vunpack.c.l.b16 %v2593
      %v2635 = vunpack.c.l.b16 %v2601
      %v2636 = vunpack.c.l.b16 %v2594
      %v2637 = vunpack.c.l.b16 %v2602
      %v2638 = vunpack.c.l.b16 %v2595
      %v2639 = vunpack.c.l.b16 %v2603
      %v2640 = vunpack.c.l.b16 %v2596
      %v2641 = vunpack.c.l.b16 %v2604
      %v2642 = vunpack.c.l.b16 %v2597
      %v2643 = vunpack.c.l.b16 %v2605
      %v2644 = vunpack.c.l.b16 %v2598
      %v2645 = vunpack.c.l.b16 %v2606
      %v2646 = vunpack.c.l.b16 %v2599
      %v2647 = vunpack.c.l.b16 %v2607
      %v2648 = vpack.c.b16 %v2633, %v2632
      %v2649 = vpack.c.b16 %v2635, %v2634
      %v2650 = vpack.c.b16 %v2637, %v2636
      %v2651 = vpack.c.b16 %v2639, %v2638
      %v2652 = vpack.c.b16 %v2641, %v2640
      %v2653 = vpack.c.b16 %v2643, %v2642
      %v2654 = vpack.c.b16 %v2645, %v2644
      %v2655 = vpack.c.b16 %v2647, %v2646
      %v2657 = vshrl.u32 %v2648, 16
      %v2659 = vshll.u32 %v2648, 16
      %v2661 = vrot.slane %v2659, 1
      %v2662 = vor.u32 %v2657, %v2661
      %v2664 = vshrl.u32 %v2649, 16
      %v2666 = vshll.u32 %v2649, 16
      %v2668 = vrot.slane %v2666, 1
      %v2669 = vor.u32 %v2664, %v2668
      %v2671 = vshrl.u32 %v2650, 16
      %v2673 = vshll.u32 %v2650, 16
      %v2675 = vrot.slane %v2673, 1
      %v2676 = vor.u32 %v2671, %v2675
      %v2678 = vshrl.u32 %v2651, 16
      %v2680 = vshll.u32 %v2651, 16
      %v2682 = vrot.slane %v2680, 1
      %v2683 = vor.u32 %v2678, %v2682
      %v2685 = vshrl.u32 %v2652, 16
      %v2687 = vshll.u32 %v2652, 16
      %v2689 = vrot.slane %v2687, 1
      %v2690 = vor.u32 %v2685, %v2689
      %v2692 = vshrl.u32 %v2653, 16
      %v2694 = vshll.u32 %v2653, 16
      %v2696 = vrot.slane %v2694, 1
      %v2697 = vor.u32 %v2692, %v2696
      %v2699 = vshrl.u32 %v2654, 16
      %v2701 = vshll.u32 %v2654, 16
      %v2703 = vrot.slane %v2701, 1
      %v2704 = vor.u32 %v2699, %v2703
      %v2706 = vshrl.u32 %v2655, 16
      %v2708 = vshll.u32 %v2655, 16
      %v2710 = vrot.slane %v2708, 1
      %v2711 = vor.u32 %v2706, %v2710
      %v2720 = vunpack.c.l.b16 %v2608
      %v2721 = vunpack.c.l.b16 %v2609
      %v2722 = vunpack.c.l.b16 %v2610
      %v2723 = vunpack.c.l.b16 %v2611
      %v2724 = vunpack.c.l.b16 %v2612
      %v2725 = vunpack.c.l.b16 %v2613
      %v2726 = vunpack.c.l.b16 %v2614
      %v2727 = vunpack.c.l.b16 %v2615
      %v2728 = vpack.c.b16 %v2633, %v2720
      %v2729 = vpack.c.b16 %v2635, %v2721
      %v2730 = vpack.c.b16 %v2637, %v2722
      %v2731 = vpack.c.b16 %v2639, %v2723
      %v2732 = vpack.c.b16 %v2641, %v2724
      %v2733 = vpack.c.b16 %v2643, %v2725
      %v2734 = vpack.c.b16 %v2645, %v2726
      %v2735 = vpack.c.b16 %v2647, %v2727
      %v2736 = vrot.slane %v2728, 1
      %v2737 = vrot.slane %v2729, 1
      %v2738 = vrot.slane %v2730, 1
      %v2739 = vrot.slane %v2731, 1
      %v2740 = vrot.slane %v2732, 1
      %v2741 = vrot.slane %v2733, 1
      %v2742 = vrot.slane %v2734, 1
      %v2743 = vrot.slane %v2735, 1
      %v2744 = vunpack.c.l.b16 %v2662
      %v2745 = vunpack.c.l.b16 %v2736
      %v2746 = vunpack.c.l.b16 %v2669
      %v2747 = vunpack.c.l.b16 %v2737
      %v2748 = vunpack.c.l.b16 %v2676
      %v2749 = vunpack.c.l.b16 %v2738
      %v2750 = vunpack.c.l.b16 %v2683
      %v2751 = vunpack.c.l.b16 %v2739
      %v2752 = vunpack.c.l.b16 %v2690
      %v2753 = vunpack.c.l.b16 %v2740
      %v2754 = vunpack.c.l.b16 %v2697
      %v2755 = vunpack.c.l.b16 %v2741
      %v2756 = vunpack.c.l.b16 %v2704
      %v2757 = vunpack.c.l.b16 %v2742
      %v2758 = vunpack.c.l.b16 %v2711
      %v2759 = vunpack.c.l.b16 %v2743
      %v2760 = vld [vmem:[%s3 + $0xc0] sm:$0xf]
      %v2761 = vld [vmem:[%s3 + $0xc4] sm:$0xf]
      %v2762 = vld [vmem:[%s3 + $0xc8] sm:$0xf]
      %v2763 = vld [vmem:[%s3 + $0xcc] sm:$0xf]
      %v2764 = vld [vmem:[%s3 + $0xd0] sm:$0xf]
      %v2765 = vld [vmem:[%s3 + $0xd4] sm:$0xf]
      %v2766 = vld [vmem:[%s3 + $0xd8] sm:$0xf]
      %v2767 = vld [vmem:[%s3 + $0xdc] sm:$0xf]
      %v2768 = vld [vmem:[%s3 + $0xe0] sm:$0xf]
      %v2769 = vld [vmem:[%s3 + $0xe4] sm:$0xf]
      %v2770 = vld [vmem:[%s3 + $0xe8] sm:$0xf]
      %v2771 = vld [vmem:[%s3 + $0xec] sm:$0xf]
      %v2772 = vld [vmem:[%s3 + $0xf0] sm:$0xf]
      %v2773 = vld [vmem:[%s3 + $0xf4] sm:$0xf]
      %v2774 = vld [vmem:[%s3 + $0xf8] sm:$0xf]
      %v2775 = vld [vmem:[%s3 + $0xfc] sm:$0xf]
      %v2776 = vld [vmem:[%s3 + $0x100] sm:$0xf]
      %v2777 = vld [vmem:[%s3 + $0x104] sm:$0xf]
      %v2778 = vld [vmem:[%s3 + $0x108] sm:$0xf]
      %v2779 = vld [vmem:[%s3 + $0x10c] sm:$0xf]
      %v2780 = vld [vmem:[%s3 + $0x110] sm:$0xf]
      %v2781 = vld [vmem:[%s3 + $0x114] sm:$0xf]
      %v2782 = vld [vmem:[%s3 + $0x118] sm:$0xf]
      %v2783 = vld [vmem:[%s3 + $0x11c] sm:$0xf]
      %v2784 = vld [vmem:[%s3 + $0x120] sm:$0xf]
      %v2785 = vld [vmem:[%s3 + $0x124] sm:$0xf]
      %v2786 = vld [vmem:[%s3 + $0x128] sm:$0xf]
      %v2787 = vld [vmem:[%s3 + $0x12c] sm:$0xf]
      %v2788 = vld [vmem:[%s3 + $0x130] sm:$0xf]
      %v2789 = vld [vmem:[%s3 + $0x134] sm:$0xf]
      %v2790 = vld [vmem:[%s3 + $0x138] sm:$0xf]
      %v2791 = vld [vmem:[%s3 + $0x13c] sm:$0xf]
      %v2792 = vld [vmem:[%s3 + $0x140] sm:$0xf]
      %v2793 = vld [vmem:[%s3 + $0x144] sm:$0xf]
      %v2794 = vld [vmem:[%s3 + $0x148] sm:$0xf]
      %v2795 = vld [vmem:[%s3 + $0x14c] sm:$0xf]
      %v2796 = vld [vmem:[%s3 + $0x150] sm:$0xf]
      %v2797 = vld [vmem:[%s3 + $0x154] sm:$0xf]
      %v2798 = vld [vmem:[%s3 + $0x158] sm:$0xf]
      %v2799 = vld [vmem:[%s3 + $0x15c] sm:$0xf]
      %v2800 = vld [vmem:[%s3 + $0x160] sm:$0xf]
      %v2801 = vld [vmem:[%s3 + $0x164] sm:$0xf]
      %v2802 = vld [vmem:[%s3 + $0x168] sm:$0xf]
      %v2803 = vld [vmem:[%s3 + $0x16c] sm:$0xf]
      %v2804 = vld [vmem:[%s3 + $0x170] sm:$0xf]
      %v2805 = vld [vmem:[%s3 + $0x174] sm:$0xf]
      %v2806 = vld [vmem:[%s3 + $0x178] sm:$0xf]
      %v2807 = vld [vmem:[%s3 + $0x17c] sm:$0xf]
      %v2808 = vpack.c.b16 %v2634, %v2632
      %v2809 = vpack.c.b16 %v2746, %v2744
      %v2810 = vpack.c.b16 %v2747, %v2745
      %v2811 = vpack.c.b16 %v2638, %v2636
      %v2812 = vpack.c.b16 %v2750, %v2748
      %v2813 = vpack.c.b16 %v2751, %v2749
      %v2814 = vpack.c.b16 %v2642, %v2640
      %v2815 = vpack.c.b16 %v2754, %v2752
      %v2816 = vpack.c.b16 %v2755, %v2753
      %v2817 = vpack.c.b16 %v2646, %v2644
      %v2818 = vpack.c.b16 %v2758, %v2756
      %v2819 = vpack.c.b16 %v2759, %v2757
      %v2880 = vunpack.c.l.b16 %v2760
      %v2881 = vunpack.c.l.b16 %v2761
      %v2882 = vunpack.c.l.b16 %v2762
      %v2883 = vunpack.c.l.b16 %v2763
      %v2884 = vunpack.c.l.b16 %v2764
      %v2885 = vunpack.c.l.b16 %v2765
      %v2886 = vunpack.c.l.b16 %v2766
      %v2887 = vunpack.c.l.b16 %v2767
      %v2888 = vunpack.c.l.b16 %v2768
      %v2889 = vunpack.c.l.b16 %v2769
      %v2890 = vunpack.c.l.b16 %v2770
      %v2891 = vunpack.c.l.b16 %v2771
      %v2892 = vunpack.c.l.b16 %v2772
      %v2893 = vunpack.c.l.b16 %v2773
      %v2894 = vunpack.c.l.b16 %v2774
      %v2895 = vunpack.c.l.b16 %v2775
      %v2896 = vunpack.c.l.b16 %v2776
      %v2897 = vunpack.c.l.b16 %v2777
      %v2898 = vunpack.c.l.b16 %v2778
      %v2899 = vunpack.c.l.b16 %v2779
      %v2900 = vunpack.c.l.b16 %v2780
      %v2901 = vunpack.c.l.b16 %v2781
      %v2902 = vunpack.c.l.b16 %v2782
      %v2903 = vunpack.c.l.b16 %v2783
      %v2904 = vunpack.c.l.b16 %v2784
      %v2905 = vunpack.c.l.b16 %v2785
      %v2906 = vunpack.c.l.b16 %v2786
      %v2907 = vunpack.c.l.b16 %v2787
      %v2908 = vunpack.c.l.b16 %v2788
      %v2909 = vunpack.c.l.b16 %v2789
      %v2910 = vunpack.c.l.b16 %v2790
      %v2911 = vunpack.c.l.b16 %v2791
      %v2912 = vunpack.c.l.b16 %v2792
      %v2913 = vunpack.c.l.b16 %v2793
      %v2914 = vunpack.c.l.b16 %v2794
      %v2915 = vunpack.c.l.b16 %v2795
      %v2916 = vunpack.c.l.b16 %v2796
      %v2917 = vunpack.c.l.b16 %v2797
      %v2918 = vunpack.c.l.b16 %v2798
      %v2919 = vunpack.c.l.b16 %v2799
      %v2920 = vunpack.c.l.b16 %v2800
      %v2921 = vunpack.c.l.b16 %v2801
      %v2922 = vunpack.c.l.b16 %v2802
      %v2923 = vunpack.c.l.b16 %v2803
      %v2924 = vunpack.c.l.b16 %v2804
      %v2925 = vunpack.c.l.b16 %v2805
      %v2926 = vunpack.c.l.b16 %v2806
      %v2927 = vunpack.c.l.b16 %v2807
      %v2928 = vpack.c.b16 %v2881, %v2880
      %v2929 = vpack.c.b16 %v2883, %v2882
      %v2930 = vpack.c.b16 %v2885, %v2884
      %v2931 = vpack.c.b16 %v2887, %v2886
      %v2932 = vpack.c.b16 %v2889, %v2888
      %v2933 = vpack.c.b16 %v2891, %v2890
      %v2934 = vpack.c.b16 %v2893, %v2892
      %v2935 = vpack.c.b16 %v2895, %v2894
      %v2936 = vpack.c.b16 %v2897, %v2896
      %v2937 = vpack.c.b16 %v2899, %v2898
      %v2938 = vpack.c.b16 %v2901, %v2900
      %v2939 = vpack.c.b16 %v2903, %v2902
      %v2940 = vpack.c.b16 %v2905, %v2904
      %v2941 = vpack.c.b16 %v2907, %v2906
      %v2942 = vpack.c.b16 %v2909, %v2908
      %v2943 = vpack.c.b16 %v2911, %v2910
      %v2944 = vpack.c.b16 %v2913, %v2912
      %v2945 = vpack.c.b16 %v2915, %v2914
      %v2946 = vpack.c.b16 %v2917, %v2916
      %v2947 = vpack.c.b16 %v2919, %v2918
      %v2948 = vpack.c.b16 %v2921, %v2920
      %v2949 = vpack.c.b16 %v2923, %v2922
      %v2950 = vpack.c.b16 %v2925, %v2924
      %v2951 = vpack.c.b16 %v2927, %v2926
      %2976 = vmatprep.subr.bf16.mxu0 0
      %2977 = vmatpush1.bf16.msra.mxu0 %v2928
      %2978 = vmatprep.subr.bf16.mxu0 0
      %2979 = vmatpush1.bf16.msra.mxu0 %v2929
      %2980 = vmatprep.subr.bf16.mxu0 0
      %2981 = vmatpush1.bf16.msra.mxu0 %v2930
      %2982 = vmatprep.subr.bf16.mxu0 0
      %2983 = vmatpush1.bf16.msra.mxu0 %v2931
      %2984 = vmatprep.subr.bf16.mxu0 0
      %2985 = vmatpush1.bf16.msra.mxu0 %v2932
      %2986 = vmatprep.subr.bf16.mxu0 0
      %2987 = vmatpush1.bf16.msra.mxu0 %v2933
      %2988 = vmatprep.subr.bf16.mxu0 0
      %2989 = vmatpush1.bf16.msra.mxu0 %v2934
      %2990 = vmatprep.subr.bf16.mxu0 0
      %2991 = vmatpush1.bf16.msra.mxu0 %v2935
      %2992 = vmatprep.subr.bf16.mxu0 0
      %2993 = vmatpush1.bf16.msra.mxu0 %v2936
      %2994 = vmatprep.subr.bf16.mxu0 0
      %2995 = vmatpush1.bf16.msra.mxu0 %v2937
      %2996 = vmatprep.subr.bf16.mxu0 0
      %2997 = vmatpush1.bf16.msra.mxu0 %v2938
      %2998 = vmatprep.subr.bf16.mxu0 0
      %2999 = vmatpush1.bf16.msra.mxu0 %v2939
      %3000 = vmatprep.subr.bf16.mxu0 0
      %3001 = vmatpush1.bf16.msra.mxu0 %v2940
      %3002 = vmatprep.subr.bf16.mxu0 0
      %3003 = vmatpush1.bf16.msra.mxu0 %v2941
      %3004 = vmatprep.subr.bf16.mxu0 0
      %3005 = vmatpush1.bf16.msra.mxu0 %v2942
      %3006 = vmatprep.subr.bf16.mxu0 0
      %3007 = vmatpush1.bf16.msra.mxu0 %v2943
      %3008 = vmatprep.mubr.bf16.mxu0 %v2809
      %3009 = vmatmul.mubr.bf16.gmra.mrb[0].mxu0 %v2808
      %v3010 = vpop.f32.mrb[0].mxu0
      %v3011 = vadd.f32 0.0, %v3010
      %v3012 = vpop.f32.mrb[0].mxu0
      %v3013 = vpop.f32.mrb[0].mxu0
      %v3014 = vadd.f32 0.0, %v3013
      %v3015 = vpop.f32.mrb[0].mxu0
      %3016 = vmatprep.mubr.bf16.mxu0 %v2812
      %3017 = vmatmul.mubr.bf16.gmra.mrb[0].mxu0 %v2811
      %v3018 = vpop.f32.mrb[0].mxu0
      %v3019 = vadd.f32 0.0, %v3018
      %v3020 = vpop.f32.mrb[0].mxu0
      %v3021 = vpop.f32.mrb[0].mxu0
      %v3022 = vadd.f32 0.0, %v3021
      %v3023 = vpop.f32.mrb[0].mxu0
      %3024 = vmatprep.mubr.bf16.mxu0 %v2815
      %3025 = vmatmul.mubr.bf16.gmra.mrb[0].mxu0 %v2814
      %v3026 = vpop.f32.mrb[0].mxu0
      %v3027 = vadd.f32 0.0, %v3026
      %v3028 = vpop.f32.mrb[0].mxu0
      %v3029 = vpop.f32.mrb[0].mxu0
      %v3030 = vadd.f32 0.0, %v3029
      %v3031 = vpop.f32.mrb[0].mxu0
      %3032 = vmatprep.mubr.bf16.mxu0 %v2818
      %3033 = vmatmul.mubr.bf16.gmra.mrb[0].mxu0 %v2817
      %v3034 = vpop.f32.mrb[0].mxu0
      %v3035 = vadd.f32 0.0, %v3034
      %v3036 = vpop.f32.mrb[0].mxu0
      %v3037 = vpop.f32.mrb[0].mxu0
      %v3038 = vadd.f32 0.0, %v3037
      %v3039 = vpop.f32.mrb[0].mxu0
      %3040 = vdwg.mxu0
      %3041 = vmatprep.subr.bf16.mxu0 0
      %3042 = vmatpush1.bf16.msra.mxu0 %v2944
      %3043 = vmatprep.subr.bf16.mxu0 0
      %3044 = vmatpush1.bf16.msra.mxu0 %v2945
      %3045 = vmatprep.subr.bf16.mxu0 0
      %3046 = vmatpush1.bf16.msra.mxu0 %v2946
      %3047 = vmatprep.subr.bf16.mxu0 0
      %3048 = vmatpush1.bf16.msra.mxu0 %v2947
      %3049 = vmatprep.subr.bf16.mxu0 0
      %3050 = vmatpush1.bf16.msra.mxu0 %v2948
      %3051 = vmatprep.subr.bf16.mxu0 0
      %3052 = vmatpush1.bf16.msra.mxu0 %v2949
      %3053 = vmatprep.subr.bf16.mxu0 0
      %3054 = vmatpush1.bf16.msra.mxu0 %v2950
      %3055 = vmatprep.subr.bf16.mxu0 0
      %3056 = vmatpush1.bf16.msra.mxu0 %v2951
      %3057 = vmatprep.subr.bf16.mxu0 0
      %3058 = vmatpush1.bf16.msra.mxu0 0
      %3059 = vmatprep.subr.bf16.mxu0 0
      %3060 = vmatpush1.bf16.msra.mxu0 0
      %3061 = vmatprep.subr.bf16.mxu0 0
      %3062 = vmatpush1.bf16.msra.mxu0 0
      %3063 = vmatprep.subr.bf16.mxu0 0
      %3064 = vmatpush1.bf16.msra.mxu0 0
      %3065 = vmatprep.subr.bf16.mxu0 0
      %3066 = vmatpush1.bf16.msra.mxu0 0
      %3067 = vmatprep.subr.bf16.mxu0 0
      %3068 = vmatpush1.bf16.msra.mxu0 0
      %3069 = vmatprep.subr.bf16.mxu0 0
      %3070 = vmatpush1.bf16.msra.mxu0 0
      %3071 = vmatprep.subr.bf16.mxu0 0
      %3072 = vmatpush1.bf16.msra.mxu0 0
      %3073 = vmatprep.mubr.bf16.mxu0 0
      %3074 = vmatmul.mubr.bf16.gmra.mrb[0].mxu0 %v2810
      %v3075 = vpop.f32.mrb[0].mxu0
      %v3076 = vadd.f32 %v3011, %v3075
      %v3077 = vpop.f32.mrb[0].mxu0
      %v3078 = vpop.f32.mrb[0].mxu0
      %v3079 = vadd.f32 %v3014, %v3078
      %v3080 = vpop.f32.mrb[0].mxu0
      %3081 = vmatprep.mubr.bf16.mxu0 0
      %3082 = vmatmul.mubr.bf16.gmra.mrb[0].mxu0 %v2813
      %v3083 = vpop.f32.mrb[0].mxu0
      %v3084 = vadd.f32 %v3019, %v3083
      %v3085 = vpop.f32.mrb[0].mxu0
      %v3086 = vpop.f32.mrb[0].mxu0
      %v3087 = vadd.f32 %v3022, %v3086
      %v3088 = vpop.f32.mrb[0].mxu0
      %3089 = vmatprep.mubr.bf16.mxu0 0
      %3090 = vmatmul.mubr.bf16.gmra.mrb[0].mxu0 %v2816
      %v3091 = vpop.f32.mrb[0].mxu0
      %v3092 = vadd.f32 %v3027, %v3091
      %v3093 = vpop.f32.mrb[0].mxu0
      %v3094 = vpop.f32.mrb[0].mxu0
      %v3095 = vadd.f32 %v3030, %v3094
      %v3096 = vpop.f32.mrb[0].mxu0
      %3097 = vmatprep.mubr.bf16.mxu0 0
      %3098 = vmatmul.mubr.bf16.gmra.mrb[0].mxu0 %v2819
      %v3099 = vpop.f32.mrb[0].mxu0
      %v3100 = vadd.f32 %v3035, %v3099
      %v3101 = vpop.f32.mrb[0].mxu0
      %v3102 = vpop.f32.mrb[0].mxu0
      %v3103 = vadd.f32 %v3038, %v3102
      %v3104 = vpop.f32.mrb[0].mxu0
      %3105 = vdwg.mxu0
      %v3106 = vpack.c.b16 %v2417, %v2415
      %v3107 = vpack.c.b16 %v2529, %v2527
      %v3108 = vpack.c.b16 %v2530, %v2528
      %v3109 = vpack.c.b16 %v2421, %v2419
      %v3110 = vpack.c.b16 %v2533, %v2531
      %v3111 = vpack.c.b16 %v2534, %v2532
      %v3112 = vpack.c.b16 %v2425, %v2423
      %v3113 = vpack.c.b16 %v2537, %v2535
      %v3114 = vpack.c.b16 %v2538, %v2536
      %v3115 = vpack.c.b16 %v2429, %v2427
      %v3116 = vpack.c.b16 %v2541, %v2539
      %v3117 = vpack.c.b16 %v2542, %v2540
      %v3178 = vunpack.c.l.b16 %v2543
      %v3179 = vunpack.c.l.b16 %v2544
      %v3180 = vunpack.c.l.b16 %v2545
      %v3181 = vunpack.c.l.b16 %v2546
      %v3182 = vunpack.c.l.b16 %v2547
      %v3183 = vunpack.c.l.b16 %v2548
      %v3184 = vunpack.c.l.b16 %v2549
      %v3185 = vunpack.c.l.b16 %v2550
      %v3186 = vunpack.c.l.b16 %v2551
      %v3187 = vunpack.c.l.b16 %v2552
      %v3188 = vunpack.c.l.b16 %v2553
      %v3189 = vunpack.c.l.b16 %v2554
      %v3190 = vunpack.c.l.b16 %v2555
      %v3191 = vunpack.c.l.b16 %v2556
      %v3192 = vunpack.c.l.b16 %v2557
      %v3193 = vunpack.c.l.b16 %v2558
      %v3194 = vunpack.c.l.b16 %v2559
      %v3195 = vunpack.c.l.b16 %v2560
      %v3196 = vunpack.c.l.b16 %v2561
      %v3197 = vunpack.c.l.b16 %v2562
      %v3198 = vunpack.c.l.b16 %v2563
      %v3199 = vunpack.c.l.b16 %v2564
      %v3200 = vunpack.c.l.b16 %v2565
      %v3201 = vunpack.c.l.b16 %v2566
      %v3202 = vunpack.c.l.b16 %v2567
      %v3203 = vunpack.c.l.b16 %v2568
      %v3204 = vunpack.c.l.b16 %v2569
      %v3205 = vunpack.c.l.b16 %v2570
      %v3206 = vunpack.c.l.b16 %v2571
      %v3207 = vunpack.c.l.b16 %v2572
      %v3208 = vunpack.c.l.b16 %v2573
      %v3209 = vunpack.c.l.b16 %v2574
      %v3210 = vunpack.c.l.b16 %v2575
      %v3211 = vunpack.c.l.b16 %v2576
      %v3212 = vunpack.c.l.b16 %v2577
      %v3213 = vunpack.c.l.b16 %v2578
      %v3214 = vunpack.c.l.b16 %v2579
      %v3215 = vunpack.c.l.b16 %v2580
      %v3216 = vunpack.c.l.b16 %v2581
      %v3217 = vunpack.c.l.b16 %v2582
      %v3218 = vunpack.c.l.b16 %v2583
      %v3219 = vunpack.c.l.b16 %v2584
      %v3220 = vunpack.c.l.b16 %v2585
      %v3221 = vunpack.c.l.b16 %v2586
      %v3222 = vunpack.c.l.b16 %v2587
      %v3223 = vunpack.c.l.b16 %v2588
      %v3224 = vunpack.c.l.b16 %v2589
      %v3225 = vunpack.c.l.b16 %v2590
      %v3226 = vpack.c.b16 %v3179, %v3178
      %v3227 = vpack.c.b16 %v3181, %v3180
      %v3228 = vpack.c.b16 %v3183, %v3182
      %v3229 = vpack.c.b16 %v3185, %v3184
      %v3230 = vpack.c.b16 %v3187, %v3186
      %v3231 = vpack.c.b16 %v3189, %v3188
      %v3232 = vpack.c.b16 %v3191, %v3190
      %v3233 = vpack.c.b16 %v3193, %v3192
      %v3234 = vpack.c.b16 %v3195, %v3194
      %v3235 = vpack.c.b16 %v3197, %v3196
      %v3236 = vpack.c.b16 %v3199, %v3198
      %v3237 = vpack.c.b16 %v3201, %v3200
      %v3238 = vpack.c.b16 %v3203, %v3202
      %v3239 = vpack.c.b16 %v3205, %v3204
      %v3240 = vpack.c.b16 %v3207, %v3206
      %v3241 = vpack.c.b16 %v3209, %v3208
      %v3242 = vpack.c.b16 %v3211, %v3210
      %v3243 = vpack.c.b16 %v3213, %v3212
      %v3244 = vpack.c.b16 %v3215, %v3214
      %v3245 = vpack.c.b16 %v3217, %v3216
      %v3246 = vpack.c.b16 %v3219, %v3218
      %v3247 = vpack.c.b16 %v3221, %v3220
      %v3248 = vpack.c.b16 %v3223, %v3222
      %v3249 = vpack.c.b16 %v3225, %v3224
      %3274 = vmatprep.subr.bf16.mxu0 0
      %3275 = vmatpush1.bf16.msra.mxu0 %v3226
      %3276 = vmatprep.subr.bf16.mxu0 0
      %3277 = vmatpush1.bf16.msra.mxu0 %v3227
      %3278 = vmatprep.subr.bf16.mxu0 0
      %3279 = vmatpush1.bf16.msra.mxu0 %v3228
      %3280 = vmatprep.subr.bf16.mxu0 0
      %3281 = vmatpush1.bf16.msra.mxu0 %v3229
      %3282 = vmatprep.subr.bf16.mxu0 0
      %3283 = vmatpush1.bf16.msra.mxu0 %v3230
      %3284 = vmatprep.subr.bf16.mxu0 0
      %3285 = vmatpush1.bf16.msra.mxu0 %v3231
      %3286 = vmatprep.subr.bf16.mxu0 0
      %3287 = vmatpush1.bf16.msra.mxu0 %v3232
      %3288 = vmatprep.subr.bf16.mxu0 0
      %3289 = vmatpush1.bf16.msra.mxu0 %v3233
      %3290 = vmatprep.subr.bf16.mxu0 0
      %3291 = vmatpush1.bf16.msra.mxu0 %v3234
      %3292 = vmatprep.subr.bf16.mxu0 0
      %3293 = vmatpush1.bf16.msra.mxu0 %v3235
      %3294 = vmatprep.subr.bf16.mxu0 0
      %3295 = vmatpush1.bf16.msra.mxu0 %v3236
      %3296 = vmatprep.subr.bf16.mxu0 0
      %3297 = vmatpush1.bf16.msra.mxu0 %v3237
      %3298 = vmatprep.subr.bf16.mxu0 0
      %3299 = vmatpush1.bf16.msra.mxu0 %v3238
      %3300 = vmatprep.subr.bf16.mxu0 0
      %3301 = vmatpush1.bf16.msra.mxu0 %v3239
      %3302 = vmatprep.subr.bf16.mxu0 0
      %3303 = vmatpush1.bf16.msra.mxu0 %v3240
      %3304 = vmatprep.subr.bf16.mxu0 0
      %3305 = vmatpush1.bf16.msra.mxu0 %v3241
      %3306 = vmatprep.mubr.bf16.mxu0 %v3107
      %3307 = vmatmul.mubr.bf16.gmra.mrb[0].mxu0 %v3106
      %v3308 = vpop.f32.mrb[0].mxu0
      %v3309 = vadd.f32 %v3076, %v3308
      %v3310 = vpop.f32.mrb[0].mxu0
      %v3311 = vpop.f32.mrb[0].mxu0
      %v3312 = vadd.f32 %v3079, %v3311
      %v3313 = vpop.f32.mrb[0].mxu0
      %3314 = vmatprep.mubr.bf16.mxu0 %v3110
      %3315 = vmatmul.mubr.bf16.gmra.mrb[0].mxu0 %v3109
      %v3316 = vpop.f32.mrb[0].mxu0
      %v3317 = vadd.f32 %v3084, %v3316
      %v3318 = vpop.f32.mrb[0].mxu0
      %v3319 = vpop.f32.mrb[0].mxu0
      %v3320 = vadd.f32 %v3087, %v3319
      %v3321 = vpop.f32.mrb[0].mxu0
      %3322 = vmatprep.mubr.bf16.mxu0 %v3113
      %3323 = vmatmul.mubr.bf16.gmra.mrb[0].mxu0 %v3112
      %v3324 = vpop.f32.mrb[0].mxu0
      %v3325 = vadd.f32 %v3092, %v3324
      %v3326 = vpop.f32.mrb[0].mxu0
      %v3327 = vpop.f32.mrb[0].mxu0
      %v3328 = vadd.f32 %v3095, %v3327
      %v3329 = vpop.f32.mrb[0].mxu0
      %3330 = vmatprep.mubr.bf16.mxu0 %v3116
      %3331 = vmatmul.mubr.bf16.gmra.mrb[0].mxu0 %v3115
      %v3332 = vpop.f32.mrb[0].mxu0
      %v3333 = vadd.f32 %v3100, %v3332
      %v3334 = vpop.f32.mrb[0].mxu0
      %v3335 = vpop.f32.mrb[0].mxu0
      %v3336 = vadd.f32 %v3103, %v3335
      %v3337 = vpop.f32.mrb[0].mxu0
      %3338 = vdwg.mxu0
      %3339 = vmatprep.subr.bf16.mxu0 0
      %3340 = vmatpush1.bf16.msra.mxu0 %v3242
      %3341 = vmatprep.subr.bf16.mxu0 0
      %3342 = vmatpush1.bf16.msra.mxu0 %v3243
      %3343 = vmatprep.subr.bf16.mxu0 0
      %3344 = vmatpush1.bf16.msra.mxu0 %v3244
      %3345 = vmatprep.subr.bf16.mxu0 0
      %3346 = vmatpush1.bf16.msra.mxu0 %v3245
      %3347 = vmatprep.subr.bf16.mxu0 0
      %3348 = vmatpush1.bf16.msra.mxu0 %v3246
      %3349 = vmatprep.subr.bf16.mxu0 0
      %3350 = vmatpush1.bf16.msra.mxu0 %v3247
      %3351 = vmatprep.subr.bf16.mxu0 0
      %3352 = vmatpush1.bf16.msra.mxu0 %v3248
      %3353 = vmatprep.subr.bf16.mxu0 0
      %3354 = vmatpush1.bf16.msra.mxu0 %v3249
      %3355 = vmatprep.subr.bf16.mxu0 0
      %3356 = vmatpush1.bf16.msra.mxu0 0
      %3357 = vmatprep.subr.bf16.mxu0 0
      %3358 = vmatpush1.bf16.msra.mxu0 0
      %3359 = vmatprep.subr.bf16.mxu0 0
      %3360 = vmatpush1.bf16.msra.mxu0 0
      %3361 = vmatprep.subr.bf16.mxu0 0
      %3362 = vmatpush1.bf16.msra.mxu0 0
      %3363 = vmatprep.subr.bf16.mxu0 0
      %3364 = vmatpush1.bf16.msra.mxu0 0
      %3365 = vmatprep.subr.bf16.mxu0 0
      %3366 = vmatpush1.bf16.msra.mxu0 0
      %3367 = vmatprep.subr.bf16.mxu0 0
      %3368 = vmatpush1.bf16.msra.mxu0 0
      %3369 = vmatprep.subr.bf16.mxu0 0
      %3370 = vmatpush1.bf16.msra.mxu0 0
      %3371 = vmatprep.mubr.bf16.mxu0 0
      %3372 = vmatmul.mubr.bf16.gmra.mrb[0].mxu0 %v3108
      %v3373 = vpop.f32.mrb[0].mxu0
      %v3374 = vadd.f32 %v3309, %v3373
      %v3375 = vpop.f32.mrb[0].mxu0
      %v3376 = vpop.f32.mrb[0].mxu0
      %v3377 = vadd.f32 %v3312, %v3376
      %v3378 = vpop.f32.mrb[0].mxu0
      %3379 = vmatprep.mubr.bf16.mxu0 0
      %3380 = vmatmul.mubr.bf16.gmra.mrb[0].mxu0 %v3111
      %v3381 = vpop.f32.mrb[0].mxu0
      %v3382 = vadd.f32 %v3317, %v3381
      %v3383 = vpop.f32.mrb[0].mxu0
      %v3384 = vpop.f32.mrb[0].mxu0
      %v3385 = vadd.f32 %v3320, %v3384
      %v3386 = vpop.f32.mrb[0].mxu0
      %3387 = vmatprep.mubr.bf16.mxu0 0
      %3388 = vmatmul.mubr.bf16.gmra.mrb[0].mxu0 %v3114
      %v3389 = vpop.f32.mrb[0].mxu0
      %v3390 = vadd.f32 %v3325, %v3389
      %v3391 = vpop.f32.mrb[0].mxu0
      %v3392 = vpop.f32.mrb[0].mxu0
      %v3393 = vadd.f32 %v3328, %v3392
      %v3394 = vpop.f32.mrb[0].mxu0
      %3395 = vmatprep.mubr.bf16.mxu0 0
      %3396 = vmatmul.mubr.bf16.gmra.mrb[0].mxu0 %v3117
      %v3397 = vpop.f32.mrb[0].mxu0
      %v3398 = vadd.f32 %v3333, %v3397
      %v3399 = vpop.f32.mrb[0].mxu0
      %v3400 = vpop.f32.mrb[0].mxu0
      %v3401 = vadd.f32 %v3336, %v3400
      %v3402 = vpop.f32.mrb[0].mxu0
      %3403 = vdwg.mxu0
      %s3404 = scalar_lea.vmem [#allocation4], 16
      %v3405 = vld [vmem:[%s3404] sm:$0xf]
      %v3406 = vld [vmem:[%s3404 + $0x8] sm:$0xf]
      %v3407 = vld [vmem:[%s3404 + $0x10] sm:$0xf]
      %v3408 = vld [vmem:[%s3404 + $0x18] sm:$0xf]
      %v3409 = vld [vmem:[%s3404 + $0x20] sm:$0xf]
      %v3410 = vld [vmem:[%s3404 + $0x28] sm:$0xf]
      %v3411 = vld [vmem:[%s3404 + $0x30] sm:$0xf]
      %v3412 = vld [vmem:[%s3404 + $0x38] sm:$0xf]
      %v3413 = vld [vmem:[%s3404 + $0x4] sm:$0x1]
      %v3414 = vld [vmem:[%s3404 + $0xc] sm:$0x1]
      %v3415 = vld [vmem:[%s3404 + $0x14] sm:$0x1]
      %v3416 = vld [vmem:[%s3404 + $0x1c] sm:$0x1]
      %v3417 = vld [vmem:[%s3404 + $0x24] sm:$0x1]
      %v3418 = vld [vmem:[%s3404 + $0x2c] sm:$0x1]
      %v3419 = vld [vmem:[%s3404 + $0x34] sm:$0x1]
      %v3420 = vld [vmem:[%s3404 + $0x3c] sm:$0x1]
      %v3421 = vld [vmem:[%s3404] sm:$0xe]
      %v3422 = vld [vmem:[%s3404 + $0x8] sm:$0xe]
      %v3423 = vld [vmem:[%s3404 + $0x10] sm:$0xe]
      %v3424 = vld [vmem:[%s3404 + $0x18] sm:$0xe]
      %v3425 = vld [vmem:[%s3404 + $0x20] sm:$0xe]
      %v3426 = vld [vmem:[%s3404 + $0x28] sm:$0xe]
      %v3427 = vld [vmem:[%s3404 + $0x30] sm:$0xe]
      %v3428 = vld [vmem:[%s3404 + $0x38] sm:$0xe]
      %v3445 = vunpack.c.l.b16 %v3405
      %v3446 = vunpack.c.l.b16 %v3413
      %v3447 = vunpack.c.l.b16 %v3406
      %v3448 = vunpack.c.l.b16 %v3414
      %v3449 = vunpack.c.l.b16 %v3407
      %v3450 = vunpack.c.l.b16 %v3415
      %v3451 = vunpack.c.l.b16 %v3408
      %v3452 = vunpack.c.l.b16 %v3416
      %v3453 = vunpack.c.l.b16 %v3409
      %v3454 = vunpack.c.l.b16 %v3417
      %v3455 = vunpack.c.l.b16 %v3410
      %v3456 = vunpack.c.l.b16 %v3418
      %v3457 = vunpack.c.l.b16 %v3411
      %v3458 = vunpack.c.l.b16 %v3419
      %v3459 = vunpack.c.l.b16 %v3412
      %v3460 = vunpack.c.l.b16 %v3420
      %v3461 = vpack.c.b16 %v3446, %v3445
      %v3462 = vpack.c.b16 %v3448, %v3447
      %v3463 = vpack.c.b16 %v3450, %v3449
      %v3464 = vpack.c.b16 %v3452, %v3451
      %v3465 = vpack.c.b16 %v3454, %v3453
      %v3466 = vpack.c.b16 %v3456, %v3455
      %v3467 = vpack.c.b16 %v3458, %v3457
      %v3468 = vpack.c.b16 %v3460, %v3459
      %v3470 = vshrl.u32 %v3461, 16
      %v3472 = vshll.u32 %v3461, 16
      %v3474 = vrot.slane %v3472, 1
      %v3475 = vor.u32 %v3470, %v3474
      %v3477 = vshrl.u32 %v3462, 16
      %v3479 = vshll.u32 %v3462, 16
      %v3481 = vrot.slane %v3479, 1
      %v3482 = vor.u32 %v3477, %v3481
      %v3484 = vshrl.u32 %v3463, 16
      %v3486 = vshll.u32 %v3463, 16
      %v3488 = vrot.slane %v3486, 1
      %v3489 = vor.u32 %v3484, %v3488
      %v3491 = vshrl.u32 %v3464, 16
      %v3493 = vshll.u32 %v3464, 16
      %v3495 = vrot.slane %v3493, 1
      %v3496 = vor.u32 %v3491, %v3495
      %v3498 = vshrl.u32 %v3465, 16
      %v3500 = vshll.u32 %v3465, 16
      %v3502 = vrot.slane %v3500, 1
      %v3503 = vor.u32 %v3498, %v3502
      %v3505 = vshrl.u32 %v3466, 16
      %v3507 = vshll.u32 %v3466, 16
      %v3509 = vrot.slane %v3507, 1
      %v3510 = vor.u32 %v3505, %v3509
      %v3512 = vshrl.u32 %v3467, 16
      %v3514 = vshll.u32 %v3467, 16
      %v3516 = vrot.slane %v3514, 1
      %v3517 = vor.u32 %v3512, %v3516
      %v3519 = vshrl.u32 %v3468, 16
      %v3521 = vshll.u32 %v3468, 16
      %v3523 = vrot.slane %v3521, 1
      %v3524 = vor.u32 %v3519, %v3523
      %v3533 = vunpack.c.l.b16 %v3421
      %v3534 = vunpack.c.l.b16 %v3422
      %v3535 = vunpack.c.l.b16 %v3423
      %v3536 = vunpack.c.l.b16 %v3424
      %v3537 = vunpack.c.l.b16 %v3425
      %v3538 = vunpack.c.l.b16 %v3426
      %v3539 = vunpack.c.l.b16 %v3427
      %v3540 = vunpack.c.l.b16 %v3428
      %v3541 = vpack.c.b16 %v3446, %v3533
      %v3542 = vpack.c.b16 %v3448, %v3534
      %v3543 = vpack.c.b16 %v3450, %v3535
      %v3544 = vpack.c.b16 %v3452, %v3536
      %v3545 = vpack.c.b16 %v3454, %v3537
      %v3546 = vpack.c.b16 %v3456, %v3538
      %v3547 = vpack.c.b16 %v3458, %v3539
      %v3548 = vpack.c.b16 %v3460, %v3540
      %v3549 = vrot.slane %v3541, 1
      %v3550 = vrot.slane %v3542, 1
      %v3551 = vrot.slane %v3543, 1
      %v3552 = vrot.slane %v3544, 1
      %v3553 = vrot.slane %v3545, 1
      %v3554 = vrot.slane %v3546, 1
      %v3555 = vrot.slane %v3547, 1
      %v3556 = vrot.slane %v3548, 1
      %v3557 = vunpack.c.l.b16 %v3475
      %v3558 = vunpack.c.l.b16 %v3549
      %v3559 = vunpack.c.l.b16 %v3482
      %v3560 = vunpack.c.l.b16 %v3550
      %v3561 = vunpack.c.l.b16 %v3489
      %v3562 = vunpack.c.l.b16 %v3551
      %v3563 = vunpack.c.l.b16 %v3496
      %v3564 = vunpack.c.l.b16 %v3552
      %v3565 = vunpack.c.l.b16 %v3503
      %v3566 = vunpack.c.l.b16 %v3553
      %v3567 = vunpack.c.l.b16 %v3510
      %v3568 = vunpack.c.l.b16 %v3554
      %v3569 = vunpack.c.l.b16 %v3517
      %v3570 = vunpack.c.l.b16 %v3555
      %v3571 = vunpack.c.l.b16 %v3524
      %v3572 = vunpack.c.l.b16 %v3556
      %v3573 = vld [vmem:[%s3 + $0x180] sm:$0xf]
      %v3574 = vld [vmem:[%s3 + $0x184] sm:$0xf]
      %v3575 = vld [vmem:[%s3 + $0x188] sm:$0xf]
      %v3576 = vld [vmem:[%s3 + $0x18c] sm:$0xf]
      %v3577 = vld [vmem:[%s3 + $0x190] sm:$0xf]
      %v3578 = vld [vmem:[%s3 + $0x194] sm:$0xf]
      %v3579 = vld [vmem:[%s3 + $0x198] sm:$0xf]
      %v3580 = vld [vmem:[%s3 + $0x19c] sm:$0xf]
      %v3581 = vld [vmem:[%s3 + $0x1a0] sm:$0xf]
      %v3582 = vld [vmem:[%s3 + $0x1a4] sm:$0xf]
      %v3583 = vld [vmem:[%s3 + $0x1a8] sm:$0xf]
      %v3584 = vld [vmem:[%s3 + $0x1ac] sm:$0xf]
      %v3585 = vld [vmem:[%s3 + $0x1b0] sm:$0xf]
      %v3586 = vld [vmem:[%s3 + $0x1b4] sm:$0xf]
      %v3587 = vld [vmem:[%s3 + $0x1b8] sm:$0xf]
      %v3588 = vld [vmem:[%s3 + $0x1bc] sm:$0xf]
      %v3589 = vld [vmem:[%s3 + $0x1c0] sm:$0xf]
      %v3590 = vld [vmem:[%s3 + $0x1c4] sm:$0xf]
      %v3591 = vld [vmem:[%s3 + $0x1c8] sm:$0xf]
      %v3592 = vld [vmem:[%s3 + $0x1cc] sm:$0xf]
      %v3593 = vld [vmem:[%s3 + $0x1d0] sm:$0xf]
      %v3594 = vld [vmem:[%s3 + $0x1d4] sm:$0xf]
      %v3595 = vld [vmem:[%s3 + $0x1d8] sm:$0xf]
      %v3596 = vld [vmem:[%s3 + $0x1dc] sm:$0xf]
      %v3597 = vld [vmem:[%s3 + $0x1e0] sm:$0xf]
      %v3598 = vld [vmem:[%s3 + $0x1e4] sm:$0xf]
      %v3599 = vld [vmem:[%s3 + $0x1e8] sm:$0xf]
      %v3600 = vld [vmem:[%s3 + $0x1ec] sm:$0xf]
      %v3601 = vld [vmem:[%s3 + $0x1f0] sm:$0xf]
      %v3602 = vld [vmem:[%s3 + $0x1f4] sm:$0xf]
      %v3603 = vld [vmem:[%s3 + $0x1f8] sm:$0xf]
      %v3604 = vld [vmem:[%s3 + $0x1fc] sm:$0xf]
      %v3605 = vld [vmem:[%s3 + $0x200] sm:$0xf]
      %v3606 = vld [vmem:[%s3 + $0x204] sm:$0xf]
      %v3607 = vld [vmem:[%s3 + $0x208] sm:$0xf]
      %v3608 = vld [vmem:[%s3 + $0x20c] sm:$0xf]
      %v3609 = vld [vmem:[%s3 + $0x210] sm:$0xf]
      %v3610 = vld [vmem:[%s3 + $0x214] sm:$0xf]
      %v3611 = vld [vmem:[%s3 + $0x218] sm:$0xf]
      %v3612 = vld [vmem:[%s3 + $0x21c] sm:$0xf]
      %v3613 = vld [vmem:[%s3 + $0x220] sm:$0xf]
      %v3614 = vld [vmem:[%s3 + $0x224] sm:$0xf]
      %v3615 = vld [vmem:[%s3 + $0x228] sm:$0xf]
      %v3616 = vld [vmem:[%s3 + $0x22c] sm:$0xf]
      %v3617 = vld [vmem:[%s3 + $0x230] sm:$0xf]
      %v3618 = vld [vmem:[%s3 + $0x234] sm:$0xf]
      %v3619 = vld [vmem:[%s3 + $0x238] sm:$0xf]
      %v3620 = vld [vmem:[%s3 + $0x23c] sm:$0xf]
      %v3621 = vpack.c.b16 %v3447, %v3445
      %v3622 = vpack.c.b16 %v3559, %v3557
      %v3623 = vpack.c.b16 %v3560, %v3558
      %v3624 = vpack.c.b16 %v3451, %v3449
      %v3625 = vpack.c.b16 %v3563, %v3561
      %v3626 = vpack.c.b16 %v3564, %v3562
      %v3627 = vpack.c.b16 %v3455, %v3453
      %v3628 = vpack.c.b16 %v3567, %v3565
      %v3629 = vpack.c.b16 %v3568, %v3566
      %v3630 = vpack.c.b16 %v3459, %v3457
      %v3631 = vpack.c.b16 %v3571, %v3569
      %v3632 = vpack.c.b16 %v3572, %v3570
      %v3693 = vunpack.c.l.b16 %v3573
      %v3694 = vunpack.c.l.b16 %v3574
      %v3695 = vunpack.c.l.b16 %v3575
      %v3696 = vunpack.c.l.b16 %v3576
      %v3697 = vunpack.c.l.b16 %v3577
      %v3698 = vunpack.c.l.b16 %v3578
      %v3699 = vunpack.c.l.b16 %v3579
      %v3700 = vunpack.c.l.b16 %v3580
      %v3701 = vunpack.c.l.b16 %v3581
      %v3702 = vunpack.c.l.b16 %v3582
      %v3703 = vunpack.c.l.b16 %v3583
      %v3704 = vunpack.c.l.b16 %v3584
      %v3705 = vunpack.c.l.b16 %v3585
      %v3706 = vunpack.c.l.b16 %v3586
      %v3707 = vunpack.c.l.b16 %v3587
      %v3708 = vunpack.c.l.b16 %v3588
      %v3709 = vunpack.c.l.b16 %v3589
      %v3710 = vunpack.c.l.b16 %v3590
      %v3711 = vunpack.c.l.b16 %v3591
      %v3712 = vunpack.c.l.b16 %v3592
      %v3713 = vunpack.c.l.b16 %v3593
      %v3714 = vunpack.c.l.b16 %v3594
      %v3715 = vunpack.c.l.b16 %v3595
      %v3716 = vunpack.c.l.b16 %v3596
      %v3717 = vunpack.c.l.b16 %v3597
      %v3718 = vunpack.c.l.b16 %v3598
      %v3719 = vunpack.c.l.b16 %v3599
      %v3720 = vunpack.c.l.b16 %v3600
      %v3721 = vunpack.c.l.b16 %v3601
      %v3722 = vunpack.c.l.b16 %v3602
      %v3723 = vunpack.c.l.b16 %v3603
      %v3724 = vunpack.c.l.b16 %v3604
      %v3725 = vunpack.c.l.b16 %v3605
      %v3726 = vunpack.c.l.b16 %v3606
      %v3727 = vunpack.c.l.b16 %v3607
      %v3728 = vunpack.c.l.b16 %v3608
      %v3729 = vunpack.c.l.b16 %v3609
      %v3730 = vunpack.c.l.b16 %v3610
      %v3731 = vunpack.c.l.b16 %v3611
      %v3732 = vunpack.c.l.b16 %v3612
      %v3733 = vunpack.c.l.b16 %v3613
      %v3734 = vunpack.c.l.b16 %v3614
      %v3735 = vunpack.c.l.b16 %v3615
      %v3736 = vunpack.c.l.b16 %v3616
      %v3737 = vunpack.c.l.b16 %v3617
      %v3738 = vunpack.c.l.b16 %v3618
      %v3739 = vunpack.c.l.b16 %v3619
      %v3740 = vunpack.c.l.b16 %v3620
      %v3741 = vpack.c.b16 %v3694, %v3693
      %v3742 = vpack.c.b16 %v3696, %v3695
      %v3743 = vpack.c.b16 %v3698, %v3697
      %v3744 = vpack.c.b16 %v3700, %v3699
      %v3745 = vpack.c.b16 %v3702, %v3701
      %v3746 = vpack.c.b16 %v3704, %v3703
      %v3747 = vpack.c.b16 %v3706, %v3705
      %v3748 = vpack.c.b16 %v3708, %v3707
      %v3749 = vpack.c.b16 %v3710, %v3709
      %v3750 = vpack.c.b16 %v3712, %v3711
      %v3751 = vpack.c.b16 %v3714, %v3713
      %v3752 = vpack.c.b16 %v3716, %v3715
      %v3753 = vpack.c.b16 %v3718, %v3717
      %v3754 = vpack.c.b16 %v3720, %v3719
      %v3755 = vpack.c.b16 %v3722, %v3721
      %v3756 = vpack.c.b16 %v3724, %v3723
      %v3757 = vpack.c.b16 %v3726, %v3725
      %v3758 = vpack.c.b16 %v3728, %v3727
      %v3759 = vpack.c.b16 %v3730, %v3729
      %v3760 = vpack.c.b16 %v3732, %v3731
      %v3761 = vpack.c.b16 %v3734, %v3733
      %v3762 = vpack.c.b16 %v3736, %v3735
      %v3763 = vpack.c.b16 %v3738, %v3737
      %v3764 = vpack.c.b16 %v3740, %v3739
      %3789 = vmatprep.subr.bf16.mxu0 0
      %3790 = vmatpush1.bf16.msra.mxu0 %v3741
      %3791 = vmatprep.subr.bf16.mxu0 0
      %3792 = vmatpush1.bf16.msra.mxu0 %v3742
      %3793 = vmatprep.subr.bf16.mxu0 0
      %3794 = vmatpush1.bf16.msra.mxu0 %v3743
      %3795 = vmatprep.subr.bf16.mxu0 0
      %3796 = vmatpush1.bf16.msra.mxu0 %v3744
      %3797 = vmatprep.subr.bf16.mxu0 0
      %3798 = vmatpush1.bf16.msra.mxu0 %v3745
      %3799 = vmatprep.subr.bf16.mxu0 0
      %3800 = vmatpush1.bf16.msra.mxu0 %v3746
      %3801 = vmatprep.subr.bf16.mxu0 0
      %3802 = vmatpush1.bf16.msra.mxu0 %v3747
      %3803 = vmatprep.subr.bf16.mxu0 0
      %3804 = vmatpush1.bf16.msra.mxu0 %v3748
      %3805 = vmatprep.subr.bf16.mxu0 0
      %3806 = vmatpush1.bf16.msra.mxu0 %v3749
      %3807 = vmatprep.subr.bf16.mxu0 0
      %3808 = vmatpush1.bf16.msra.mxu0 %v3750
      %3809 = vmatprep.subr.bf16.mxu0 0
      %3810 = vmatpush1.bf16.msra.mxu0 %v3751
      %3811 = vmatprep.subr.bf16.mxu0 0
      %3812 = vmatpush1.bf16.msra.mxu0 %v3752
      %3813 = vmatprep.subr.bf16.mxu0 0
      %3814 = vmatpush1.bf16.msra.mxu0 %v3753
      %3815 = vmatprep.subr.bf16.mxu0 0
      %3816 = vmatpush1.bf16.msra.mxu0 %v3754
      %3817 = vmatprep.subr.bf16.mxu0 0
      %3818 = vmatpush1.bf16.msra.mxu0 %v3755
      %3819 = vmatprep.subr.bf16.mxu0 0
      %3820 = vmatpush1.bf16.msra.mxu0 %v3756
      %3821 = vmatprep.mubr.bf16.mxu0 %v3622
      %3822 = vmatmul.mubr.bf16.gmra.mrb[0].mxu0 %v3621
      %v3823 = vpop.f32.mrb[0].mxu0
      %v3824 = vadd.f32 0.0, %v3823
      %v3825 = vpop.f32.mrb[0].mxu0
      %v3826 = vpop.f32.mrb[0].mxu0
      %v3827 = vadd.f32 0.0, %v3826
      %v3828 = vpop.f32.mrb[0].mxu0
      %3829 = vmatprep.mubr.bf16.mxu0 %v3625
      %3830 = vmatmul.mubr.bf16.gmra.mrb[0].mxu0 %v3624
      %v3831 = vpop.f32.mrb[0].mxu0
      %v3832 = vadd.f32 0.0, %v3831
      %v3833 = vpop.f32.mrb[0].mxu0
      %v3834 = vpop.f32.mrb[0].mxu0
      %v3835 = vadd.f32 0.0, %v3834
      %v3836 = vpop.f32.mrb[0].mxu0
      %3837 = vmatprep.mubr.bf16.mxu0 %v3628
      %3838 = vmatmul.mubr.bf16.gmra.mrb[0].mxu0 %v3627
      %v3839 = vpop.f32.mrb[0].mxu0
      %v3840 = vadd.f32 0.0, %v3839
      %v3841 = vpop.f32.mrb[0].mxu0
      %v3842 = vpop.f32.mrb[0].mxu0
      %v3843 = vadd.f32 0.0, %v3842
      %v3844 = vpop.f32.mrb[0].mxu0
      %3845 = vmatprep.mubr.bf16.mxu0 %v3631
      %3846 = vmatmul.mubr.bf16.gmra.mrb[0].mxu0 %v3630
      %v3847 = vpop.f32.mrb[0].mxu0
      %v3848 = vadd.f32 0.0, %v3847
      %v3849 = vpop.f32.mrb[0].mxu0
      %v3850 = vpop.f32.mrb[0].mxu0
      %v3851 = vadd.f32 0.0, %v3850
      %v3852 = vpop.f32.mrb[0].mxu0
      %3853 = vdwg.mxu0
      %3854 = vmatprep.subr.bf16.mxu0 0
      %3855 = vmatpush1.bf16.msra.mxu0 %v3757
      %3856 = vmatprep.subr.bf16.mxu0 0
      %3857 = vmatpush1.bf16.msra.mxu0 %v3758
      %3858 = vmatprep.subr.bf16.mxu0 0
      %3859 = vmatpush1.bf16.msra.mxu0 %v3759
      %3860 = vmatprep.subr.bf16.mxu0 0
      %3861 = vmatpush1.bf16.msra.mxu0 %v3760
      %3862 = vmatprep.subr.bf16.mxu0 0
      %3863 = vmatpush1.bf16.msra.mxu0 %v3761
      %3864 = vmatprep.subr.bf16.mxu0 0
      %3865 = vmatpush1.bf16.msra.mxu0 %v3762
      %3866 = vmatprep.subr.bf16.mxu0 0
      %3867 = vmatpush1.bf16.msra.mxu0 %v3763
      %3868 = vmatprep.subr.bf16.mxu0 0
      %3869 = vmatpush1.bf16.msra.mxu0 %v3764
      %3870 = vmatprep.subr.bf16.mxu0 0
      %3871 = vmatpush1.bf16.msra.mxu0 0
      %3872 = vmatprep.subr.bf16.mxu0 0
      %3873 = vmatpush1.bf16.msra.mxu0 0
      %3874 = vmatprep.subr.bf16.mxu0 0
      %3875 = vmatpush1.bf16.msra.mxu0 0
      %3876 = vmatprep.subr.bf16.mxu0 0
      %3877 = vmatpush1.bf16.msra.mxu0 0
      %3878 = vmatprep.subr.bf16.mxu0 0
      %3879 = vmatpush1.bf16.msra.mxu0 0
      %3880 = vmatprep.subr.bf16.mxu0 0
      %3881 = vmatpush1.bf16.msra.mxu0 0
      %3882 = vmatprep.subr.bf16.mxu0 0
      %3883 = vmatpush1.bf16.msra.mxu0 0
      %3884 = vmatprep.subr.bf16.mxu0 0
      %3885 = vmatpush1.bf16.msra.mxu0 0
      %3886 = vmatprep.mubr.bf16.mxu0 0
      %3887 = vmatmul.mubr.bf16.gmra.mrb[0].mxu0 %v3623
      %v3888 = vpop.f32.mrb[0].mxu0
      %v3889 = vadd.f32 %v3824, %v3888
      %v3890 = vpop.f32.mrb[0].mxu0
      %v3891 = vpop.f32.mrb[0].mxu0
      %v3892 = vadd.f32 %v3827, %v3891
      %v3893 = vpop.f32.mrb[0].mxu0
      %3894 = vmatprep.mubr.bf16.mxu0 0
      %3895 = vmatmul.mubr.bf16.gmra.mrb[0].mxu0 %v3626
      %v3896 = vpop.f32.mrb[0].mxu0
      %v3897 = vadd.f32 %v3832, %v3896
      %v3898 = vpop.f32.mrb[0].mxu0
      %v3899 = vpop.f32.mrb[0].mxu0
      %v3900 = vadd.f32 %v3835, %v3899
      %v3901 = vpop.f32.mrb[0].mxu0
      %3902 = vmatprep.mubr.bf16.mxu0 0
      %3903 = vmatmul.mubr.bf16.gmra.mrb[0].mxu0 %v3629
      %v3904 = vpop.f32.mrb[0].mxu0
      %v3905 = vadd.f32 %v3840, %v3904
      %v3906 = vpop.f32.mrb[0].mxu0
      %v3907 = vpop.f32.mrb[0].mxu0
      %v3908 = vadd.f32 %v3843, %v3907
      %v3909 = vpop.f32.mrb[0].mxu0
      %3910 = vmatprep.mubr.bf16.mxu0 0
      %3911 = vmatmul.mubr.bf16.gmra.mrb[0].mxu0 %v3632
      %v3912 = vpop.f32.mrb[0].mxu0
      %v3913 = vadd.f32 %v3848, %v3912
      %v3914 = vpop.f32.mrb[0].mxu0
      %v3915 = vpop.f32.mrb[0].mxu0
      %v3916 = vadd.f32 %v3851, %v3915
      %v3917 = vpop.f32.mrb[0].mxu0
      %3918 = vdwg.mxu0
      %v3919 = vadd.f32 %v3374, %v3889
      %v3920 = vadd.f32 %v3377, %v3892
      %v3921 = vadd.f32 %v3382, %v3897
      %v3922 = vadd.f32 %v3385, %v3900
      %v3923 = vadd.f32 %v3390, %v3905
      %v3924 = vadd.f32 %v3393, %v3908
      %v3925 = vadd.f32 %v3398, %v3913
      %v3926 = vadd.f32 %v3401, %v3916
      %v3927 = vld [vmem:[%s4] sm:$0x1]
      %v3929 = vlaneseq
      %v3930 = vshrl.u32 %v3929, 7
      %v3931 = vsub.s32 0, %v3930
      %v3932 = vrot.slane %v3927, %v3931
      %v3934 = vadd.f32 %v3919, %v3932
      %v3935 = vadd.f32 %v3920, %v3932
      %v3936 = vadd.f32 %v3921, %v3932
      %v3937 = vadd.f32 %v3922, %v3932
      %v3938 = vadd.f32 %v3923, %v3932
      %v3939 = vadd.f32 %v3924, %v3932
      %v3940 = vadd.f32 %v3925, %v3932
      %v3941 = vadd.f32 %v3926, %v3932
      %v3942 = vmax.f32 %v3934, 0.0
      %v3943 = vmax.f32 %v3935, 0.0
      %v3944 = vmax.f32 %v3936, 0.0
      %v3945 = vmax.f32 %v3937, 0.0
      %v3946 = vmax.f32 %v3938, 0.0
      %v3947 = vmax.f32 %v3939, 0.0
      %v3948 = vmax.f32 %v3940, 0.0
      %v3949 = vmax.f32 %v3941, 0.0
      %v3950 = vpack.c.bf16 %v3942, %v3942
      %v3951 = vpack.c.bf16 %v3943, %v3943
      %v3952 = vpack.c.bf16 %v3944, %v3944
      %v3953 = vpack.c.bf16 %v3945, %v3945
      %v3954 = vpack.c.bf16 %v3946, %v3946
      %v3955 = vpack.c.bf16 %v3947, %v3947
      %v3956 = vpack.c.bf16 %v3948, %v3948
      %v3957 = vpack.c.bf16 %v3949, %v3949
      %3958 = vst [vmem:[%s200] sm:$0xf] %v3950
      %3959 = vst [vmem:[%s200 + $0x4] sm:$0xf] %v3951
      %3960 = vst [vmem:[%s200 + $0x8] sm:$0xf] %v3952
      %3961 = vst [vmem:[%s200 + $0xc] sm:$0xf] %v3953
      %3962 = vst [vmem:[%s200 + $0x10] sm:$0xf] %v3954
      %3963 = vst [vmem:[%s200 + $0x14] sm:$0xf] %v3955
      %3964 = vst [vmem:[%s200 + $0x18] sm:$0xf] %v3956
      %3965 = vst [vmem:[%s200 + $0x1c] sm:$0xf] %v3957
      %s3966 = smul.u32 8, %s21
      %p3967 = scmp.lt.s32.totalorder %s20, 1
      %s3968 = scalar_select %p3967, %s20, 1
      %p3969 = scmp.lt.s32.totalorder %s3966, 7
      %s3970 = scalar_select %p3969, %s3966, 7
      %s3971 = smul.addr %s3968, 8
      %s3972 = sadd.s32 %s3970, %s3971
      %s3973 = smul.addr %s3972, 4
      %s3974 = scalar_lea.vmem %s5, %s3973
      // Predicated region
      $region76: #{down_forward.1} parent=35 // pred_check
        %p3975 = pneg %p132
      $region77: #{down_forward.1} parent=35 // pred_check_branch
        %3977 = sbr.rel (%p3975) target = $region79
      $region78: #{down_forward.1} parent=35 // pred_region
        %s3978 = smul.u32 8, %s21
      $region79: #{down_forward.1} parent=35 // pred_fallthru
        _
    $region36: #{down_forward.1} parent=5 // pred_fallthru
      _
    %p3979 = scmp.le.s32.totalorder 2, %s11
    // Predicated region
    $region80: #{down_forward.1} parent=5 // pred_check
      %p3980 = pneg %p3979
    $region81: #{down_forward.1} parent=5 // pred_check_branch
      %3982 = sbr.rel (%p3980) target = $region83
    $region82: #{down_forward.1} parent=5 // pred_region
      %s3983 = ssub.s32 %s11, 2
      // Predicated region
      $region84: #{down_forward.1} parent=82 // pred_check
        %p3984 = pneg %p138
      $region85: #{down_forward.1} parent=82 // pred_check_branch
        %3986 = sbr.rel (%p3984) target = $region87
      $region86: #{down_forward.1} parent=82 // pred_region
        %s3987 = smul.u32 8, %s23
        %p3988 = scmp.lt.s32.totalorder %s22, 1
        %s3989 = scalar_select %p3988, %s22, 1
        %p3990 = scmp.lt.s32.totalorder %s3987, 7
        %s3991 = scalar_select %p3990, %s3987, 7
        %s3992 = smul.addr %s3989, 8
        %s3993 = sadd.s32 %s3991, %s3992
        %s3994 = smul.addr %s3993, 4
        %s3995 = scalar_lea.vmem %s5, %s3994
      $region87: #{down_forward.1} parent=82 // pred_fallthru
        _
    $region83: #{down_forward.1} parent=5 // pred_fallthru
      _
  $region6: #{down_forward.1} parent=0 // loop_footer
    %s15 = sadd.s32 1, %s11
  $region7: #{down_forward.1} parent=0 // loop_footer_branch
    %10 = sbr.rel target = $region3
  $region8: #{down_forward.1} parent=0 // loop_exit
    _

</llo_original>
